<compile_context>
chip_gen: v5e
topology: v5e:2x2
jax: 0.10.0
libtpu: 0.0.40
codegen_flags: <defaults>
</compile_context>

<pallas_src>
import functools

import jax
import jax.numpy as jnp
from jax import lax
from jax.experimental import pallas as pl
from jax.experimental.pallas import tpu as pltpu

_EPS = 1e-5  # nn.BatchNorm2d default eps


def _round_up(x, m):
    return (x + m - 1) // m * m


# ------------------------------ Pallas kernel ------------------------------ #

def _basic_block_kernel(x_ref, w1_ref, w2_ref, b_ref, out_ref, xpad_ref,
                        *, h, w, c):
    """Fused BasicBlock (stride=1, identity shortcut, inference BN).

    x_ref   : (H*W, C)  bf16   flat NHWC pixels of one image
    w*_ref  : (9, C, C) bf16   per-tap conv weights (BN scale folded),
                               tap k = 3*ky + kx, ky/kx in {0,1,2}
    b_ref   : (2, C)    f32    folded BN biases (conv1, conv2)
    out_ref : (H*W, C)  f32
    xpad_ref: (pad_top + H*W + W + 1, C) bf16 scratch: zero-padded flat slab,
              reused for the intermediate activation (never hits HBM).
    """
    hw = h * w
    pad_top = _round_up(w + 1, 16)   # aligned start for the big interior copies
    pad_bot = w + 1

    # ---- in-kernel zero padding (no wrapper jnp.pad, no jnp.concatenate) ----
    xpad_ref[0:pad_top, :] = jnp.zeros((pad_top, c), jnp.bfloat16)
    xpad_ref[pad_top + hw:pad_top + hw + pad_bot, :] = jnp.zeros(
        (pad_bot, c), jnp.bfloat16)
    xpad_ref[pad_top:pad_top + hw, :] = x_ref[...]

    # ---- x-boundary masks: kx=0 tap must not wrap at w==0, kx=2 at w==W-1 ----
    col = lax.broadcasted_iota(jnp.int32, (hw, 1), 0) % w
    m_left = (col != 0).astype(jnp.float32)
    m_right = (col != w - 1).astype(jnp.float32)

    def conv3x3(w_ref):
        """3x3 / stride-1 conv as 9 dense (C,C) GEMM taps on row-shifted views."""
        acc_dx = []
        for kx in range(3):                       # input x offset = kx - 1
            acc = jnp.zeros((hw, c), jnp.float32)
            for ky in range(3):                   # input y offset = ky - 1
                start = pad_top + (ky - 1) * w + (kx - 1)     # static slice
                lhs = xpad_ref[start:start + hw, :]           # plain VMEM load
                acc = acc + jnp.dot(lhs, w_ref[3 * ky + kx],
                                    preferred_element_type=jnp.float32)
            acc_dx.append(acc)
        # zero the wrapped contributions at the left / right image borders
        return m_left * acc_dx[0] + acc_dx[1] + m_right * acc_dx[2]

    # out = relu(bn1(conv1(x)))          (BN scale folded into w1, bias b[0])
    o1 = jnp.maximum(conv3x3(w1_ref) + b_ref[0:1, :], 0.0)

    # Reuse the padded scratch for the intermediate (borders already zero).
    xpad_ref[pad_top:pad_top + hw, :] = o1.astype(jnp.bfloat16)

    # out = relu(bn2(conv2(out)) + x)    (identity shortcut, stride = 1)
    o2 = conv3x3(w2_ref) + b_ref[1:2, :] + x_ref[...].astype(jnp.float32)
    out_ref[...] = jnp.maximum(o2, 0.0)


# ------------------------------ wrapper helpers ----------------------------- #

def _fold_bn(gamma, beta, mean, var):
    """Inference-mode BatchNorm -> per-channel (scale, bias)."""
    scale = gamma / jnp.sqrt(var + _EPS)
    return scale, beta - mean * scale


def _tap_weights(w_pt, scale):
    """(O, I, 3, 3) torch conv weight -> (9, I, O) dense per-tap GEMM weights
    with the per-output-channel BN scale folded in (bf16)."""
    taps = jnp.transpose(w_pt, (2, 3, 1, 0)) * scale[None, None, None, :]
    return taps.reshape(9, w_pt.shape[1], w_pt.shape[0]).astype(jnp.bfloat16)


# ----------------------------- BasicBlock forward --------------------------- #

@jax.jit
def basic_block_forward(x_nchw, params):
    """ResNet BasicBlock forward, stride=1 (identity shortcut), inference BN."""
    # TODO(synk): stride != 1 downsample shortcut (1x1 conv + BN) not implemented.
    # TODO(synk): BatchNorm uses running statistics (eval semantics); training-mode
    #             batch statistics are not computed.
    (w1_pt, g1, be1, m1, v1, w2_pt, g2, be2, m2, v2) = params
    n, cin, h, w = x_nchw.shape
    cout = w1_pt.shape[0]
    assert cin == cout, "identity shortcut requires in_planes == planes"
    c = cin
    hw = h * w

    s1, b1 = _fold_bn(g1, be1, m1, v1)
    s2, b2 = _fold_bn(g2, be2, m2, v2)
    w1_t = _tap_weights(w1_pt, s1)                     # (9, C, C) bf16
    w2_t = _tap_weights(w2_pt, s2)                     # (9, C, C) bf16
    bias = jnp.stack([b1, b2]).astype(jnp.float32)     # (2, C)   f32

    # NCHW -> flat NHWC pixels (N, H*W, C), bf16.  (In a full network the
    # activations would stay in this layout between blocks.)
    x_flat = (jnp.transpose(x_nchw, (0, 2, 3, 1))
              .reshape(n, hw, c).astype(jnp.bfloat16))

    pad_top = _round_up(w + 1, 16)
    scratch_rows = pad_top + hw + w + 1

    kernel = functools.partial(_basic_block_kernel, h=h, w=w, c=c)
    out = pl.pallas_call(
        kernel,
        out_shape=jax.ShapeDtypeStruct((n, hw, c), jnp.float32),
        grid=(n,),
        in_specs=[
            pl.BlockSpec((None, hw, c), lambda i: (i, 0, 0)),   # one image
            pl.BlockSpec((9, c, c), lambda i: (0, 0, 0)),       # conv1 taps
            pl.BlockSpec((9, c, c), lambda i: (0, 0, 0)),       # conv2 taps
            pl.BlockSpec((2, c), lambda i: (0, 0)),             # folded biases
        ],
        out_specs=pl.BlockSpec((None, hw, c), lambda i: (i, 0, 0)),
        scratch_shapes=[pltpu.VMEM((scratch_rows, c), jnp.bfloat16)],
        compiler_params=pltpu.CompilerParams(
            dimension_semantics=("parallel",),
            vmem_limit_bytes=32 * 1024 * 1024),
    )(x_flat, w1_t, w2_t, bias)

    return jnp.transpose(out.reshape(n, h, w, c), (0, 3, 1, 2))   # back to NCHW


# ------------------------------ plain-JAX reference ------------------------- #

def _reference(x, params):
    (w1, g1, be1, m1, v1, w2, g2, be2, m2, v2) = params
    dn = ("NCHW", "OIHW", "NCHW")

    def bn(y, g, b, m, v):
        shp = (1, -1, 1, 1)
        return ((y - m.reshape(shp)) / jnp.sqrt(v.reshape(shp) + _EPS)
                * g.reshape(shp) + b.reshape(shp))

    o = lax.conv_general_dilated(x, w1, (1, 1), ((1, 1), (1, 1)), dimension_numbers=dn)
    o = jnp.maximum(bn(o, g1, be1, m1, v1), 0.0)
    o = lax.conv_general_dilated(o, w2, (1, 1), ((1, 1), (1, 1)), dimension_numbers=dn)
    o = bn(o, g2, be2, m2, v2) + x
    return jnp.maximum(o, 0.0)


# ------------------------------------ main ---------------------------------- #

if __name__ == "__main__":
    key = jax.random.PRNGKey(0)
    kx, kw1, kw2 = jax.random.split(key, 3)

    N, C, H, W = 2, 4, 16, 16          # batch=2, in_planes=planes=4, spatial=16
    planes = C

    x = jax.random.normal(kx, (N, C, H, W), jnp.float32)

    # deterministic parameters (shapes from BasicBlock.__init__, stride=1)
    w1 = 0.2 * jax.random.normal(kw1, (planes, C, 3, 3), jnp.float32)       # conv1.weight
    w2 = 0.2 * jax.random.normal(kw2, (planes, planes, 3, 3), jnp.float32)  # conv2.weight
    ar = jnp.arange(planes, dtype=jnp.float32)
    g1, be1 = 1.0 + 0.05 * ar, 0.02 * ar        # bn1 gamma / beta
    m1, v1 = 0.01 * ar, 1.0 + 0.10 * ar         # bn1 running mean / var
    g2, be2 = 1.0 - 0.03 * ar, -0.01 * ar       # bn2 gamma / beta
    m2, v2 = -0.02 * ar, 1.0 + 0.05 * ar        # bn2 running mean / var
    params = (w1, g1, be1, m1, v1, w2, g2, be2, m2, v2)

    out = jax.block_until_ready(basic_block_forward(x, params))
    ref = jax.block_until_ready(_reference(x, params))

    assert out.shape == (N, planes, H, W), out.shape
    err = float(jnp.max(jnp.abs(out - ref)))
    rel = float(jnp.linalg.norm(out - ref) / jnp.linalg.norm(ref))
    # bf16 operands (f32 accumulation / epilogue) -> bf16-level tolerance vs f32 ref
    assert err < 1e-1 and rel < 3e-2, f"max abs err {err}, rel l2 err {rel}"
    print("KERNEL_OK")
</pallas_src>

<mosaic_0001>
module attributes {stable_mosaic.version = 11 : i64} {
  func.func @_basic_block_kernel(%arg0: i32, %arg1: memref<1x256x4xbf16, #tpu.memory_space<vmem>>, %arg2: memref<9x4x4xbf16, #tpu.memory_space<vmem>>, %arg3: memref<9x4x4xbf16, #tpu.memory_space<vmem>>, %arg4: memref<2x4xf32, #tpu.memory_space<vmem>>, %arg5: memref<1x256x4xf32, #tpu.memory_space<vmem>>, %arg6: memref<305x4xbf16, #tpu.memory_space<vmem>>) attributes {dimension_semantics = [#tpu.dimension_semantics<parallel>], iteration_bounds = array<i64: 2>, scalar_prefetch = 0 : i64, scratch_operands = 1 : i64, tpu.core_type = #tpu.core_type<tc>, window_params = [{transform_indices = @transform_0, window_bounds = array<i64: 1, 256, 4>}, {pipeline_mode = #tpu.pipeline_mode<synchronous>, transform_indices = @transform_1, window_bounds = array<i64: 9, 4, 4>}, {pipeline_mode = #tpu.pipeline_mode<synchronous>, transform_indices = @transform_2, window_bounds = array<i64: 9, 4, 4>}, {pipeline_mode = #tpu.pipeline_mode<synchronous>, transform_indices = @transform_3, window_bounds = array<i64: 2, 4>}, {transform_indices = @transform_4, window_bounds = array<i64: 1, 256, 4>}]} {
    %cst = arith.constant 0.000000e+00 : bf16
    %0 = vector.broadcast %cst : bf16 to vector<32x4xbf16>
    %c0 = arith.constant 0 : index
    %c0_0 = arith.constant 0 : index
    %1 = vector.load %arg6[%c0, %c0_0] : memref<305x4xbf16, #tpu.memory_space<vmem>>, vector<32x4xbf16>
    tpu.vector_store %arg6[%c0, %c0_0], %0 {strides = array<i32>} : memref<305x4xbf16, #tpu.memory_space<vmem>>, vector<32x4xbf16>,
    %cst_1 = arith.constant 0.000000e+00 : bf16
    %2 = vector.broadcast %cst_1 : bf16 to vector<17x4xbf16>
    %c288 = arith.constant 288 : index
    %c0_2 = arith.constant 0 : index
    %3 = vector.load %arg6[%c288, %c0_2] : memref<305x4xbf16, #tpu.memory_space<vmem>>, vector<17x4xbf16>
    tpu.vector_store %arg6[%c288, %c0_2], %2 {strides = array<i32>} : memref<305x4xbf16, #tpu.memory_space<vmem>>, vector<17x4xbf16>,
    %c0_3 = arith.constant 0 : index
    %c0_4 = arith.constant 0 : index
    %c0_5 = arith.constant 0 : index
    %4 = vector.load %arg1[%c0_3, %c0_4, %c0_5] : memref<1x256x4xbf16, #tpu.memory_space<vmem>>, vector<1x256x4xbf16>
    %5 = vector.shape_cast %4 : vector<1x256x4xbf16> to vector<256x4xbf16>
    %c32 = arith.constant 32 : index
    %c0_6 = arith.constant 0 : index
    %6 = vector.load %arg6[%c32, %c0_6] : memref<305x4xbf16, #tpu.memory_space<vmem>>, vector<256x4xbf16>
    tpu.vector_store %arg6[%c32, %c0_6], %5 {strides = array<i32>} : memref<305x4xbf16, #tpu.memory_space<vmem>>, vector<256x4xbf16>,
    %7 = tpu.iota {dimensions = array<i32: 0>} : vector<256x1xi32>
    %c16_i32 = arith.constant 16 : i32
    %c0_i32 = arith.constant 0 : i32
    %8 = arith.cmpi eq, %c16_i32, %c0_i32 : i32
    %c1_i32 = arith.constant 1 : i32
    %9 = arith.select %8, %c1_i32, %c16_i32 : i32
    %10 = vector.broadcast %9 : i32 to vector<256x1xi32>
    %11 = arith.remsi %7, %10 : vector<256x1xi32>
    %c0_i32_7 = arith.constant 0 : i32
    %12 = vector.broadcast %c0_i32_7 : i32 to vector<256x1xi32>
    %13 = arith.cmpi ne, %11, %12 : vector<256x1xi32>
    %c0_i32_8 = arith.constant 0 : i32
    %14 = vector.broadcast %c0_i32_8 : i32 to vector<256x1xi32>
    %15 = arith.cmpi slt, %11, %14 : vector<256x1xi32>
    %c0_i32_9 = arith.constant 0 : i32
    %16 = arith.cmpi slt, %9, %c0_i32_9 : i32
    %17 = vector.broadcast %16 : i1 to vector<256x1xi1>
    %18 = vector.broadcast %17 : vector<256x1xi1> to vector<256x1xi1>
    %19 = arith.xori %15, %18 : vector<256x1xi1>
    %20 = arith.andi %19, %13 : vector<256x1xi1>
    %21 = vector.broadcast %9 : i32 to vector<256x1xi32>
    %22 = arith.addi %11, %21 : vector<256x1xi32>
    %23 = arith.select %20, %22, %11 : vector<256x1xi1>, vector<256x1xi32>
    %c0_i32_10 = arith.constant 0 : i32
    %24 = vector.broadcast %c0_i32_10 : i32 to vector<256x1xi32>
    %25 = arith.cmpi ne, %23, %24 : vector<256x1xi32>
    %26 = arith.extui %25 : vector<256x1xi1> to vector<256x1xi32>
    %27 = arith.sitofp %26 : vector<256x1xi32> to vector<256x1xf32>
    %c15_i32 = arith.constant 15 : i32
    %28 = vector.broadcast %c15_i32 : i32 to vector<256x1xi32>
    %29 = arith.cmpi ne, %23, %28 : vector<256x1xi32>
    %30 = arith.extui %29 : vector<256x1xi1> to vector<256x1xi32>
    %31 = arith.sitofp %30 : vector<256x1xi32> to vector<256x1xf32>
    %cst_11 = arith.constant 0.000000e+00 : f32
    %32 = vector.broadcast %cst_11 : f32 to vector<256x4xf32>
    %c15 = arith.constant 15 : index
    %c0_12 = arith.constant 0 : index
    %33 = vector.load %arg6[%c15, %c0_12] : memref<305x4xbf16, #tpu.memory_space<vmem>>, vector<256x4xbf16>
    %c0_13 = arith.constant 0 : index
    %c0_14 = arith.constant 0 : index
    %c0_15 = arith.constant 0 : index
    %34 = vector.load %arg2[%c0_13, %c0_14, %c0_15] : memref<9x4x4xbf16, #tpu.memory_space<vmem>>, vector<1x4x4xbf16>
    %35 = vector.shape_cast %34 : vector<1x4x4xbf16> to vector<4x4xbf16>
    %cst_16 = arith.constant dense<0.000000e+00> : vector<256x4xf32>
    %36 = tpu.matmul %33, %35, %cst_16 {dimension_numbers = #tpu.dot_dimension_numbers<[1], [0], [0], [1], [0, 0, 1, 1], [], []>} : vector<256x4xbf16>, vector<4x4xbf16>, vector<256x4xf32> -> vector<256x4xf32>
    %37 = arith.addf %32, %36 : vector<256x4xf32>
    %c31 = arith.constant 31 : index
    %c0_17 = arith.constant 0 : index
    %38 = vector.load %arg6[%c31, %c0_17] : memref<305x4xbf16, #tpu.memory_space<vmem>>, vector<256x4xbf16>
    %c3 = arith.constant 3 : index
    %c0_18 = arith.constant 0 : index
    %c0_19 = arith.constant 0 : index
    %39 = vector.load %arg2[%c3, %c0_18, %c0_19] : memref<9x4x4xbf16, #tpu.memory_space<vmem>>, vector<1x4x4xbf16>
    %40 = vector.shape_cast %39 : vector<1x4x4xbf16> to vector<4x4xbf16>
    %cst_20 = arith.constant dense<0.000000e+00> : vector<256x4xf32>
    %41 = tpu.matmul %38, %40, %cst_20 {dimension_numbers = #tpu.dot_dimension_numbers<[1], [0], [0], [1], [0, 0, 1, 1], [], []>} : vector<256x4xbf16>, vector<4x4xbf16>, vector<256x4xf32> -> vector<256x4xf32>
    %42 = arith.addf %37, %41 : vector<256x4xf32>
    %c47 = arith.constant 47 : index
    %c0_21 = arith.constant 0 : index
    %43 = vector.load %arg6[%c47, %c0_21] : memref<305x4xbf16, #tpu.memory_space<vmem>>, vector<256x4xbf16>
    %c6 = arith.constant 6 : index
    %c0_22 = arith.constant 0 : index
    %c0_23 = arith.constant 0 : index
    %44 = vector.load %arg2[%c6, %c0_22, %c0_23] : memref<9x4x4xbf16, #tpu.memory_space<vmem>>, vector<1x4x4xbf16>
    %45 = vector.shape_cast %44 : vector<1x4x4xbf16> to vector<4x4xbf16>
    %cst_24 = arith.constant dense<0.000000e+00> : vector<256x4xf32>
    %46 = tpu.matmul %43, %45, %cst_24 {dimension_numbers = #tpu.dot_dimension_numbers<[1], [0], [0], [1], [0, 0, 1, 1], [], []>} : vector<256x4xbf16>, vector<4x4xbf16>, vector<256x4xf32> -> vector<256x4xf32>
    %47 = arith.addf %42, %46 : vector<256x4xf32>
    %cst_25 = arith.constant 0.000000e+00 : f32
    %48 = vector.broadcast %cst_25 : f32 to vector<256x4xf32>
    %c16 = arith.constant 16 : index
    %c0_26 = arith.constant 0 : index
    %49 = vector.load %arg6[%c16, %c0_26] : memref<305x4xbf16, #tpu.memory_space<vmem>>, vector<256x4xbf16>
    %c1 = arith.constant 1 : index
    %c0_27 = arith.constant 0 : index
    %c0_28 = arith.constant 0 : index
    %50 = vector.load %arg2[%c1, %c0_27, %c0_28] : memref<9x4x4xbf16, #tpu.memory_space<vmem>>, vector<1x4x4xbf16>
    %51 = vector.shape_cast %50 : vector<1x4x4xbf16> to vector<4x4xbf16>
    %cst_29 = arith.constant dense<0.000000e+00> : vector<256x4xf32>
    %52 = tpu.matmul %49, %51, %cst_29 {dimension_numbers = #tpu.dot_dimension_numbers<[1], [0], [0], [1], [0, 0, 1, 1], [], []>} : vector<256x4xbf16>, vector<4x4xbf16>, vector<256x4xf32> -> vector<256x4xf32>
    %53 = arith.addf %48, %52 : vector<256x4xf32>
    %c32_30 = arith.constant 32 : index
    %c0_31 = arith.constant 0 : index
    %54 = vector.load %arg6[%c32_30, %c0_31] : memref<305x4xbf16, #tpu.memory_space<vmem>>, vector<256x4xbf16>
    %c4 = arith.constant 4 : index
    %c0_32 = arith.constant 0 : index
    %c0_33 = arith.constant 0 : index
    %55 = vector.load %arg2[%c4, %c0_32, %c0_33] : memref<9x4x4xbf16, #tpu.memory_space<vmem>>, vector<1x4x4xbf16>
    %56 = vector.shape_cast %55 : vector<1x4x4xbf16> to vector<4x4xbf16>
    %cst_34 = arith.constant dense<0.000000e+00> : vector<256x4xf32>
    %57 = tpu.matmul %54, %56, %cst_34 {dimension_numbers = #tpu.dot_dimension_numbers<[1], [0], [0], [1], [0, 0, 1, 1], [], []>} : vector<256x4xbf16>, vector<4x4xbf16>, vector<256x4xf32> -> vector<256x4xf32>
    %58 = arith.addf %53, %57 : vector<256x4xf32>
    %c48 = arith.constant 48 : index
    %c0_35 = arith.constant 0 : index
    %59 = vector.load %arg6[%c48, %c0_35] : memref<305x4xbf16, #tpu.memory_space<vmem>>, vector<256x4xbf16>
    %c7 = arith.constant 7 : index
    %c0_36 = arith.constant 0 : index
    %c0_37 = arith.constant 0 : index
    %60 = vector.load %arg2[%c7, %c0_36, %c0_37] : memref<9x4x4xbf16, #tpu.memory_space<vmem>>, vector<1x4x4xbf16>
    %61 = vector.shape_cast %60 : vector<1x4x4xbf16> to vector<4x4xbf16>
    %cst_38 = arith.constant dense<0.000000e+00> : vector<256x4xf32>
    %62 = tpu.matmul %59, %61, %cst_38 {dimension_numbers = #tpu.dot_dimension_numbers<[1], [0], [0], [1], [0, 0, 1, 1], [], []>} : vector<256x4xbf16>, vector<4x4xbf16>, vector<256x4xf32> -> vector<256x4xf32>
    %63 = arith.addf %58, %62 : vector<256x4xf32>
    %cst_39 = arith.constant 0.000000e+00 : f32
    %64 = vector.broadcast %cst_39 : f32 to vector<256x4xf32>
    %c17 = arith.constant 17 : index
    %c0_40 = arith.constant 0 : index
    %65 = vector.load %arg6[%c17, %c0_40] : memref<305x4xbf16, #tpu.memory_space<vmem>>, vector<256x4xbf16>
    %c2 = arith.constant 2 : index
    %c0_41 = arith.constant 0 : index
    %c0_42 = arith.constant 0 : index
    %66 = vector.load %arg2[%c2, %c0_41, %c0_42] : memref<9x4x4xbf16, #tpu.memory_space<vmem>>, vector<1x4x4xbf16>
    %67 = vector.shape_cast %66 : vector<1x4x4xbf16> to vector<4x4xbf16>
    %cst_43 = arith.constant dense<0.000000e+00> : vector<256x4xf32>
    %68 = tpu.matmul %65, %67, %cst_43 {dimension_numbers = #tpu.dot_dimension_numbers<[1], [0], [0], [1], [0, 0, 1, 1], [], []>} : vector<256x4xbf16>, vector<4x4xbf16>, vector<256x4xf32> -> vector<256x4xf32>
    %69 = arith.addf %64, %68 : vector<256x4xf32>
    %c33 = arith.constant 33 : index
    %c0_44 = arith.constant 0 : index
    %70 = vector.load %arg6[%c33, %c0_44] : memref<305x4xbf16, #tpu.memory_space<vmem>>, vector<256x4xbf16>
    %c5 = arith.constant 5 : index
    %c0_45 = arith.constant 0 : index
    %c0_46 = arith.constant 0 : index
    %71 = vector.load %arg2[%c5, %c0_45, %c0_46] : memref<9x4x4xbf16, #tpu.memory_space<vmem>>, vector<1x4x4xbf16>
    %72 = vector.shape_cast %71 : vector<1x4x4xbf16> to vector<4x4xbf16>
    %cst_47 = arith.constant dense<0.000000e+00> : vector<256x4xf32>
    %73 = tpu.matmul %70, %72, %cst_47 {dimension_numbers = #tpu.dot_dimension_numbers<[1], [0], [0], [1], [0, 0, 1, 1], [], []>} : vector<256x4xbf16>, vector<4x4xbf16>, vector<256x4xf32> -> vector<256x4xf32>
    %74 = arith.addf %69, %73 : vector<256x4xf32>
    %c49 = arith.constant 49 : index
    %c0_48 = arith.constant 0 : index
    %75 = vector.load %arg6[%c49, %c0_48] : memref<305x4xbf16, #tpu.memory_space<vmem>>, vector<256x4xbf16>
    %c8 = arith.constant 8 : index
    %c0_49 = arith.constant 0 : index
    %c0_50 = arith.constant 0 : index
    %76 = vector.load %arg2[%c8, %c0_49, %c0_50] : memref<9x4x4xbf16, #tpu.memory_space<vmem>>, vector<1x4x4xbf16>
    %77 = vector.shape_cast %76 : vector<1x4x4xbf16> to vector<4x4xbf16>
    %cst_51 = arith.constant dense<0.000000e+00> : vector<256x4xf32>
    %78 = tpu.matmul %75, %77, %cst_51 {dimension_numbers = #tpu.dot_dimension_numbers<[1], [0], [0], [1], [0, 0, 1, 1], [], []>} : vector<256x4xbf16>, vector<4x4xbf16>, vector<256x4xf32> -> vector<256x4xf32>
    %79 = arith.addf %74, %78 : vector<256x4xf32>
    %80 = vector.broadcast %27 : vector<256x1xf32> to vector<256x4xf32>
    %81 = arith.mulf %80, %47 : vector<256x4xf32>
    %82 = arith.addf %81, %63 : vector<256x4xf32>
    %83 = vector.broadcast %31 : vector<256x1xf32> to vector<256x4xf32>
    %84 = arith.mulf %83, %79 : vector<256x4xf32>
    %85 = arith.addf %82, %84 : vector<256x4xf32>
    %c0_52 = arith.constant 0 : index
    %c0_53 = arith.constant 0 : index
    %86 = vector.load %arg4[%c0_52, %c0_53] : memref<2x4xf32, #tpu.memory_space<vmem>>, vector<1x4xf32>
    %87 = vector.broadcast %86 : vector<1x4xf32> to vector<256x4xf32>
    %88 = arith.addf %85, %87 : vector<256x4xf32>
    %cst_54 = arith.constant 0.000000e+00 : f32
    %89 = vector.broadcast %cst_54 : f32 to vector<256x4xf32>
    %90 = arith.maximumf %88, %89 : vector<256x4xf32>
    %91 = arith.truncf %90 : vector<256x4xf32> to vector<256x4xbf16>
    %c32_55 = arith.constant 32 : index
    %c0_56 = arith.constant 0 : index
    %92 = vector.load %arg6[%c32_55, %c0_56] : memref<305x4xbf16, #tpu.memory_space<vmem>>, vector<256x4xbf16>
    tpu.vector_store %arg6[%c32_55, %c0_56], %91 {strides = array<i32>} : memref<305x4xbf16, #tpu.memory_space<vmem>>, vector<256x4xbf16>,
    %cst_57 = arith.constant 0.000000e+00 : f32
    %93 = vector.broadcast %cst_57 : f32 to vector<256x4xf32>
    %c15_58 = arith.constant 15 : index
    %c0_59 = arith.constant 0 : index
    %94 = vector.load %arg6[%c15_58, %c0_59] : memref<305x4xbf16, #tpu.memory_space<vmem>>, vector<256x4xbf16>
    %c0_60 = arith.constant 0 : index
    %c0_61 = arith.constant 0 : index
    %c0_62 = arith.constant 0 : index
    %95 = vector.load %arg3[%c0_60, %c0_61, %c0_62] : memref<9x4x4xbf16, #tpu.memory_space<vmem>>, vector<1x4x4xbf16>
    %96 = vector.shape_cast %95 : vector<1x4x4xbf16> to vector<4x4xbf16>
    %cst_63 = arith.constant dense<0.000000e+00> : vector<256x4xf32>
    %97 = tpu.matmul %94, %96, %cst_63 {dimension_numbers = #tpu.dot_dimension_numbers<[1], [0], [0], [1], [0, 0, 1, 1], [], []>} : vector<256x4xbf16>, vector<4x4xbf16>, vector<256x4xf32> -> vector<256x4xf32>
    %98 = arith.addf %93, %97 : vector<256x4xf32>
    %c31_64 = arith.constant 31 : index
    %c0_65 = arith.constant 0 : index
    %99 = vector.load %arg6[%c31_64, %c0_65] : memref<305x4xbf16, #tpu.memory_space<vmem>>, vector<256x4xbf16>
    %c3_66 = arith.constant 3 : index
    %c0_67 = arith.constant 0 : index
    %c0_68 = arith.constant 0 : index
    %100 = vector.load %arg3[%c3_66, %c0_67, %c0_68] : memref<9x4x4xbf16, #tpu.memory_space<vmem>>, vector<1x4x4xbf16>
    %101 = vector.shape_cast %100 : vector<1x4x4xbf16> to vector<4x4xbf16>
    %cst_69 = arith.constant dense<0.000000e+00> : vector<256x4xf32>
    %102 = tpu.matmul %99, %101, %cst_69 {dimension_numbers = #tpu.dot_dimension_numbers<[1], [0], [0], [1], [0, 0, 1, 1], [], []>} : vector<256x4xbf16>, vector<4x4xbf16>, vector<256x4xf32> -> vector<256x4xf32>
    %103 = arith.addf %98, %102 : vector<256x4xf32>
    %c47_70 = arith.constant 47 : index
    %c0_71 = arith.constant 0 : index
    %104 = vector.load %arg6[%c47_70, %c0_71] : memref<305x4xbf16, #tpu.memory_space<vmem>>, vector<256x4xbf16>
    %c6_72 = arith.constant 6 : index
    %c0_73 = arith.constant 0 : index
    %c0_74 = arith.constant 0 : index
    %105 = vector.load %arg3[%c6_72, %c0_73, %c0_74] : memref<9x4x4xbf16, #tpu.memory_space<vmem>>, vector<1x4x4xbf16>
    %106 = vector.shape_cast %105 : vector<1x4x4xbf16> to vector<4x4xbf16>
    %cst_75 = arith.constant dense<0.000000e+00> : vector<256x4xf32>
    %107 = tpu.matmul %104, %106, %cst_75 {dimension_numbers = #tpu.dot_dimension_numbers<[1], [0], [0], [1], [0, 0, 1, 1], [], []>} : vector<256x4xbf16>, vector<4x4xbf16>, vector<256x4xf32> -> vector<256x4xf32>
    %108 = arith.addf %103, %107 : vector<256x4xf32>
    %cst_76 = arith.constant 0.000000e+00 : f32
    %109 = vector.broadcast %cst_76 : f32 to vector<256x4xf32>
    %c16_77 = arith.constant 16 : index
    %c0_78 = arith.constant 0 : index
    %110 = vector.load %arg6[%c16_77, %c0_78] : memref<305x4xbf16, #tpu.memory_space<vmem>>, vector<256x4xbf16>
    %c1_79 = arith.constant 1 : index
    %c0_80 = arith.constant 0 : index
    %c0_81 = arith.constant 0 : index
    %111 = vector.load %arg3[%c1_79, %c0_80, %c0_81] : memref<9x4x4xbf16, #tpu.memory_space<vmem>>, vector<1x4x4xbf16>
    %112 = vector.shape_cast %111 : vector<1x4x4xbf16> to vector<4x4xbf16>
    %cst_82 = arith.constant dense<0.000000e+00> : vector<256x4xf32>
    %113 = tpu.matmul %110, %112, %cst_82 {dimension_numbers = #tpu.dot_dimension_numbers<[1], [0], [0], [1], [0, 0, 1, 1], [], []>} : vector<256x4xbf16>, vector<4x4xbf16>, vector<256x4xf32> -> vector<256x4xf32>
    %114 = arith.addf %109, %113 : vector<256x4xf32>
    %c32_83 = arith.constant 32 : index
    %c0_84 = arith.constant 0 : index
    %115 = vector.load %arg6[%c32_83, %c0_84] : memref<305x4xbf16, #tpu.memory_space<vmem>>, vector<256x4xbf16>
    %c4_85 = arith.constant 4 : index
    %c0_86 = arith.constant 0 : index
    %c0_87 = arith.constant 0 : index
    %116 = vector.load %arg3[%c4_85, %c0_86, %c0_87] : memref<9x4x4xbf16, #tpu.memory_space<vmem>>, vector<1x4x4xbf16>
    %117 = vector.shape_cast %116 : vector<1x4x4xbf16> to vector<4x4xbf16>
    %cst_88 = arith.constant dense<0.000000e+00> : vector<256x4xf32>
    %118 = tpu.matmul %115, %117, %cst_88 {dimension_numbers = #tpu.dot_dimension_numbers<[1], [0], [0], [1], [0, 0, 1, 1], [], []>} : vector<256x4xbf16>, vector<4x4xbf16>, vector<256x4xf32> -> vector<256x4xf32>
    %119 = arith.addf %114, %118 : vector<256x4xf32>
    %c48_89 = arith.constant 48 : index
    %c0_90 = arith.constant 0 : index
    %120 = vector.load %arg6[%c48_89, %c0_90] : memref<305x4xbf16, #tpu.memory_space<vmem>>, vector<256x4xbf16>
    %c7_91 = arith.constant 7 : index
    %c0_92 = arith.constant 0 : index
    %c0_93 = arith.constant 0 : index
    %121 = vector.load %arg3[%c7_91, %c0_92, %c0_93] : memref<9x4x4xbf16, #tpu.memory_space<vmem>>, vector<1x4x4xbf16>
    %122 = vector.shape_cast %121 : vector<1x4x4xbf16> to vector<4x4xbf16>
    %cst_94 = arith.constant dense<0.000000e+00> : vector<256x4xf32>
    %123 = tpu.matmul %120, %122, %cst_94 {dimension_numbers = #tpu.dot_dimension_numbers<[1], [0], [0], [1], [0, 0, 1, 1], [], []>} : vector<256x4xbf16>, vector<4x4xbf16>, vector<256x4xf32> -> vector<256x4xf32>
    %124 = arith.addf %119, %123 : vector<256x4xf32>
    %cst_95 = arith.constant 0.000000e+00 : f32
    %125 = vector.broadcast %cst_95 : f32 to vector<256x4xf32>
    %c17_96 = arith.constant 17 : index
    %c0_97 = arith.constant 0 : index
    %126 = vector.load %arg6[%c17_96, %c0_97] : memref<305x4xbf16, #tpu.memory_space<vmem>>, vector<256x4xbf16>
    %c2_98 = arith.constant 2 : index
    %c0_99 = arith.constant 0 : index
    %c0_100 = arith.constant 0 : index
    %127 = vector.load %arg3[%c2_98, %c0_99, %c0_100] : memref<9x4x4xbf16, #tpu.memory_space<vmem>>, vector<1x4x4xbf16>
    %128 = vector.shape_cast %127 : vector<1x4x4xbf16> to vector<4x4xbf16>
    %cst_101 = arith.constant dense<0.000000e+00> : vector<256x4xf32>
    %129 = tpu.matmul %126, %128, %cst_101 {dimension_numbers = #tpu.dot_dimension_numbers<[1], [0], [0], [1], [0, 0, 1, 1], [], []>} : vector<256x4xbf16>, vector<4x4xbf16>, vector<256x4xf32> -> vector<256x4xf32>
    %130 = arith.addf %125, %129 : vector<256x4xf32>
    %c33_102 = arith.constant 33 : index
    %c0_103 = arith.constant 0 : index
    %131 = vector.load %arg6[%c33_102, %c0_103] : memref<305x4xbf16, #tpu.memory_space<vmem>>, vector<256x4xbf16>
    %c5_104 = arith.constant 5 : index
    %c0_105 = arith.constant 0 : index
    %c0_106 = arith.constant 0 : index
    %132 = vector.load %arg3[%c5_104, %c0_105, %c0_106] : memref<9x4x4xbf16, #tpu.memory_space<vmem>>, vector<1x4x4xbf16>
    %133 = vector.shape_cast %132 : vector<1x4x4xbf16> to vector<4x4xbf16>
    %cst_107 = arith.constant dense<0.000000e+00> : vector<256x4xf32>
    %134 = tpu.matmul %131, %133, %cst_107 {dimension_numbers = #tpu.dot_dimension_numbers<[1], [0], [0], [1], [0, 0, 1, 1], [], []>} : vector<256x4xbf16>, vector<4x4xbf16>, vector<256x4xf32> -> vector<256x4xf32>
    %135 = arith.addf %130, %134 : vector<256x4xf32>
    %c49_108 = arith.constant 49 : index
    %c0_109 = arith.constant 0 : index
    %136 = vector.load %arg6[%c49_108, %c0_109] : memref<305x4xbf16, #tpu.memory_space<vmem>>, vector<256x4xbf16>
    %c8_110 = arith.constant 8 : index
    %c0_111 = arith.constant 0 : index
    %c0_112 = arith.constant 0 : index
    %137 = vector.load %arg3[%c8_110, %c0_111, %c0_112] : memref<9x4x4xbf16, #tpu.memory_space<vmem>>, vector<1x4x4xbf16>
    %138 = vector.shape_cast %137 : vector<1x4x4xbf16> to vector<4x4xbf16>
    %cst_113 = arith.constant dense<0.000000e+00> : vector<256x4xf32>
    %139 = tpu.matmul %136, %138, %cst_113 {dimension_numbers = #tpu.dot_dimension_numbers<[1], [0], [0], [1], [0, 0, 1, 1], [], []>} : vector<256x4xbf16>, vector<4x4xbf16>, vector<256x4xf32> -> vector<256x4xf32>
    %140 = arith.addf %135, %139 : vector<256x4xf32>
    %141 = vector.broadcast %27 : vector<256x1xf32> to vector<256x4xf32>
    %142 = arith.mulf %141, %108 : vector<256x4xf32>
    %143 = arith.addf %142, %124 : vector<256x4xf32>
    %144 = vector.broadcast %31 : vector<256x1xf32> to vector<256x4xf32>
    %145 = arith.mulf %144, %140 : vector<256x4xf32>
    %146 = arith.addf %143, %145 : vector<256x4xf32>
    %c1_114 = arith.constant 1 : index
    %c0_115 = arith.constant 0 : index
    %147 = vector.load %arg4[%c1_114, %c0_115] : memref<2x4xf32, #tpu.memory_space<vmem>>, vector<1x4xf32>
    %148 = vector.broadcast %147 : vector<1x4xf32> to vector<256x4xf32>
    %149 = arith.addf %146, %148 : vector<256x4xf32>
    %c0_116 = arith.constant 0 : index
    %c0_117 = arith.constant 0 : index
    %c0_118 = arith.constant 0 : index
    %150 = vector.load %arg1[%c0_116, %c0_117, %c0_118] : memref<1x256x4xbf16, #tpu.memory_space<vmem>>, vector<1x256x4xbf16>
    %151 = vector.shape_cast %150 : vector<1x256x4xbf16> to vector<256x4xbf16>
    %152 = arith.extf %151 : vector<256x4xbf16> to vector<256x4xf32>
    %153 = arith.addf %149, %152 : vector<256x4xf32>
    %cst_119 = arith.constant 0.000000e+00 : f32
    %154 = vector.broadcast %cst_119 : f32 to vector<256x4xf32>
    %155 = arith.maximumf %153, %154 : vector<256x4xf32>
    %c0_120 = arith.constant 0 : index
    %c0_121 = arith.constant 0 : index
    %c0_122 = arith.constant 0 : index
    %156 = vector.load %arg5[%c0_120, %c0_121, %c0_122] : memref<1x256x4xf32, #tpu.memory_space<vmem>>, vector<1x256x4xf32>
    %157 = vector.shape_cast %156 : vector<1x256x4xf32> to vector<256x4xf32>
    %158 = vector.shape_cast %155 : vector<256x4xf32> to vector<1x256x4xf32>
    tpu.vector_store %arg5[%c0_120, %c0_121, %c0_122], %158 {strides = array<i32>} : memref<1x256x4xf32, #tpu.memory_space<vmem>>, vector<1x256x4xf32>,
    return
  }
  func.func @transform_0(%arg0: i32) -> (i32, i32, i32) {
    %c0_i32 = arith.constant 0 : i32
    %c0_i32_0 = arith.constant 0 : i32
    %c0_i32_1 = arith.constant 0 : i32
    return %arg0, %c0_i32, %c0_i32_0 : i32, i32, i32
  }
  func.func @transform_1(%arg0: i32) -> (i32, i32, i32) {
    %c0_i32 = arith.constant 0 : i32
    %c0_i32_0 = arith.constant 0 : i32
    %c0_i32_1 = arith.constant 0 : i32
    %c0_i32_2 = arith.constant 0 : i32
    return %c0_i32, %c0_i32_0, %c0_i32_1 : i32, i32, i32
  }
  func.func @transform_2(%arg0: i32) -> (i32, i32, i32) {
    %c0_i32 = arith.constant 0 : i32
    %c0_i32_0 = arith.constant 0 : i32
    %c0_i32_1 = arith.constant 0 : i32
    %c0_i32_2 = arith.constant 0 : i32
    return %c0_i32, %c0_i32_0, %c0_i32_1 : i32, i32, i32
  }
  func.func @transform_3(%arg0: i32) -> (i32, i32) {
    %c0_i32 = arith.constant 0 : i32
    %c0_i32_0 = arith.constant 0 : i32
    %c0_i32_1 = arith.constant 0 : i32
    return %c0_i32, %c0_i32_0 : i32, i32
  }
  func.func @transform_4(%arg0: i32) -> (i32, i32, i32) {
    %c0_i32 = arith.constant 0 : i32
    %c0_i32_0 = arith.constant 0 : i32
    %c0_i32_1 = arith.constant 0 : i32
    return %arg0, %c0_i32, %c0_i32_0 : i32, i32, i32
  }
}

</mosaic_0001>

<llo_original>
// kernel: basic_block_forward.1
$region0: #{basic_block_forward.1}
  #allocation0 [shape = 'u32[]', space=smem, size = 0x4, offset = 0x4, fixed_abs, tag = 'smem constant byte address 0x4 - core index']
  #allocation1 [shape = 'u32[72,128]{1,0:T(1,128)}', space=vmem, size = 0x9000, scoped, tag = 'internal scratch']
  #allocation2 [shape = 'bf16[305,4]{1,0:T(8,128)(2,1)}', space=vmem, size = 0x13800, scoped, tag = 'scratch operand']
  %s0 = inlined_call_operand.vmem [shape: bf16[2,256,4], index: 0, kind: input, shape index: {}]
  %s1 = inlined_call_operand.vmem [shape: bf16[9,4,4], index: 1, kind: input, shape index: {}]
  %s2 = inlined_call_operand.vmem [shape: bf16[9,4,4], index: 2, kind: input, shape index: {}]
  %s3 = inlined_call_operand.vmem [shape: f32[2,4], index: 3, kind: input, shape index: {}]
  %s4 = inlined_call_operand.vmem [shape: f32[2,256,4], index: 4, kind: output, shape index: {}]
  %s5 = sld [smem:[#allocation0]]
  $region49: #{basic_block_forward.1} parent=0
    _
  %s7 = ssub.s32 1, %s5
  %s8 = scalar_select 0, %s7, %s5
  loop: start=0, step=1, limit=4
  $region2: #{basic_block_forward.1} parent=0 // loop_pre_header
    _
  $region3: #{basic_block_forward.1} parent=0 // loop_header
    %s10 = sphi 0, %s14
    %p11 = scmp.ge.s32.totalorder %s10, 4
    %s20 = sphi 0, %s22
    %s23 = sphi 0, %s20
    %s24 = sphi 0, %s23
    %s40 = sphi 0, %s24
    %s44 = sphi 0, %s44
    %s46 = sphi 0, %s44
    %s47 = sphi 0, %s46
    %s61 = sphi 0, %s47
    %s65 = sphi 0, %s65
    %s67 = sphi 0, %s65
    %s68 = sphi 0, %s67
    %s82 = sphi 0, %s68
    %s86 = sphi 0, %s86
    %s88 = sphi 0, %s86
    %s89 = sphi 0, %s88
    %s103 = sphi 0, %s89
    %s109 = sphi 0, %s111
    %s112 = sphi 0, %s109
    %s113 = sphi 0, %s112
    %s129 = sphi 0, %s113
  $region4: #{basic_block_forward.1} parent=0 // loop_header_branch
    %13 = sbr.rel (%p11) target = $region8
  $region5: #{basic_block_forward.1} parent=0 // loop_body
    %s15 = ssub.s32 %s10, 1
    %s16 = ssub.s32 %s10, 2
    %s17 = sadd.s32 %s10, 1
    %s18 = ssub.s32 %s10, %s17
    %p19 = scmp.eq.s32.totalorder %s18, 0
    %s21 = sadd.s32 %s20, 1
    %s22 = scalar_select %p19, %s20, %s21
    %p25 = pneg %p19
    %p26 = scmp.eq.s32.totalorder %s10, 1
    %p27 = por %p25, %p26
    %p28 = scmp.ne.s32.totalorder %s20, %s23
    %p29 = scmp.eq.s32.totalorder %s10, 0
    %p30 = por %p28, %p29
    %p31 = scmp.ne.s32.totalorder %s20, %s23
    %p32 = scmp.eq.s32.totalorder %s15, 1
    %p33 = por %p31, %p32
    %p34 = scmp.ne.s32.totalorder %s23, %s24
    %p35 = scmp.eq.s32.totalorder %s15, 0
    %p36 = por %p34, %p35
    %p37 = scmp.ne.s32.totalorder %s23, %s24
    %p38 = scmp.eq.s32.totalorder %s16, 1
    %p39 = por %p37, %p38
    %p41 = scmp.ne.s32.totalorder %s24, %s40
    %p42 = scmp.eq.s32.totalorder %s16, 0
    %p43 = por %p41, %p42
    %s45 = sadd.s32 %s44, 1
    %p48 = scmp.eq.s32.totalorder %s10, 1
    %p49 = scmp.ne.s32.totalorder %s44, %s46
    %p50 = scmp.eq.s32.totalorder %s10, 0
    %p51 = por %p49, %p50
    %p52 = scmp.ne.s32.totalorder %s44, %s46
    %p53 = scmp.eq.s32.totalorder %s15, 1
    %p54 = por %p52, %p53
    %p55 = scmp.ne.s32.totalorder %s46, %s47
    %p56 = scmp.eq.s32.totalorder %s15, 0
    %p57 = por %p55, %p56
    %p58 = scmp.ne.s32.totalorder %s46, %s47
    %p59 = scmp.eq.s32.totalorder %s16, 1
    %p60 = por %p58, %p59
    %p62 = scmp.ne.s32.totalorder %s47, %s61
    %p63 = scmp.eq.s32.totalorder %s16, 0
    %p64 = por %p62, %p63
    %s66 = sadd.s32 %s65, 1
    %p69 = scmp.eq.s32.totalorder %s10, 1
    %p70 = scmp.ne.s32.totalorder %s65, %s67
    %p71 = scmp.eq.s32.totalorder %s10, 0
    %p72 = por %p70, %p71
    %p73 = scmp.ne.s32.totalorder %s65, %s67
    %p74 = scmp.eq.s32.totalorder %s15, 1
    %p75 = por %p73, %p74
    %p76 = scmp.ne.s32.totalorder %s67, %s68
    %p77 = scmp.eq.s32.totalorder %s15, 0
    %p78 = por %p76, %p77
    %p79 = scmp.ne.s32.totalorder %s67, %s68
    %p80 = scmp.eq.s32.totalorder %s16, 1
    %p81 = por %p79, %p80
    %p83 = scmp.ne.s32.totalorder %s68, %s82
    %p84 = scmp.eq.s32.totalorder %s16, 0
    %p85 = por %p83, %p84
    %s87 = sadd.s32 %s86, 1
    %p90 = scmp.eq.s32.totalorder %s10, 1
    %p91 = scmp.ne.s32.totalorder %s86, %s88
    %p92 = scmp.eq.s32.totalorder %s10, 0
    %p93 = por %p91, %p92
    %p94 = scmp.ne.s32.totalorder %s86, %s88
    %p95 = scmp.eq.s32.totalorder %s15, 1
    %p96 = por %p94, %p95
    %p97 = scmp.ne.s32.totalorder %s88, %s89
    %p98 = scmp.eq.s32.totalorder %s15, 0
    %p99 = por %p97, %p98
    %p100 = scmp.ne.s32.totalorder %s88, %s89
    %p101 = scmp.eq.s32.totalorder %s16, 1
    %p102 = por %p100, %p101
    %p104 = scmp.ne.s32.totalorder %s89, %s103
    %p105 = scmp.eq.s32.totalorder %s16, 0
    %p106 = por %p104, %p105
    %s107 = ssub.s32 %s10, %s17
    %p108 = scmp.eq.s32.totalorder %s107, 0
    %s110 = sadd.s32 %s109, 1
    %s111 = scalar_select %p108, %s109, %s110
    %p114 = pneg %p108
    %p115 = scmp.eq.s32.totalorder %s10, 1
    %p116 = por %p114, %p115
    %p117 = scmp.ne.s32.totalorder %s109, %s112
    %p118 = scmp.eq.s32.totalorder %s10, 0
    %p119 = por %p117, %p118
    %p120 = scmp.ne.s32.totalorder %s109, %s112
    %p121 = scmp.eq.s32.totalorder %s15, 1
    %p122 = por %p120, %p121
    %p123 = scmp.ne.s32.totalorder %s112, %s113
    %p124 = scmp.eq.s32.totalorder %s15, 0
    %p125 = por %p123, %p124
    %p126 = scmp.ne.s32.totalorder %s112, %s113
    %p127 = scmp.eq.s32.totalorder %s16, 1
    %p128 = por %p126, %p127
    %p130 = scmp.ne.s32.totalorder %s113, %s129
    %p131 = scmp.eq.s32.totalorder %s16, 0
    %p132 = por %p130, %p131
    %p133 = scmp.le.s32.totalorder 1, %s10
    %p134 = scmp.lt.s32.totalorder %s10, 3
    %p135 = pnand %p133, %p134
    %p136 = pneg %p135
    // Predicated region
    $region9: #{basic_block_forward.1} parent=5 // pred_check
      _
    $region10: #{basic_block_forward.1} parent=5 // pred_check_branch
      %138 = sbr.rel (%p135) target = $region12
    $region11: #{basic_block_forward.1} parent=5 // pred_region
      %s139 = ssub.s32 %s10, 1
      // Predicated region
      $region13: #{basic_block_forward.1} parent=11 // pred_check
        %p140 = pneg %p57
      $region14: #{basic_block_forward.1} parent=11 // pred_check_branch
        %142 = sbr.rel (%p140) target = $region16
      $region15: #{basic_block_forward.1} parent=11 // pred_region
        _
      $region16: #{basic_block_forward.1} parent=11 // pred_fallthru
        _
      // Predicated region
      $region17: #{basic_block_forward.1} parent=11 // pred_check
        %p143 = pneg %p78
      $region18: #{basic_block_forward.1} parent=11 // pred_check_branch
        %145 = sbr.rel (%p143) target = $region20
      $region19: #{basic_block_forward.1} parent=11 // pred_region
        _
      $region20: #{basic_block_forward.1} parent=11 // pred_fallthru
        _
      // Predicated region
      $region21: #{basic_block_forward.1} parent=11 // pred_check
        %p146 = pneg %p99
      $region22: #{basic_block_forward.1} parent=11 // pred_check_branch
        %148 = sbr.rel (%p146) target = $region24
      $region23: #{basic_block_forward.1} parent=11 // pred_region
        _
      $region24: #{basic_block_forward.1} parent=11 // pred_fallthru
        _
    $region12: #{basic_block_forward.1} parent=5 // pred_fallthru
      _
    %p149 = scmp.lt.s32.totalorder %s10, 2
    // Predicated region
    $region25: #{basic_block_forward.1} parent=5 // pred_check
      %p150 = pneg %p149
    $region26: #{basic_block_forward.1} parent=5 // pred_check_branch
      %152 = sbr.rel (%p150) target = $region28
    $region27: #{basic_block_forward.1} parent=5 // pred_region
      // Predicated region
      $region29: #{basic_block_forward.1} parent=27 // pred_check
        %p153 = pneg %p30
      $region30: #{basic_block_forward.1} parent=27 // pred_check_branch
        %155 = sbr.rel (%p153) target = $region32
      $region31: #{basic_block_forward.1} parent=27 // pred_region
        %p156 = scmp.lt.s32.totalorder %s10, 1
        %s157 = scalar_select %p156, %s10, 1
        %s158 = smul.addr %s157, 32
        %s159 = smul.addr %s158, 4
        %s160 = scalar_lea.vmem %s0, %s159
      $region32: #{basic_block_forward.1} parent=27 // pred_fallthru
        _
    $region28: #{basic_block_forward.1} parent=5 // pred_fallthru
      _
    %p161 = scmp.le.s32.totalorder 1, %s10
    %p162 = scmp.lt.s32.totalorder %s10, 3
    %p163 = pnand %p161, %p162
    %p164 = pneg %p163
    // Predicated region
    $region33: #{basic_block_forward.1} parent=5 // pred_check
      _
    $region34: #{basic_block_forward.1} parent=5 // pred_check_branch
      %166 = sbr.rel (%p163) target = $region36
    $region35: #{basic_block_forward.1} parent=5 // pred_region
      %s167 = ssub.s32 %s10, 1
      %p168 = scmp.lt.s32.totalorder %s15, 1
      %s169 = scalar_select %p168, %s15, 1
      %s170 = smul.addr %s169, 32
      %s171 = smul.addr %s170, 4
      %s172 = scalar_lea.vmem %s0, %s171
      %p173 = pneg %p36
      %p174 = pneg %p33
      %p175 = pneg %p57
      %p176 = pneg %p54
      %p177 = pneg %p78
      %p178 = pneg %p75
      %p179 = pneg %p99
      %p180 = pneg %p96
      %p181 = pneg %p125
      %p182 = pneg %p122
      %p183 = scmp.lt.s32.totalorder %s15, 1
      %s184 = scalar_select %p183, %s15, 1
      %s185 = smul.addr %s184, 32
      %s186 = smul.addr %s185, 8
      %s187 = scalar_lea.vmem %s4, %s186
      %p188 = scmp.lt.s32.totalorder %s15, 1
      %s189 = scalar_select %p188, %s15, 1
      %s190 = smul.addr %s189, 32
      %s191 = smul.addr %s190, 4
      %s192 = scalar_lea.vmem %s0, %s191
      %p193 = scmp.lt.s32.totalorder %s15, 1
      %s194 = scalar_select %p193, %s15, 1
      %s195 = smul.addr %s194, 32
      %s196 = smul.addr %s195, 8
      %s197 = scalar_lea.vmem %s4, %s196
      %vm199 = vcmask 27648
      %200 = vst.msk [vmem:[#allocation2] sm:$0xf] %vm199, 0
      %201 = vst.msk [vmem:[#allocation2 + $0x4] sm:$0xf] %vm199, 0
      %202 = vst.msk [vmem:[#allocation2 + $0x8] sm:$0xf] %vm199, 0
      %203 = vst.msk [vmem:[#allocation2 + $0xc] sm:$0xf] %vm199, 0
      %204 = vst.msk [vmem:[#allocation2 + $0x90] sm:$0xf] %vm199, 0
      %205 = vst.msk [vmem:[#allocation2 + $0x94] sm:$0xf] %vm199, 0
      %vm206 = vcmask 24576
      %vm207 = vsmask.f32 256
      %vm208 = vmand %vm206, %vm207
      %v209 = vld [vmem:[#allocation2 + $0x98] sm:$0x1]
      %v210 = vsel %vm208, 0, %v209
      %211 = vst [vmem:[#allocation2 + $0x98] sm:$0x1] %v210
      %v212 = vld [vmem:[%s192] sm:$0xf]
      %v213 = vld [vmem:[%s192 + $0x4] sm:$0xf]
      %v214 = vld [vmem:[%s192 + $0x8] sm:$0xf]
      %v215 = vld [vmem:[%s192 + $0xc] sm:$0xf]
      %v216 = vld [vmem:[%s192 + $0x10] sm:$0xf]
      %v217 = vld [vmem:[%s192 + $0x14] sm:$0xf]
      %v218 = vld [vmem:[%s192 + $0x18] sm:$0xf]
      %v219 = vld [vmem:[%s192 + $0x1c] sm:$0xf]
      %v220 = vld [vmem:[%s192 + $0x20] sm:$0xf]
      %v221 = vld [vmem:[%s192 + $0x24] sm:$0xf]
      %v222 = vld [vmem:[%s192 + $0x28] sm:$0xf]
      %v223 = vld [vmem:[%s192 + $0x2c] sm:$0xf]
      %v224 = vld [vmem:[%s192 + $0x30] sm:$0xf]
      %v225 = vld [vmem:[%s192 + $0x34] sm:$0xf]
      %v226 = vld [vmem:[%s192 + $0x38] sm:$0xf]
      %v227 = vld [vmem:[%s192 + $0x3c] sm:$0xf]
      %v228 = vld [vmem:[%s192 + $0x40] sm:$0xf]
      %v229 = vld [vmem:[%s192 + $0x44] sm:$0xf]
      %v230 = vld [vmem:[%s192 + $0x48] sm:$0xf]
      %v231 = vld [vmem:[%s192 + $0x4c] sm:$0xf]
      %v232 = vld [vmem:[%s192 + $0x50] sm:$0xf]
      %v233 = vld [vmem:[%s192 + $0x54] sm:$0xf]
      %v234 = vld [vmem:[%s192 + $0x58] sm:$0xf]
      %v235 = vld [vmem:[%s192 + $0x5c] sm:$0xf]
      %v236 = vld [vmem:[%s192 + $0x60] sm:$0xf]
      %v237 = vld [vmem:[%s192 + $0x64] sm:$0xf]
      %v238 = vld [vmem:[%s192 + $0x68] sm:$0xf]
      %v239 = vld [vmem:[%s192 + $0x6c] sm:$0xf]
      %v240 = vld [vmem:[%s192 + $0x70] sm:$0xf]
      %v241 = vld [vmem:[%s192 + $0x74] sm:$0xf]
      %v242 = vld [vmem:[%s192 + $0x78] sm:$0xf]
      %v243 = vld [vmem:[%s192 + $0x7c] sm:$0xf]
      %244 = vst.msk [vmem:[#allocation2 + $0x10] sm:$0xf] %vm199, %v212
      %245 = vst.msk [vmem:[#allocation2 + $0x14] sm:$0xf] %vm199, %v213
      %246 = vst.msk [vmem:[#allocation2 + $0x18] sm:$0xf] %vm199, %v214
      %247 = vst.msk [vmem:[#allocation2 + $0x1c] sm:$0xf] %vm199, %v215
      %248 = vst.msk [vmem:[#allocation2 + $0x20] sm:$0xf] %vm199, %v216
      %249 = vst.msk [vmem:[#allocation2 + $0x24] sm:$0xf] %vm199, %v217
      %250 = vst.msk [vmem:[#allocation2 + $0x28] sm:$0xf] %vm199, %v218
      %251 = vst.msk [vmem:[#allocation2 + $0x2c] sm:$0xf] %vm199, %v219
      %252 = vst.msk [vmem:[#allocation2 + $0x30] sm:$0xf] %vm199, %v220
      %253 = vst.msk [vmem:[#allocation2 + $0x34] sm:$0xf] %vm199, %v221
      %254 = vst.msk [vmem:[#allocation2 + $0x38] sm:$0xf] %vm199, %v222
      %255 = vst.msk [vmem:[#allocation2 + $0x3c] sm:$0xf] %vm199, %v223
      %256 = vst.msk [vmem:[#allocation2 + $0x40] sm:$0xf] %vm199, %v224
      %257 = vst.msk [vmem:[#allocation2 + $0x44] sm:$0xf] %vm199, %v225
      %258 = vst.msk [vmem:[#allocation2 + $0x48] sm:$0xf] %vm199, %v226
      %259 = vst.msk [vmem:[#allocation2 + $0x4c] sm:$0xf] %vm199, %v227
      %260 = vst.msk [vmem:[#allocation2 + $0x50] sm:$0xf] %vm199, %v228
      %261 = vst.msk [vmem:[#allocation2 + $0x54] sm:$0xf] %vm199, %v229
      %262 = vst.msk [vmem:[#allocation2 + $0x58] sm:$0xf] %vm199, %v230
      %263 = vst.msk [vmem:[#allocation2 + $0x5c] sm:$0xf] %vm199, %v231
      %264 = vst.msk [vmem:[#allocation2 + $0x60] sm:$0xf] %vm199, %v232
      %265 = vst.msk [vmem:[#allocation2 + $0x64] sm:$0xf] %vm199, %v233
      %266 = vst.msk [vmem:[#allocation2 + $0x68] sm:$0xf] %vm199, %v234
      %267 = vst.msk [vmem:[#allocation2 + $0x6c] sm:$0xf] %vm199, %v235
      %268 = vst.msk [vmem:[#allocation2 + $0x70] sm:$0xf] %vm199, %v236
      %269 = vst.msk [vmem:[#allocation2 + $0x74] sm:$0xf] %vm199, %v237
      %270 = vst.msk [vmem:[#allocation2 + $0x78] sm:$0xf] %vm199, %v238
      %271 = vst.msk [vmem:[#allocation2 + $0x7c] sm:$0xf] %vm199, %v239
      %272 = vst.msk [vmem:[#allocation2 + $0x80] sm:$0xf] %vm199, %v240
      %273 = vst.msk [vmem:[#allocation2 + $0x84] sm:$0xf] %vm199, %v241
      %274 = vst.msk [vmem:[#allocation2 + $0x88] sm:$0xf] %vm199, %v242
      %275 = vst.msk [vmem:[#allocation2 + $0x8c] sm:$0xf] %vm199, %v243
      %v276 = vlaneseq
      %v277 = vshrl.u32 %v276, 7
      %v278 = vadd.s32 %v277, 8
      %v279 = vadd.s32 %v277, 16
      %v280 = vadd.s32 %v277, 24
      %v281 = vadd.s32 %v277, 32
      %v282 = vadd.s32 %v277, 40
      %v283 = vadd.s32 %v277, 48
      %v284 = vadd.s32 %v277, 56
      %v285 = vadd.s32 %v277, 64
      %v286 = vadd.s32 %v277, 72
      %v287 = vadd.s32 %v277, 80
      %v288 = vadd.s32 %v277, 88
      %v289 = vadd.s32 %v277, 96
      %v290 = vadd.s32 %v277, 104
      %v291 = vadd.s32 %v277, 112
      %v292 = vadd.s32 %v277, 120
      %v293 = vadd.s32 %v277, 128
      %v294 = vadd.s32 %v277, 136
      %v295 = vadd.s32 %v277, 144
      %v296 = vadd.s32 %v277, 152
      %v297 = vadd.s32 %v277, 160
      %v298 = vadd.s32 %v277, 168
      %v299 = vadd.s32 %v277, 176
      %v300 = vadd.s32 %v277, 184
      %v301 = vadd.s32 %v277, 192
      %v302 = vadd.s32 %v277, 200
      %v303 = vadd.s32 %v277, 208
      %v304 = vadd.s32 %v277, 216
      %v305 = vadd.s32 %v277, 224
      %v306 = vadd.s32 %v277, 232
      %v307 = vadd.s32 %v277, 240
      %v308 = vadd.s32 %v277, 248
      %vm309 = vcmp.lt.s32.totalorder %v277, 0
      %v310 = vsub.s32 0, %v277
      %v311 = vsel %vm309, %v310, %v277
      %v312 = vshrl.u32 %v311, 4
      %v313 = vand.u32 %v311, 15
      %v314 = vsub.s32 0, %v313
      %v315 = vsel %vm309, %v314, %v313
      %vm316 = vcmp.lt.s32.totalorder %v278, 0
      %v317 = vsub.s32 0, %v278
      %v318 = vsel %vm316, %v317, %v278
      %v319 = vshrl.u32 %v318, 4
      %v320 = vand.u32 %v318, 15
      %v321 = vsub.s32 0, %v320
      %v322 = vsel %vm316, %v321, %v320
      %vm323 = vcmp.lt.s32.totalorder %v279, 0
      %v324 = vsub.s32 0, %v279
      %v325 = vsel %vm323, %v324, %v279
      %v326 = vshrl.u32 %v325, 4
      %v327 = vand.u32 %v325, 15
      %v328 = vsub.s32 0, %v327
      %v329 = vsel %vm323, %v328, %v327
      %vm330 = vcmp.lt.s32.totalorder %v280, 0
      %v331 = vsub.s32 0, %v280
      %v332 = vsel %vm330, %v331, %v280
      %v333 = vshrl.u32 %v332, 4
      %v334 = vand.u32 %v332, 15
      %v335 = vsub.s32 0, %v334
      %v336 = vsel %vm330, %v335, %v334
      %vm337 = vcmp.lt.s32.totalorder %v281, 0
      %v338 = vsub.s32 0, %v281
      %v339 = vsel %vm337, %v338, %v281
      %v340 = vshrl.u32 %v339, 4
      %v341 = vand.u32 %v339, 15
      %v342 = vsub.s32 0, %v341
      %v343 = vsel %vm337, %v342, %v341
      %vm344 = vcmp.lt.s32.totalorder %v282, 0
      %v345 = vsub.s32 0, %v282
      %v346 = vsel %vm344, %v345, %v282
      %v347 = vshrl.u32 %v346, 4
      %v348 = vand.u32 %v346, 15
      %v349 = vsub.s32 0, %v348
      %v350 = vsel %vm344, %v349, %v348
      %vm351 = vcmp.lt.s32.totalorder %v283, 0
      %v352 = vsub.s32 0, %v283
      %v353 = vsel %vm351, %v352, %v283
      %v354 = vshrl.u32 %v353, 4
      %v355 = vand.u32 %v353, 15
      %v356 = vsub.s32 0, %v355
      %v357 = vsel %vm351, %v356, %v355
      %vm358 = vcmp.lt.s32.totalorder %v284, 0
      %v359 = vsub.s32 0, %v284
      %v360 = vsel %vm358, %v359, %v284
      %v361 = vshrl.u32 %v360, 4
      %v362 = vand.u32 %v360, 15
      %v363 = vsub.s32 0, %v362
      %v364 = vsel %vm358, %v363, %v362
      %vm365 = vcmp.lt.s32.totalorder %v285, 0
      %v366 = vsub.s32 0, %v285
      %v367 = vsel %vm365, %v366, %v285
      %v368 = vshrl.u32 %v367, 4
      %v369 = vand.u32 %v367, 15
      %v370 = vsub.s32 0, %v369
      %v371 = vsel %vm365, %v370, %v369
      %vm372 = vcmp.lt.s32.totalorder %v286, 0
      %v373 = vsub.s32 0, %v286
      %v374 = vsel %vm372, %v373, %v286
      %v375 = vshrl.u32 %v374, 4
      %v376 = vand.u32 %v374, 15
      %v377 = vsub.s32 0, %v376
      %v378 = vsel %vm372, %v377, %v376
      %vm379 = vcmp.lt.s32.totalorder %v287, 0
      %v380 = vsub.s32 0, %v287
      %v381 = vsel %vm379, %v380, %v287
      %v382 = vshrl.u32 %v381, 4
      %v383 = vand.u32 %v381, 15
      %v384 = vsub.s32 0, %v383
      %v385 = vsel %vm379, %v384, %v383
      %vm386 = vcmp.lt.s32.totalorder %v288, 0
      %v387 = vsub.s32 0, %v288
      %v388 = vsel %vm386, %v387, %v288
      %v389 = vshrl.u32 %v388, 4
      %v390 = vand.u32 %v388, 15
      %v391 = vsub.s32 0, %v390
      %v392 = vsel %vm386, %v391, %v390
      %vm393 = vcmp.lt.s32.totalorder %v289, 0
      %v394 = vsub.s32 0, %v289
      %v395 = vsel %vm393, %v394, %v289
      %v396 = vshrl.u32 %v395, 4
      %v397 = vand.u32 %v395, 15
      %v398 = vsub.s32 0, %v397
      %v399 = vsel %vm393, %v398, %v397
      %vm400 = vcmp.lt.s32.totalorder %v290, 0
      %v401 = vsub.s32 0, %v290
      %v402 = vsel %vm400, %v401, %v290
      %v403 = vshrl.u32 %v402, 4
      %v404 = vand.u32 %v402, 15
      %v405 = vsub.s32 0, %v404
      %v406 = vsel %vm400, %v405, %v404
      %vm407 = vcmp.lt.s32.totalorder %v291, 0
      %v408 = vsub.s32 0, %v291
      %v409 = vsel %vm407, %v408, %v291
      %v410 = vshrl.u32 %v409, 4
      %v411 = vand.u32 %v409, 15
      %v412 = vsub.s32 0, %v411
      %v413 = vsel %vm407, %v412, %v411
      %vm414 = vcmp.lt.s32.totalorder %v292, 0
      %v415 = vsub.s32 0, %v292
      %v416 = vsel %vm414, %v415, %v292
      %v417 = vshrl.u32 %v416, 4
      %v418 = vand.u32 %v416, 15
      %v419 = vsub.s32 0, %v418
      %v420 = vsel %vm414, %v419, %v418
      %vm421 = vcmp.lt.s32.totalorder %v293, 0
      %v422 = vsub.s32 0, %v293
      %v423 = vsel %vm421, %v422, %v293
      %v424 = vshrl.u32 %v423, 4
      %v425 = vand.u32 %v423, 15
      %v426 = vsub.s32 0, %v425
      %v427 = vsel %vm421, %v426, %v425
      %vm428 = vcmp.lt.s32.totalorder %v294, 0
      %v429 = vsub.s32 0, %v294
      %v430 = vsel %vm428, %v429, %v294
      %v431 = vshrl.u32 %v430, 4
      %v432 = vand.u32 %v430, 15
      %v433 = vsub.s32 0, %v432
      %v434 = vsel %vm428, %v433, %v432
      %vm435 = vcmp.lt.s32.totalorder %v295, 0
      %v436 = vsub.s32 0, %v295
      %v437 = vsel %vm435, %v436, %v295
      %v438 = vshrl.u32 %v437, 4
      %v439 = vand.u32 %v437, 15
      %v440 = vsub.s32 0, %v439
      %v441 = vsel %vm435, %v440, %v439
      %vm442 = vcmp.lt.s32.totalorder %v296, 0
      %v443 = vsub.s32 0, %v296
      %v444 = vsel %vm442, %v443, %v296
      %v445 = vshrl.u32 %v444, 4
      %v446 = vand.u32 %v444, 15
      %v447 = vsub.s32 0, %v446
      %v448 = vsel %vm442, %v447, %v446
      %vm449 = vcmp.lt.s32.totalorder %v297, 0
      %v450 = vsub.s32 0, %v297
      %v451 = vsel %vm449, %v450, %v297
      %v452 = vshrl.u32 %v451, 4
      %v453 = vand.u32 %v451, 15
      %v454 = vsub.s32 0, %v453
      %v455 = vsel %vm449, %v454, %v453
      %vm456 = vcmp.lt.s32.totalorder %v298, 0
      %v457 = vsub.s32 0, %v298
      %v458 = vsel %vm456, %v457, %v298
      %v459 = vshrl.u32 %v458, 4
      %v460 = vand.u32 %v458, 15
      %v461 = vsub.s32 0, %v460
      %v462 = vsel %vm456, %v461, %v460
      %vm463 = vcmp.lt.s32.totalorder %v299, 0
      %v464 = vsub.s32 0, %v299
      %v465 = vsel %vm463, %v464, %v299
      %v466 = vshrl.u32 %v465, 4
      %v467 = vand.u32 %v465, 15
      %v468 = vsub.s32 0, %v467
      %v469 = vsel %vm463, %v468, %v467
      %vm470 = vcmp.lt.s32.totalorder %v300, 0
      %v471 = vsub.s32 0, %v300
      %v472 = vsel %vm470, %v471, %v300
      %v473 = vshrl.u32 %v472, 4
      %v474 = vand.u32 %v472, 15
      %v475 = vsub.s32 0, %v474
      %v476 = vsel %vm470, %v475, %v474
      %vm477 = vcmp.lt.s32.totalorder %v301, 0
      %v478 = vsub.s32 0, %v301
      %v479 = vsel %vm477, %v478, %v301
      %v480 = vshrl.u32 %v479, 4
      %v481 = vand.u32 %v479, 15
      %v482 = vsub.s32 0, %v481
      %v483 = vsel %vm477, %v482, %v481
      %vm484 = vcmp.lt.s32.totalorder %v302, 0
      %v485 = vsub.s32 0, %v302
      %v486 = vsel %vm484, %v485, %v302
      %v487 = vshrl.u32 %v486, 4
      %v488 = vand.u32 %v486, 15
      %v489 = vsub.s32 0, %v488
      %v490 = vsel %vm484, %v489, %v488
      %vm491 = vcmp.lt.s32.totalorder %v303, 0
      %v492 = vsub.s32 0, %v303
      %v493 = vsel %vm491, %v492, %v303
      %v494 = vshrl.u32 %v493, 4
      %v495 = vand.u32 %v493, 15
      %v496 = vsub.s32 0, %v495
      %v497 = vsel %vm491, %v496, %v495
      %vm498 = vcmp.lt.s32.totalorder %v304, 0
      %v499 = vsub.s32 0, %v304
      %v500 = vsel %vm498, %v499, %v304
      %v501 = vshrl.u32 %v500, 4
      %v502 = vand.u32 %v500, 15
      %v503 = vsub.s32 0, %v502
      %v504 = vsel %vm498, %v503, %v502
      %vm505 = vcmp.lt.s32.totalorder %v305, 0
      %v506 = vsub.s32 0, %v305
      %v507 = vsel %vm505, %v506, %v305
      %v508 = vshrl.u32 %v507, 4
      %v509 = vand.u32 %v507, 15
      %v510 = vsub.s32 0, %v509
      %v511 = vsel %vm505, %v510, %v509
      %vm512 = vcmp.lt.s32.totalorder %v306, 0
      %v513 = vsub.s32 0, %v306
      %v514 = vsel %vm512, %v513, %v306
      %v515 = vshrl.u32 %v514, 4
      %v516 = vand.u32 %v514, 15
      %v517 = vsub.s32 0, %v516
      %v518 = vsel %vm512, %v517, %v516
      %vm519 = vcmp.lt.s32.totalorder %v307, 0
      %v520 = vsub.s32 0, %v307
      %v521 = vsel %vm519, %v520, %v307
      %v522 = vshrl.u32 %v521, 4
      %v523 = vand.u32 %v521, 15
      %v524 = vsub.s32 0, %v523
      %v525 = vsel %vm519, %v524, %v523
      %vm526 = vcmp.lt.s32.totalorder %v308, 0
      %v527 = vsub.s32 0, %v308
      %v528 = vsel %vm526, %v527, %v308
      %v529 = vshrl.u32 %v528, 4
      %v530 = vand.u32 %v528, 15
      %v531 = vsub.s32 0, %v530
      %v532 = vsel %vm526, %v531, %v530
      %vm533 = vcmp.ne.s32.totalorder %v315, 0
      %vm534 = vcmp.ne.s32.totalorder %v322, 0
      %vm535 = vcmp.ne.s32.totalorder %v329, 0
      %vm536 = vcmp.ne.s32.totalorder %v336, 0
      %vm537 = vcmp.ne.s32.totalorder %v343, 0
      %vm538 = vcmp.ne.s32.totalorder %v350, 0
      %vm539 = vcmp.ne.s32.totalorder %v357, 0
      %vm540 = vcmp.ne.s32.totalorder %v364, 0
      %vm541 = vcmp.ne.s32.totalorder %v371, 0
      %vm542 = vcmp.ne.s32.totalorder %v378, 0
      %vm543 = vcmp.ne.s32.totalorder %v385, 0
      %vm544 = vcmp.ne.s32.totalorder %v392, 0
      %vm545 = vcmp.ne.s32.totalorder %v399, 0
      %vm546 = vcmp.ne.s32.totalorder %v406, 0
      %vm547 = vcmp.ne.s32.totalorder %v413, 0
      %vm548 = vcmp.ne.s32.totalorder %v420, 0
      %vm549 = vcmp.ne.s32.totalorder %v427, 0
      %vm550 = vcmp.ne.s32.totalorder %v434, 0
      %vm551 = vcmp.ne.s32.totalorder %v441, 0
      %vm552 = vcmp.ne.s32.totalorder %v448, 0
      %vm553 = vcmp.ne.s32.totalorder %v455, 0
      %vm554 = vcmp.ne.s32.totalorder %v462, 0
      %vm555 = vcmp.ne.s32.totalorder %v469, 0
      %vm556 = vcmp.ne.s32.totalorder %v476, 0
      %vm557 = vcmp.ne.s32.totalorder %v483, 0
      %vm558 = vcmp.ne.s32.totalorder %v490, 0
      %vm559 = vcmp.ne.s32.totalorder %v497, 0
      %vm560 = vcmp.ne.s32.totalorder %v504, 0
      %vm561 = vcmp.ne.s32.totalorder %v511, 0
      %vm562 = vcmp.ne.s32.totalorder %v518, 0
      %vm563 = vcmp.ne.s32.totalorder %v525, 0
      %vm564 = vcmp.ne.s32.totalorder %v532, 0
      %vm565 = vcmp.lt.s32.totalorder %v315, 0
      %vm566 = vcmp.lt.s32.totalorder %v322, 0
      %vm567 = vcmp.lt.s32.totalorder %v329, 0
      %vm568 = vcmp.lt.s32.totalorder %v336, 0
      %vm569 = vcmp.lt.s32.totalorder %v343, 0
      %vm570 = vcmp.lt.s32.totalorder %v350, 0
      %vm571 = vcmp.lt.s32.totalorder %v357, 0
      %vm572 = vcmp.lt.s32.totalorder %v364, 0
      %vm573 = vcmp.lt.s32.totalorder %v371, 0
      %vm574 = vcmp.lt.s32.totalorder %v378, 0
      %vm575 = vcmp.lt.s32.totalorder %v385, 0
      %vm576 = vcmp.lt.s32.totalorder %v392, 0
      %vm577 = vcmp.lt.s32.totalorder %v399, 0
      %vm578 = vcmp.lt.s32.totalorder %v406, 0
      %vm579 = vcmp.lt.s32.totalorder %v413, 0
      %vm580 = vcmp.lt.s32.totalorder %v420, 0
      %vm581 = vcmp.lt.s32.totalorder %v427, 0
      %vm582 = vcmp.lt.s32.totalorder %v434, 0
      %vm583 = vcmp.lt.s32.totalorder %v441, 0
      %vm584 = vcmp.lt.s32.totalorder %v448, 0
      %vm585 = vcmp.lt.s32.totalorder %v455, 0
      %vm586 = vcmp.lt.s32.totalorder %v462, 0
      %vm587 = vcmp.lt.s32.totalorder %v469, 0
      %vm588 = vcmp.lt.s32.totalorder %v476, 0
      %vm589 = vcmp.lt.s32.totalorder %v483, 0
      %vm590 = vcmp.lt.s32.totalorder %v490, 0
      %vm591 = vcmp.lt.s32.totalorder %v497, 0
      %vm592 = vcmp.lt.s32.totalorder %v504, 0
      %vm593 = vcmp.lt.s32.totalorder %v511, 0
      %vm594 = vcmp.lt.s32.totalorder %v518, 0
      %vm595 = vcmp.lt.s32.totalorder %v525, 0
      %vm596 = vcmp.lt.s32.totalorder %v532, 0
      %vm597 = vmand %vm565, %vm533
      %vm598 = vmand %vm566, %vm534
      %vm599 = vmand %vm567, %vm535
      %vm600 = vmand %vm568, %vm536
      %vm601 = vmand %vm569, %vm537
      %vm602 = vmand %vm570, %vm538
      %vm603 = vmand %vm571, %vm539
      %vm604 = vmand %vm572, %vm540
      %vm605 = vmand %vm573, %vm541
      %vm606 = vmand %vm574, %vm542
      %vm607 = vmand %vm575, %vm543
      %vm608 = vmand %vm576, %vm544
      %vm609 = vmand %vm577, %vm545
      %vm610 = vmand %vm578, %vm546
      %vm611 = vmand %vm579, %vm547
      %vm612 = vmand %vm580, %vm548
      %vm613 = vmand %vm581, %vm549
      %vm614 = vmand %vm582, %vm550
      %vm615 = vmand %vm583, %vm551
      %vm616 = vmand %vm584, %vm552
      %vm617 = vmand %vm585, %vm553
      %vm618 = vmand %vm586, %vm554
      %vm619 = vmand %vm587, %vm555
      %vm620 = vmand %vm588, %vm556
      %vm621 = vmand %vm589, %vm557
      %vm622 = vmand %vm590, %vm558
      %vm623 = vmand %vm591, %vm559
      %vm624 = vmand %vm592, %vm560
      %vm625 = vmand %vm593, %vm561
      %vm626 = vmand %vm594, %vm562
      %vm627 = vmand %vm595, %vm563
      %vm628 = vmand %vm596, %vm564
      %v629 = vadd.s32 %v315, 16
      %v630 = vadd.s32 %v322, 16
      %v631 = vadd.s32 %v329, 16
      %v632 = vadd.s32 %v336, 16
      %v633 = vadd.s32 %v343, 16
      %v634 = vadd.s32 %v350, 16
      %v635 = vadd.s32 %v357, 16
      %v636 = vadd.s32 %v364, 16
      %v637 = vadd.s32 %v371, 16
      %v638 = vadd.s32 %v378, 16
      %v639 = vadd.s32 %v385, 16
      %v640 = vadd.s32 %v392, 16
      %v641 = vadd.s32 %v399, 16
      %v642 = vadd.s32 %v406, 16
      %v643 = vadd.s32 %v413, 16
      %v644 = vadd.s32 %v420, 16
      %v645 = vadd.s32 %v427, 16
      %v646 = vadd.s32 %v434, 16
      %v647 = vadd.s32 %v441, 16
      %v648 = vadd.s32 %v448, 16
      %v649 = vadd.s32 %v455, 16
      %v650 = vadd.s32 %v462, 16
      %v651 = vadd.s32 %v469, 16
      %v652 = vadd.s32 %v476, 16
      %v653 = vadd.s32 %v483, 16
      %v654 = vadd.s32 %v490, 16
      %v655 = vadd.s32 %v497, 16
      %v656 = vadd.s32 %v504, 16
      %v657 = vadd.s32 %v511, 16
      %v658 = vadd.s32 %v518, 16
      %v659 = vadd.s32 %v525, 16
      %v660 = vadd.s32 %v532, 16
      %v661 = vsel %vm597, %v629, %v315
      %v662 = vsel %vm598, %v630, %v322
      %v663 = vsel %vm599, %v631, %v329
      %v664 = vsel %vm600, %v632, %v336
      %v665 = vsel %vm601, %v633, %v343
      %v666 = vsel %vm602, %v634, %v350
      %v667 = vsel %vm603, %v635, %v357
      %v668 = vsel %vm604, %v636, %v364
      %v669 = vsel %vm605, %v637, %v371
      %v670 = vsel %vm606, %v638, %v378
      %v671 = vsel %vm607, %v639, %v385
      %v672 = vsel %vm608, %v640, %v392
      %v673 = vsel %vm609, %v641, %v399
      %v674 = vsel %vm610, %v642, %v406
      %v675 = vsel %vm611, %v643, %v413
      %v676 = vsel %vm612, %v644, %v420
      %v677 = vsel %vm613, %v645, %v427
      %v678 = vsel %vm614, %v646, %v434
      %v679 = vsel %vm615, %v647, %v441
      %v680 = vsel %vm616, %v648, %v448
      %v681 = vsel %vm617, %v649, %v455
      %v682 = vsel %vm618, %v650, %v462
      %v683 = vsel %vm619, %v651, %v469
      %v684 = vsel %vm620, %v652, %v476
      %v685 = vsel %vm621, %v653, %v483
      %v686 = vsel %vm622, %v654, %v490
      %v687 = vsel %vm623, %v655, %v497
      %v688 = vsel %vm624, %v656, %v504
      %v689 = vsel %vm625, %v657, %v511
      %v690 = vsel %vm626, %v658, %v518
      %v691 = vsel %vm627, %v659, %v525
      %v692 = vsel %vm628, %v660, %v532
      %vm693 = vcmp.ne.s32.totalorder %v661, 0
      %vm694 = vcmp.ne.s32.totalorder %v662, 0
      %vm695 = vcmp.ne.s32.totalorder %v663, 0
      %vm696 = vcmp.ne.s32.totalorder %v664, 0
      %vm697 = vcmp.ne.s32.totalorder %v665, 0
      %vm698 = vcmp.ne.s32.totalorder %v666, 0
      %vm699 = vcmp.ne.s32.totalorder %v667, 0
      %vm700 = vcmp.ne.s32.totalorder %v668, 0
      %vm701 = vcmp.ne.s32.totalorder %v669, 0
      %vm702 = vcmp.ne.s32.totalorder %v670, 0
      %vm703 = vcmp.ne.s32.totalorder %v671, 0
      %vm704 = vcmp.ne.s32.totalorder %v672, 0
      %vm705 = vcmp.ne.s32.totalorder %v673, 0
      %vm706 = vcmp.ne.s32.totalorder %v674, 0
      %vm707 = vcmp.ne.s32.totalorder %v675, 0
      %vm708 = vcmp.ne.s32.totalorder %v676, 0
      %vm709 = vcmp.ne.s32.totalorder %v677, 0
      %vm710 = vcmp.ne.s32.totalorder %v678, 0
      %vm711 = vcmp.ne.s32.totalorder %v679, 0
      %vm712 = vcmp.ne.s32.totalorder %v680, 0
      %vm713 = vcmp.ne.s32.totalorder %v681, 0
      %vm714 = vcmp.ne.s32.totalorder %v682, 0
      %vm715 = vcmp.ne.s32.totalorder %v683, 0
      %vm716 = vcmp.ne.s32.totalorder %v684, 0
      %vm717 = vcmp.ne.s32.totalorder %v685, 0
      %vm718 = vcmp.ne.s32.totalorder %v686, 0
      %vm719 = vcmp.ne.s32.totalorder %v687, 0
      %vm720 = vcmp.ne.s32.totalorder %v688, 0
      %vm721 = vcmp.ne.s32.totalorder %v689, 0
      %vm722 = vcmp.ne.s32.totalorder %v690, 0
      %vm723 = vcmp.ne.s32.totalorder %v691, 0
      %vm724 = vcmp.ne.s32.totalorder %v692, 0
      %v725 = vsel %vm693, 1, 0
      %v726 = vsel %vm694, 1, 0
      %v727 = vsel %vm695, 1, 0
      %v728 = vsel %vm696, 1, 0
      %v729 = vsel %vm697, 1, 0
      %v730 = vsel %vm698, 1, 0
      %v731 = vsel %vm699, 1, 0
      %v732 = vsel %vm700, 1, 0
      %v733 = vsel %vm701, 1, 0
      %v734 = vsel %vm702, 1, 0
      %v735 = vsel %vm703, 1, 0
      %v736 = vsel %vm704, 1, 0
      %v737 = vsel %vm705, 1, 0
      %v738 = vsel %vm706, 1, 0
      %v739 = vsel %vm707, 1, 0
      %v740 = vsel %vm708, 1, 0
      %v741 = vsel %vm709, 1, 0
      %v742 = vsel %vm710, 1, 0
      %v743 = vsel %vm711, 1, 0
      %v744 = vsel %vm712, 1, 0
      %v745 = vsel %vm713, 1, 0
      %v746 = vsel %vm714, 1, 0
      %v747 = vsel %vm715, 1, 0
      %v748 = vsel %vm716, 1, 0
      %v749 = vsel %vm717, 1, 0
      %v750 = vsel %vm718, 1, 0
      %v751 = vsel %vm719, 1, 0
      %v752 = vsel %vm720, 1, 0
      %v753 = vsel %vm721, 1, 0
      %v754 = vsel %vm722, 1, 0
      %v755 = vsel %vm723, 1, 0
      %v756 = vsel %vm724, 1, 0
      %v757 = vcvt.s32.f32 %v725
      %v758 = vcvt.s32.f32 %v726
      %v759 = vcvt.s32.f32 %v727
      %v760 = vcvt.s32.f32 %v728
      %v761 = vcvt.s32.f32 %v729
      %v762 = vcvt.s32.f32 %v730
      %v763 = vcvt.s32.f32 %v731
      %v764 = vcvt.s32.f32 %v732
      %v765 = vcvt.s32.f32 %v733
      %v766 = vcvt.s32.f32 %v734
      %v767 = vcvt.s32.f32 %v735
      %v768 = vcvt.s32.f32 %v736
      %v769 = vcvt.s32.f32 %v737
      %v770 = vcvt.s32.f32 %v738
      %v771 = vcvt.s32.f32 %v739
      %v772 = vcvt.s32.f32 %v740
      %v773 = vcvt.s32.f32 %v741
      %v774 = vcvt.s32.f32 %v742
      %v775 = vcvt.s32.f32 %v743
      %v776 = vcvt.s32.f32 %v744
      %v777 = vcvt.s32.f32 %v745
      %v778 = vcvt.s32.f32 %v746
      %v779 = vcvt.s32.f32 %v747
      %v780 = vcvt.s32.f32 %v748
      %v781 = vcvt.s32.f32 %v749
      %v782 = vcvt.s32.f32 %v750
      %v783 = vcvt.s32.f32 %v751
      %v784 = vcvt.s32.f32 %v752
      %v785 = vcvt.s32.f32 %v753
      %v786 = vcvt.s32.f32 %v754
      %v787 = vcvt.s32.f32 %v755
      %v788 = vcvt.s32.f32 %v756
      %vm789 = vcmp.ne.s32.totalorder %v661, 15
      %vm790 = vcmp.ne.s32.totalorder %v662, 15
      %vm791 = vcmp.ne.s32.totalorder %v663, 15
      %vm792 = vcmp.ne.s32.totalorder %v664, 15
      %vm793 = vcmp.ne.s32.totalorder %v665, 15
      %vm794 = vcmp.ne.s32.totalorder %v666, 15
      %vm795 = vcmp.ne.s32.totalorder %v667, 15
      %vm796 = vcmp.ne.s32.totalorder %v668, 15
      %vm797 = vcmp.ne.s32.totalorder %v669, 15
      %vm798 = vcmp.ne.s32.totalorder %v670, 15
      %vm799 = vcmp.ne.s32.totalorder %v671, 15
      %vm800 = vcmp.ne.s32.totalorder %v672, 15
      %vm801 = vcmp.ne.s32.totalorder %v673, 15
      %vm802 = vcmp.ne.s32.totalorder %v674, 15
      %vm803 = vcmp.ne.s32.totalorder %v675, 15
      %vm804 = vcmp.ne.s32.totalorder %v676, 15
      %vm805 = vcmp.ne.s32.totalorder %v677, 15
      %vm806 = vcmp.ne.s32.totalorder %v678, 15
      %vm807 = vcmp.ne.s32.totalorder %v679, 15
      %vm808 = vcmp.ne.s32.totalorder %v680, 15
      %vm809 = vcmp.ne.s32.totalorder %v681, 15
      %vm810 = vcmp.ne.s32.totalorder %v682, 15
      %vm811 = vcmp.ne.s32.totalorder %v683, 15
      %vm812 = vcmp.ne.s32.totalorder %v684, 15
      %vm813 = vcmp.ne.s32.totalorder %v685, 15
      %vm814 = vcmp.ne.s32.totalorder %v686, 15
      %vm815 = vcmp.ne.s32.totalorder %v687, 15
      %vm816 = vcmp.ne.s32.totalorder %v688, 15
      %vm817 = vcmp.ne.s32.totalorder %v689, 15
      %vm818 = vcmp.ne.s32.totalorder %v690, 15
      %vm819 = vcmp.ne.s32.totalorder %v691, 15
      %vm820 = vcmp.ne.s32.totalorder %v692, 15
      %v821 = vsel %vm789, 1, 0
      %v822 = vsel %vm790, 1, 0
      %v823 = vsel %vm791, 1, 0
      %v824 = vsel %vm792, 1, 0
      %v825 = vsel %vm793, 1, 0
      %v826 = vsel %vm794, 1, 0
      %v827 = vsel %vm795, 1, 0
      %v828 = vsel %vm796, 1, 0
      %v829 = vsel %vm797, 1, 0
      %v830 = vsel %vm798, 1, 0
      %v831 = vsel %vm799, 1, 0
      %v832 = vsel %vm800, 1, 0
      %v833 = vsel %vm801, 1, 0
      %v834 = vsel %vm802, 1, 0
      %v835 = vsel %vm803, 1, 0
      %v836 = vsel %vm804, 1, 0
      %v837 = vsel %vm805, 1, 0
      %v838 = vsel %vm806, 1, 0
      %v839 = vsel %vm807, 1, 0
      %v840 = vsel %vm808, 1, 0
      %v841 = vsel %vm809, 1, 0
      %v842 = vsel %vm810, 1, 0
      %v843 = vsel %vm811, 1, 0
      %v844 = vsel %vm812, 1, 0
      %v845 = vsel %vm813, 1, 0
      %v846 = vsel %vm814, 1, 0
      %v847 = vsel %vm815, 1, 0
      %v848 = vsel %vm816, 1, 0
      %v849 = vsel %vm817, 1, 0
      %v850 = vsel %vm818, 1, 0
      %v851 = vsel %vm819, 1, 0
      %v852 = vsel %vm820, 1, 0
      %v853 = vcvt.s32.f32 %v821
      %v854 = vcvt.s32.f32 %v822
      %v855 = vcvt.s32.f32 %v823
      %v856 = vcvt.s32.f32 %v824
      %v857 = vcvt.s32.f32 %v825
      %v858 = vcvt.s32.f32 %v826
      %v859 = vcvt.s32.f32 %v827
      %v860 = vcvt.s32.f32 %v828
      %v861 = vcvt.s32.f32 %v829
      %v862 = vcvt.s32.f32 %v830
      %v863 = vcvt.s32.f32 %v831
      %v864 = vcvt.s32.f32 %v832
      %v865 = vcvt.s32.f32 %v833
      %v866 = vcvt.s32.f32 %v834
      %v867 = vcvt.s32.f32 %v835
      %v868 = vcvt.s32.f32 %v836
      %v869 = vcvt.s32.f32 %v837
      %v870 = vcvt.s32.f32 %v838
      %v871 = vcvt.s32.f32 %v839
      %v872 = vcvt.s32.f32 %v840
      %v873 = vcvt.s32.f32 %v841
      %v874 = vcvt.s32.f32 %v842
      %v875 = vcvt.s32.f32 %v843
      %v876 = vcvt.s32.f32 %v844
      %v877 = vcvt.s32.f32 %v845
      %v878 = vcvt.s32.f32 %v846
      %v879 = vcvt.s32.f32 %v847
      %v880 = vcvt.s32.f32 %v848
      %v881 = vcvt.s32.f32 %v849
      %v882 = vcvt.s32.f32 %v850
      %v883 = vcvt.s32.f32 %v851
      %v884 = vcvt.s32.f32 %v852
      %v885 = vld [vmem:[#allocation2 + $0x4] sm:$0x8]
      %v886 = vld [vmem:[#allocation2 + $0x8] sm:$0xf]
      %v887 = vld [vmem:[#allocation2 + $0xc] sm:$0xf]
      %v888 = vld [vmem:[#allocation2 + $0x10] sm:$0xf]
      %v889 = vld [vmem:[#allocation2 + $0x14] sm:$0xf]
      %v890 = vld [vmem:[#allocation2 + $0x18] sm:$0xf]
      %v891 = vld [vmem:[#allocation2 + $0x1c] sm:$0xf]
      %v892 = vld [vmem:[#allocation2 + $0x20] sm:$0xf]
      %v893 = vld [vmem:[#allocation2 + $0x24] sm:$0xf]
      %v894 = vld [vmem:[#allocation2 + $0x28] sm:$0xf]
      %v895 = vld [vmem:[#allocation2 + $0x2c] sm:$0xf]
      %v896 = vld [vmem:[#allocation2 + $0x30] sm:$0xf]
      %v897 = vld [vmem:[#allocation2 + $0x34] sm:$0xf]
      %v898 = vld [vmem:[#allocation2 + $0x38] sm:$0xf]
      %v899 = vld [vmem:[#allocation2 + $0x3c] sm:$0xf]
      %v900 = vld [vmem:[#allocation2 + $0x40] sm:$0xf]
      %v901 = vld [vmem:[#allocation2 + $0x44] sm:$0xf]
      %v902 = vld [vmem:[#allocation2 + $0x48] sm:$0xf]
      %v903 = vld [vmem:[#allocation2 + $0x4c] sm:$0xf]
      %v904 = vld [vmem:[#allocation2 + $0x50] sm:$0xf]
      %v905 = vld [vmem:[#allocation2 + $0x54] sm:$0xf]
      %v906 = vld [vmem:[#allocation2 + $0x58] sm:$0xf]
      %v907 = vld [vmem:[#allocation2 + $0x5c] sm:$0xf]
      %v908 = vld [vmem:[#allocation2 + $0x60] sm:$0xf]
      %v909 = vld [vmem:[#allocation2 + $0x64] sm:$0xf]
      %v910 = vld [vmem:[#allocation2 + $0x68] sm:$0xf]
      %v911 = vld [vmem:[#allocation2 + $0x6c] sm:$0xf]
      %v912 = vld [vmem:[#allocation2 + $0x70] sm:$0xf]
      %v913 = vld [vmem:[#allocation2 + $0x74] sm:$0xf]
      %v914 = vld [vmem:[#allocation2 + $0x78] sm:$0xf]
      %v915 = vld [vmem:[#allocation2 + $0x7c] sm:$0xf]
      %v916 = vld [vmem:[#allocation2 + $0x80] sm:$0xf]
      %v917 = vld [vmem:[#allocation2 + $0x84] sm:$0xf]
      %v918 = vld [vmem:[%s1] sm:$0x3]
      %v919 = vld [vmem:[#allocation2 + $0xc] sm:$0x8]
      %v920 = vld [vmem:[#allocation2 + $0x88] sm:$0xf]
      %v921 = vld [vmem:[#allocation2 + $0x8c] sm:$0xf]
      %s922 = scalar_lea.vmem %s1, 6
      %v923 = vld [vmem:[%s922] sm:$0x3]
      %v957 = vunpack.c.l.b16 %v919
      %v958 = vunpack.c.l.b16 %v888
      %v959 = vunpack.c.l.b16 %v889
      %v960 = vunpack.c.l.b16 %v890
      %v961 = vunpack.c.l.b16 %v891
      %v962 = vunpack.c.l.b16 %v892
      %v963 = vunpack.c.l.b16 %v893
      %v964 = vunpack.c.l.b16 %v894
      %v965 = vunpack.c.l.b16 %v895
      %v966 = vunpack.c.l.b16 %v896
      %v967 = vunpack.c.l.b16 %v897
      %v968 = vunpack.c.l.b16 %v898
      %v969 = vunpack.c.l.b16 %v899
      %v970 = vunpack.c.l.b16 %v900
      %v971 = vunpack.c.l.b16 %v901
      %v972 = vunpack.c.l.b16 %v902
      %v973 = vunpack.c.l.b16 %v903
      %v974 = vunpack.c.l.b16 %v904
      %v975 = vunpack.c.l.b16 %v905
      %v976 = vunpack.c.l.b16 %v906
      %v977 = vunpack.c.l.b16 %v907
      %v978 = vunpack.c.l.b16 %v908
      %v979 = vunpack.c.l.b16 %v909
      %v980 = vunpack.c.l.b16 %v910
      %v981 = vunpack.c.l.b16 %v911
      %v982 = vunpack.c.l.b16 %v912
      %v983 = vunpack.c.l.b16 %v913
      %v984 = vunpack.c.l.b16 %v914
      %v985 = vunpack.c.l.b16 %v915
      %v986 = vunpack.c.l.b16 %v916
      %v987 = vunpack.c.l.b16 %v917
      %v988 = vunpack.c.l.b16 %v920
      %v989 = vunpack.c.l.b16 %v921
      %v990 = vpack.c.b16 %v958, %v957
      %v991 = vpack.c.b16 %v960, %v959
      %v992 = vpack.c.b16 %v962, %v961
      %v993 = vpack.c.b16 %v964, %v963
      %v994 = vpack.c.b16 %v966, %v965
      %v995 = vpack.c.b16 %v968, %v967
      %v996 = vpack.c.b16 %v970, %v969
      %v997 = vpack.c.b16 %v972, %v971
      %v998 = vpack.c.b16 %v974, %v973
      %v999 = vpack.c.b16 %v976, %v975
      %v1000 = vpack.c.b16 %v978, %v977
      %v1001 = vpack.c.b16 %v980, %v979
      %v1002 = vpack.c.b16 %v982, %v981
      %v1003 = vpack.c.b16 %v984, %v983
      %v1004 = vpack.c.b16 %v986, %v985
      %v1005 = vpack.c.b16 %v988, %v987
      %v1006 = vpack.c.b16 %v989, %v989
      %vm1007 = vsmask.f32 4352
      %v1009 = vshrl.u32 %v990, 16
      %v1011 = vrot.slane %v1009, 3
      %v1012 = vshll.u32 %v990, 16
      %v1014 = vrot.slane %v1012, 4
      %v1015 = vor.u32 %v1011, %v1014
      %v1017 = vshrl.u32 %v991, 16
      %v1019 = vrot.slane %v1017, 3
      %v1020 = vshll.u32 %v991, 16
      %v1022 = vrot.slane %v1020, 4
      %v1023 = vor.u32 %v1019, %v1022
      %v1024 = vsel %vm1007, %v1015, %v1023
      %v1026 = vshrl.u32 %v992, 16
      %v1028 = vrot.slane %v1026, 3
      %v1029 = vshll.u32 %v992, 16
      %v1031 = vrot.slane %v1029, 4
      %v1032 = vor.u32 %v1028, %v1031
      %v1033 = vsel %vm1007, %v1023, %v1032
      %v1035 = vshrl.u32 %v993, 16
      %v1037 = vrot.slane %v1035, 3
      %v1038 = vshll.u32 %v993, 16
      %v1040 = vrot.slane %v1038, 4
      %v1041 = vor.u32 %v1037, %v1040
      %v1042 = vsel %vm1007, %v1032, %v1041
      %v1044 = vshrl.u32 %v994, 16
      %v1046 = vrot.slane %v1044, 3
      %v1047 = vshll.u32 %v994, 16
      %v1049 = vrot.slane %v1047, 4
      %v1050 = vor.u32 %v1046, %v1049
      %v1051 = vsel %vm1007, %v1041, %v1050
      %v1053 = vshrl.u32 %v995, 16
      %v1055 = vrot.slane %v1053, 3
      %v1056 = vshll.u32 %v995, 16
      %v1058 = vrot.slane %v1056, 4
      %v1059 = vor.u32 %v1055, %v1058
      %v1060 = vsel %vm1007, %v1050, %v1059
      %v1062 = vshrl.u32 %v996, 16
      %v1064 = vrot.slane %v1062, 3
      %v1065 = vshll.u32 %v996, 16
      %v1067 = vrot.slane %v1065, 4
      %v1068 = vor.u32 %v1064, %v1067
      %v1069 = vsel %vm1007, %v1059, %v1068
      %v1071 = vshrl.u32 %v997, 16
      %v1073 = vrot.slane %v1071, 3
      %v1074 = vshll.u32 %v997, 16
      %v1076 = vrot.slane %v1074, 4
      %v1077 = vor.u32 %v1073, %v1076
      %v1078 = vsel %vm1007, %v1068, %v1077
      %v1080 = vshrl.u32 %v998, 16
      %v1082 = vrot.slane %v1080, 3
      %v1083 = vshll.u32 %v998, 16
      %v1085 = vrot.slane %v1083, 4
      %v1086 = vor.u32 %v1082, %v1085
      %v1087 = vsel %vm1007, %v1077, %v1086
      %v1089 = vshrl.u32 %v999, 16
      %v1091 = vrot.slane %v1089, 3
      %v1092 = vshll.u32 %v999, 16
      %v1094 = vrot.slane %v1092, 4
      %v1095 = vor.u32 %v1091, %v1094
      %v1096 = vsel %vm1007, %v1086, %v1095
      %v1098 = vshrl.u32 %v1000, 16
      %v1100 = vrot.slane %v1098, 3
      %v1101 = vshll.u32 %v1000, 16
      %v1103 = vrot.slane %v1101, 4
      %v1104 = vor.u32 %v1100, %v1103
      %v1105 = vsel %vm1007, %v1095, %v1104
      %v1107 = vshrl.u32 %v1001, 16
      %v1109 = vrot.slane %v1107, 3
      %v1110 = vshll.u32 %v1001, 16
      %v1112 = vrot.slane %v1110, 4
      %v1113 = vor.u32 %v1109, %v1112
      %v1114 = vsel %vm1007, %v1104, %v1113
      %v1116 = vshrl.u32 %v1002, 16
      %v1118 = vrot.slane %v1116, 3
      %v1119 = vshll.u32 %v1002, 16
      %v1121 = vrot.slane %v1119, 4
      %v1122 = vor.u32 %v1118, %v1121
      %v1123 = vsel %vm1007, %v1113, %v1122
      %v1125 = vshrl.u32 %v1003, 16
      %v1127 = vrot.slane %v1125, 3
      %v1128 = vshll.u32 %v1003, 16
      %v1130 = vrot.slane %v1128, 4
      %v1131 = vor.u32 %v1127, %v1130
      %v1132 = vsel %vm1007, %v1122, %v1131
      %v1134 = vshrl.u32 %v1004, 16
      %v1136 = vrot.slane %v1134, 3
      %v1137 = vshll.u32 %v1004, 16
      %v1139 = vrot.slane %v1137, 4
      %v1140 = vor.u32 %v1136, %v1139
      %v1141 = vsel %vm1007, %v1131, %v1140
      %v1143 = vshrl.u32 %v1005, 16
      %v1145 = vrot.slane %v1143, 3
      %v1146 = vshll.u32 %v1005, 16
      %v1148 = vrot.slane %v1146, 4
      %v1149 = vor.u32 %v1145, %v1148
      %v1150 = vsel %vm1007, %v1140, %v1149
      %v1152 = vshrl.u32 %v1006, 16
      %v1154 = vrot.slane %v1152, 3
      %v1155 = vshll.u32 %v1006, 16
      %v1157 = vrot.slane %v1155, 4
      %v1158 = vor.u32 %v1154, %v1157
      %v1159 = vsel %vm1007, %v1149, %v1158
      %vm1160 = vcmask 31744
      %v1162 = vsel %vm1160, %v1024, 0
      %v1165 = vsel %vm1160, %v1033, 0
      %v1168 = vsel %vm1160, %v1042, 0
      %v1171 = vsel %vm1160, %v1051, 0
      %v1174 = vsel %vm1160, %v1060, 0
      %v1177 = vsel %vm1160, %v1069, 0
      %v1180 = vsel %vm1160, %v1078, 0
      %v1183 = vsel %vm1160, %v1087, 0
      %v1186 = vsel %vm1160, %v1096, 0
      %v1189 = vsel %vm1160, %v1105, 0
      %v1192 = vsel %vm1160, %v1114, 0
      %v1195 = vsel %vm1160, %v1123, 0
      %v1198 = vsel %vm1160, %v1132, 0
      %v1201 = vsel %vm1160, %v1141, 0
      %v1204 = vsel %vm1160, %v1150, 0
      %v1207 = vsel %vm1160, %v1159, 0
      %vm1209 = vcmask 1041408
      %v1211 = vsel %vm1209, %v923, 0
      %1213 = vmatpush.bf16.msra.mxu0 0
      %1214 = vmatpush.bf16.msra.mxu0 0
      %1215 = vmatpush.bf16.msra.mxu0 0
      %1216 = vmatpush.bf16.msra.mxu0 0
      %1217 = vmatpush.bf16.msra.mxu0 0
      %1218 = vmatpush.bf16.msra.mxu0 0
      %1219 = vmatpush.bf16.msra.mxu0 0
      %1220 = vmatpush.bf16.msra.mxu0 %v1211
      %1221 = vmatmul.bf16.gmra.mxu0 %v1162
      %v1222 = vpop.f32.mrf.mxu0
      %v1223 = vadd.f32 0.0, %v1222
      %v1224 = vpop.f32.mrf.mxu0
      %v1225 = vadd.f32 0.0, %v1224
      %1226 = vmatmul.bf16.gmra.mxu0 %v1165
      %v1227 = vpop.f32.mrf.mxu0
      %v1228 = vadd.f32 0.0, %v1227
      %v1229 = vpop.f32.mrf.mxu0
      %v1230 = vadd.f32 0.0, %v1229
      %1231 = vmatmul.bf16.gmra.mxu0 %v1168
      %v1232 = vpop.f32.mrf.mxu0
      %v1233 = vadd.f32 0.0, %v1232
      %v1234 = vpop.f32.mrf.mxu0
      %v1235 = vadd.f32 0.0, %v1234
      %1236 = vmatmul.bf16.gmra.mxu0 %v1171
      %v1237 = vpop.f32.mrf.mxu0
      %v1238 = vadd.f32 0.0, %v1237
      %v1239 = vpop.f32.mrf.mxu0
      %v1240 = vadd.f32 0.0, %v1239
      %1241 = vmatmul.bf16.gmra.mxu0 %v1174
      %v1242 = vpop.f32.mrf.mxu0
      %v1243 = vadd.f32 0.0, %v1242
      %v1244 = vpop.f32.mrf.mxu0
      %v1245 = vadd.f32 0.0, %v1244
      %1246 = vmatmul.bf16.gmra.mxu0 %v1177
      %v1247 = vpop.f32.mrf.mxu0
      %v1248 = vadd.f32 0.0, %v1247
      %v1249 = vpop.f32.mrf.mxu0
      %v1250 = vadd.f32 0.0, %v1249
      %1251 = vmatmul.bf16.gmra.mxu0 %v1180
      %v1252 = vpop.f32.mrf.mxu0
      %v1253 = vadd.f32 0.0, %v1252
      %v1254 = vpop.f32.mrf.mxu0
      %v1255 = vadd.f32 0.0, %v1254
      %1256 = vmatmul.bf16.gmra.mxu0 %v1183
      %v1257 = vpop.f32.mrf.mxu0
      %v1258 = vadd.f32 0.0, %v1257
      %v1259 = vpop.f32.mrf.mxu0
      %v1260 = vadd.f32 0.0, %v1259
      %1261 = vmatmul.bf16.gmra.mxu0 %v1186
      %v1262 = vpop.f32.mrf.mxu0
      %v1263 = vadd.f32 0.0, %v1262
      %v1264 = vpop.f32.mrf.mxu0
      %v1265 = vadd.f32 0.0, %v1264
      %1266 = vmatmul.bf16.gmra.mxu0 %v1189
      %v1267 = vpop.f32.mrf.mxu0
      %v1268 = vadd.f32 0.0, %v1267
      %v1269 = vpop.f32.mrf.mxu0
      %v1270 = vadd.f32 0.0, %v1269
      %1271 = vmatmul.bf16.gmra.mxu0 %v1192
      %v1272 = vpop.f32.mrf.mxu0
      %v1273 = vadd.f32 0.0, %v1272
      %v1274 = vpop.f32.mrf.mxu0
      %v1275 = vadd.f32 0.0, %v1274
      %1276 = vmatmul.bf16.gmra.mxu0 %v1195
      %v1277 = vpop.f32.mrf.mxu0
      %v1278 = vadd.f32 0.0, %v1277
      %v1279 = vpop.f32.mrf.mxu0
      %v1280 = vadd.f32 0.0, %v1279
      %1281 = vmatmul.bf16.gmra.mxu0 %v1198
      %v1282 = vpop.f32.mrf.mxu0
      %v1283 = vadd.f32 0.0, %v1282
      %v1284 = vpop.f32.mrf.mxu0
      %v1285 = vadd.f32 0.0, %v1284
      %1286 = vmatmul.bf16.gmra.mxu0 %v1201
      %v1287 = vpop.f32.mrf.mxu0
      %v1288 = vadd.f32 0.0, %v1287
      %v1289 = vpop.f32.mrf.mxu0
      %v1290 = vadd.f32 0.0, %v1289
      %1291 = vmatmul.bf16.gmra.mxu0 %v1204
      %v1292 = vpop.f32.mrf.mxu0
      %v1293 = vadd.f32 0.0, %v1292
      %v1294 = vpop.f32.mrf.mxu0
      %v1295 = vadd.f32 0.0, %v1294
      %1296 = vmatmul.bf16.gmra.mxu0 %v1207
      %v1297 = vpop.f32.mrf.mxu0
      %v1298 = vadd.f32 0.0, %v1297
      %v1299 = vpop.f32.mrf.mxu0
      %v1300 = vadd.f32 0.0, %v1299
      %1301 = vdwg.mxu0
      %v1305 = vunpack.c.l.b16 %v885
      %v1306 = vunpack.c.l.b16 %v886
      %v1307 = vunpack.c.l.b16 %v887
      %v1308 = vpack.c.b16 %v1306, %v1305
      %v1309 = vpack.c.b16 %v958, %v1307
      %v1310 = vpack.c.b16 %v987, %v987
      %v1312 = vshrl.u32 %v1308, 16
      %v1314 = vrot.slane %v1312, 3
      %v1315 = vshll.u32 %v1308, 16
      %v1317 = vrot.slane %v1315, 4
      %v1318 = vor.u32 %v1314, %v1317
      %v1320 = vshrl.u32 %v1309, 16
      %v1322 = vrot.slane %v1320, 3
      %v1323 = vshll.u32 %v1309, 16
      %v1325 = vrot.slane %v1323, 4
      %v1326 = vor.u32 %v1322, %v1325
      %v1327 = vsel %vm1007, %v1318, %v1326
      %v1328 = vsel %vm1007, %v1326, %v1023
      %v1330 = vshrl.u32 %v1310, 16
      %v1332 = vrot.slane %v1330, 3
      %v1333 = vshll.u32 %v1310, 16
      %v1335 = vrot.slane %v1333, 4
      %v1336 = vor.u32 %v1332, %v1335
      %v1337 = vsel %vm1007, %v1140, %v1336
      %v1339 = vsel %vm1160, %v1327, 0
      %v1342 = vsel %vm1160, %v1328, 0
      %v1345 = vsel %vm1160, %v1337, 0
      %v1348 = vsel %vm1209, %v918, 0
      %1350 = vmatpush.bf16.msra.mxu0 0
      %1351 = vmatpush.bf16.msra.mxu0 0
      %1352 = vmatpush.bf16.msra.mxu0 0
      %1353 = vmatpush.bf16.msra.mxu0 0
      %1354 = vmatpush.bf16.msra.mxu0 0
      %1355 = vmatpush.bf16.msra.mxu0 0
      %1356 = vmatpush.bf16.msra.mxu0 0
      %1357 = vmatpush.bf16.msra.mxu0 %v1348
      %1358 = vmatmul.bf16.gmra.mxu0 %v1339
      %v1359 = vpop.f32.mrf.mxu0
      %v1360 = vadd.f32 %v1223, %v1359
      %v1361 = vpop.f32.mrf.mxu0
      %v1362 = vadd.f32 %v1225, %v1361
      %1363 = vmatmul.bf16.gmra.mxu0 %v1342
      %v1364 = vpop.f32.mrf.mxu0
      %v1365 = vadd.f32 %v1228, %v1364
      %v1366 = vpop.f32.mrf.mxu0
      %v1367 = vadd.f32 %v1230, %v1366
      %1368 = vmatmul.bf16.gmra.mxu0 %v1165
      %v1369 = vpop.f32.mrf.mxu0
      %v1370 = vadd.f32 %v1233, %v1369
      %v1371 = vpop.f32.mrf.mxu0
      %v1372 = vadd.f32 %v1235, %v1371
      %1373 = vmatmul.bf16.gmra.mxu0 %v1168
      %v1374 = vpop.f32.mrf.mxu0
      %v1375 = vadd.f32 %v1238, %v1374
      %v1376 = vpop.f32.mrf.mxu0
      %v1377 = vadd.f32 %v1240, %v1376
      %1378 = vmatmul.bf16.gmra.mxu0 %v1171
      %v1379 = vpop.f32.mrf.mxu0
      %v1380 = vadd.f32 %v1243, %v1379
      %v1381 = vpop.f32.mrf.mxu0
      %v1382 = vadd.f32 %v1245, %v1381
      %1383 = vmatmul.bf16.gmra.mxu0 %v1174
      %v1384 = vpop.f32.mrf.mxu0
      %v1385 = vadd.f32 %v1248, %v1384
      %v1386 = vpop.f32.mrf.mxu0
      %v1387 = vadd.f32 %v1250, %v1386
      %1388 = vmatmul.bf16.gmra.mxu0 %v1177
      %v1389 = vpop.f32.mrf.mxu0
      %v1390 = vadd.f32 %v1253, %v1389
      %v1391 = vpop.f32.mrf.mxu0
      %v1392 = vadd.f32 %v1255, %v1391
      %1393 = vmatmul.bf16.gmra.mxu0 %v1180
      %v1394 = vpop.f32.mrf.mxu0
      %v1395 = vadd.f32 %v1258, %v1394
      %v1396 = vpop.f32.mrf.mxu0
      %v1397 = vadd.f32 %v1260, %v1396
      %1398 = vmatmul.bf16.gmra.mxu0 %v1183
      %v1399 = vpop.f32.mrf.mxu0
      %v1400 = vadd.f32 %v1263, %v1399
      %v1401 = vpop.f32.mrf.mxu0
      %v1402 = vadd.f32 %v1265, %v1401
      %1403 = vmatmul.bf16.gmra.mxu0 %v1186
      %v1404 = vpop.f32.mrf.mxu0
      %v1405 = vadd.f32 %v1268, %v1404
      %v1406 = vpop.f32.mrf.mxu0
      %v1407 = vadd.f32 %v1270, %v1406
      %1408 = vmatmul.bf16.gmra.mxu0 %v1189
      %v1409 = vpop.f32.mrf.mxu0
      %v1410 = vadd.f32 %v1273, %v1409
      %v1411 = vpop.f32.mrf.mxu0
      %v1412 = vadd.f32 %v1275, %v1411
      %1413 = vmatmul.bf16.gmra.mxu0 %v1192
      %v1414 = vpop.f32.mrf.mxu0
      %v1415 = vadd.f32 %v1278, %v1414
      %v1416 = vpop.f32.mrf.mxu0
      %v1417 = vadd.f32 %v1280, %v1416
      %1418 = vmatmul.bf16.gmra.mxu0 %v1195
      %v1419 = vpop.f32.mrf.mxu0
      %v1420 = vadd.f32 %v1283, %v1419
      %v1421 = vpop.f32.mrf.mxu0
      %v1422 = vadd.f32 %v1285, %v1421
      %1423 = vmatmul.bf16.gmra.mxu0 %v1198
      %v1424 = vpop.f32.mrf.mxu0
      %v1425 = vadd.f32 %v1288, %v1424
      %v1426 = vpop.f32.mrf.mxu0
      %v1427 = vadd.f32 %v1290, %v1426
      %1428 = vmatmul.bf16.gmra.mxu0 %v1201
      %v1429 = vpop.f32.mrf.mxu0
      %v1430 = vadd.f32 %v1293, %v1429
      %v1431 = vpop.f32.mrf.mxu0
      %v1432 = vadd.f32 %v1295, %v1431
      %1433 = vmatmul.bf16.gmra.mxu0 %v1345
      %v1434 = vpop.f32.mrf.mxu0
      %v1435 = vadd.f32 %v1298, %v1434
      %v1436 = vpop.f32.mrf.mxu0
      %v1437 = vadd.f32 %v1300, %v1436
      %1438 = vdwg.mxu0
      %v1439 = vld [vmem:[#allocation2 + $0x14] sm:$0x8]
      %v1440 = vld [vmem:[#allocation2 + $0x18] sm:$0xf]
      %v1441 = vld [vmem:[#allocation2 + $0x1c] sm:$0xf]
      %v1442 = vld [vmem:[#allocation2 + $0x20] sm:$0xf]
      %v1443 = vld [vmem:[#allocation2 + $0x24] sm:$0xf]
      %v1444 = vld [vmem:[#allocation2 + $0x28] sm:$0xf]
      %v1445 = vld [vmem:[#allocation2 + $0x2c] sm:$0xf]
      %v1446 = vld [vmem:[#allocation2 + $0x30] sm:$0xf]
      %v1447 = vld [vmem:[#allocation2 + $0x34] sm:$0xf]
      %v1448 = vld [vmem:[#allocation2 + $0x38] sm:$0xf]
      %v1449 = vld [vmem:[#allocation2 + $0x3c] sm:$0xf]
      %v1450 = vld [vmem:[#allocation2 + $0x40] sm:$0xf]
      %v1451 = vld [vmem:[#allocation2 + $0x44] sm:$0xf]
      %v1452 = vld [vmem:[#allocation2 + $0x48] sm:$0xf]
      %v1453 = vld [vmem:[#allocation2 + $0x4c] sm:$0xf]
      %v1454 = vld [vmem:[#allocation2 + $0x50] sm:$0xf]
      %v1455 = vld [vmem:[#allocation2 + $0x54] sm:$0xf]
      %v1456 = vld [vmem:[#allocation2 + $0x58] sm:$0xf]
      %v1457 = vld [vmem:[#allocation2 + $0x5c] sm:$0xf]
      %v1458 = vld [vmem:[#allocation2 + $0x60] sm:$0xf]
      %v1459 = vld [vmem:[#allocation2 + $0x64] sm:$0xf]
      %v1460 = vld [vmem:[#allocation2 + $0x68] sm:$0xf]
      %v1461 = vld [vmem:[#allocation2 + $0x6c] sm:$0xf]
      %v1462 = vld [vmem:[#allocation2 + $0x70] sm:$0xf]
      %v1463 = vld [vmem:[#allocation2 + $0x74] sm:$0xf]
      %v1464 = vld [vmem:[#allocation2 + $0x78] sm:$0xf]
      %v1465 = vld [vmem:[#allocation2 + $0x7c] sm:$0xf]
      %v1466 = vld [vmem:[#allocation2 + $0x80] sm:$0xf]
      %v1467 = vld [vmem:[#allocation2 + $0x84] sm:$0xf]
      %v1468 = vld [vmem:[#allocation2 + $0x88] sm:$0xf]
      %v1469 = vld [vmem:[#allocation2 + $0x8c] sm:$0xf]
      %v1470 = vld [vmem:[#allocation2 + $0x90] sm:$0xf]
      %v1471 = vld [vmem:[#allocation2 + $0x94] sm:$0xf]
      %s1472 = scalar_lea.vmem %s1, 12
      %v1473 = vld [vmem:[%s1472] sm:$0x3]
      %v1507 = vunpack.c.l.b16 %v1439
      %v1508 = vunpack.c.l.b16 %v1440
      %v1509 = vunpack.c.l.b16 %v1441
      %v1510 = vunpack.c.l.b16 %v1442
      %v1511 = vunpack.c.l.b16 %v1443
      %v1512 = vunpack.c.l.b16 %v1444
      %v1513 = vunpack.c.l.b16 %v1445
      %v1514 = vunpack.c.l.b16 %v1446
      %v1515 = vunpack.c.l.b16 %v1447
      %v1516 = vunpack.c.l.b16 %v1448
      %v1517 = vunpack.c.l.b16 %v1449
      %v1518 = vunpack.c.l.b16 %v1450
      %v1519 = vunpack.c.l.b16 %v1451
      %v1520 = vunpack.c.l.b16 %v1452
      %v1521 = vunpack.c.l.b16 %v1453
      %v1522 = vunpack.c.l.b16 %v1454
      %v1523 = vunpack.c.l.b16 %v1455
      %v1524 = vunpack.c.l.b16 %v1456
      %v1525 = vunpack.c.l.b16 %v1457
      %v1526 = vunpack.c.l.b16 %v1458
      %v1527 = vunpack.c.l.b16 %v1459
      %v1528 = vunpack.c.l.b16 %v1460
      %v1529 = vunpack.c.l.b16 %v1461
      %v1530 = vunpack.c.l.b16 %v1462
      %v1531 = vunpack.c.l.b16 %v1463
      %v1532 = vunpack.c.l.b16 %v1464
      %v1533 = vunpack.c.l.b16 %v1465
      %v1534 = vunpack.c.l.b16 %v1466
      %v1535 = vunpack.c.l.b16 %v1467
      %v1536 = vunpack.c.l.b16 %v1468
      %v1537 = vunpack.c.l.b16 %v1469
      %v1538 = vunpack.c.l.b16 %v1470
      %v1539 = vunpack.c.l.b16 %v1471
      %v1540 = vpack.c.b16 %v1508, %v1507
      %v1541 = vpack.c.b16 %v1510, %v1509
      %v1542 = vpack.c.b16 %v1512, %v1511
      %v1543 = vpack.c.b16 %v1514, %v1513
      %v1544 = vpack.c.b16 %v1516, %v1515
      %v1545 = vpack.c.b16 %v1518, %v1517
      %v1546 = vpack.c.b16 %v1520, %v1519
      %v1547 = vpack.c.b16 %v1522, %v1521
      %v1548 = vpack.c.b16 %v1524, %v1523
      %v1549 = vpack.c.b16 %v1526, %v1525
      %v1550 = vpack.c.b16 %v1528, %v1527
      %v1551 = vpack.c.b16 %v1530, %v1529
      %v1552 = vpack.c.b16 %v1532, %v1531
      %v1553 = vpack.c.b16 %v1534, %v1533
      %v1554 = vpack.c.b16 %v1536, %v1535
      %v1555 = vpack.c.b16 %v1538, %v1537
      %v1556 = vpack.c.b16 %v1539, %v1539
      %v1558 = vshrl.u32 %v1540, 16
      %v1560 = vrot.slane %v1558, 3
      %v1561 = vshll.u32 %v1540, 16
      %v1563 = vrot.slane %v1561, 4
      %v1564 = vor.u32 %v1560, %v1563
      %v1566 = vshrl.u32 %v1541, 16
      %v1568 = vrot.slane %v1566, 3
      %v1569 = vshll.u32 %v1541, 16
      %v1571 = vrot.slane %v1569, 4
      %v1572 = vor.u32 %v1568, %v1571
      %v1573 = vsel %vm1007, %v1564, %v1572
      %v1575 = vshrl.u32 %v1542, 16
      %v1577 = vrot.slane %v1575, 3
      %v1578 = vshll.u32 %v1542, 16
      %v1580 = vrot.slane %v1578, 4
      %v1581 = vor.u32 %v1577, %v1580
      %v1582 = vsel %vm1007, %v1572, %v1581
      %v1584 = vshrl.u32 %v1543, 16
      %v1586 = vrot.slane %v1584, 3
      %v1587 = vshll.u32 %v1543, 16
      %v1589 = vrot.slane %v1587, 4
      %v1590 = vor.u32 %v1586, %v1589
      %v1591 = vsel %vm1007, %v1581, %v1590
      %v1593 = vshrl.u32 %v1544, 16
      %v1595 = vrot.slane %v1593, 3
      %v1596 = vshll.u32 %v1544, 16
      %v1598 = vrot.slane %v1596, 4
      %v1599 = vor.u32 %v1595, %v1598
      %v1600 = vsel %vm1007, %v1590, %v1599
      %v1602 = vshrl.u32 %v1545, 16
      %v1604 = vrot.slane %v1602, 3
      %v1605 = vshll.u32 %v1545, 16
      %v1607 = vrot.slane %v1605, 4
      %v1608 = vor.u32 %v1604, %v1607
      %v1609 = vsel %vm1007, %v1599, %v1608
      %v1611 = vshrl.u32 %v1546, 16
      %v1613 = vrot.slane %v1611, 3
      %v1614 = vshll.u32 %v1546, 16
      %v1616 = vrot.slane %v1614, 4
      %v1617 = vor.u32 %v1613, %v1616
      %v1618 = vsel %vm1007, %v1608, %v1617
      %v1620 = vshrl.u32 %v1547, 16
      %v1622 = vrot.slane %v1620, 3
      %v1623 = vshll.u32 %v1547, 16
      %v1625 = vrot.slane %v1623, 4
      %v1626 = vor.u32 %v1622, %v1625
      %v1627 = vsel %vm1007, %v1617, %v1626
      %v1629 = vshrl.u32 %v1548, 16
      %v1631 = vrot.slane %v1629, 3
      %v1632 = vshll.u32 %v1548, 16
      %v1634 = vrot.slane %v1632, 4
      %v1635 = vor.u32 %v1631, %v1634
      %v1636 = vsel %vm1007, %v1626, %v1635
      %v1638 = vshrl.u32 %v1549, 16
      %v1640 = vrot.slane %v1638, 3
      %v1641 = vshll.u32 %v1549, 16
      %v1643 = vrot.slane %v1641, 4
      %v1644 = vor.u32 %v1640, %v1643
      %v1645 = vsel %vm1007, %v1635, %v1644
      %v1647 = vshrl.u32 %v1550, 16
      %v1649 = vrot.slane %v1647, 3
      %v1650 = vshll.u32 %v1550, 16
      %v1652 = vrot.slane %v1650, 4
      %v1653 = vor.u32 %v1649, %v1652
      %v1654 = vsel %vm1007, %v1644, %v1653
      %v1656 = vshrl.u32 %v1551, 16
      %v1658 = vrot.slane %v1656, 3
      %v1659 = vshll.u32 %v1551, 16
      %v1661 = vrot.slane %v1659, 4
      %v1662 = vor.u32 %v1658, %v1661
      %v1663 = vsel %vm1007, %v1653, %v1662
      %v1665 = vshrl.u32 %v1552, 16
      %v1667 = vrot.slane %v1665, 3
      %v1668 = vshll.u32 %v1552, 16
      %v1670 = vrot.slane %v1668, 4
      %v1671 = vor.u32 %v1667, %v1670
      %v1672 = vsel %vm1007, %v1662, %v1671
      %v1674 = vshrl.u32 %v1553, 16
      %v1676 = vrot.slane %v1674, 3
      %v1677 = vshll.u32 %v1553, 16
      %v1679 = vrot.slane %v1677, 4
      %v1680 = vor.u32 %v1676, %v1679
      %v1681 = vsel %vm1007, %v1671, %v1680
      %v1683 = vshrl.u32 %v1554, 16
      %v1685 = vrot.slane %v1683, 3
      %v1686 = vshll.u32 %v1554, 16
      %v1688 = vrot.slane %v1686, 4
      %v1689 = vor.u32 %v1685, %v1688
      %v1690 = vsel %vm1007, %v1680, %v1689
      %v1692 = vshrl.u32 %v1555, 16
      %v1694 = vrot.slane %v1692, 3
      %v1695 = vshll.u32 %v1555, 16
      %v1697 = vrot.slane %v1695, 4
      %v1698 = vor.u32 %v1694, %v1697
      %v1699 = vsel %vm1007, %v1689, %v1698
      %v1701 = vshrl.u32 %v1556, 16
      %v1703 = vrot.slane %v1701, 3
      %v1704 = vshll.u32 %v1556, 16
      %v1706 = vrot.slane %v1704, 4
      %v1707 = vor.u32 %v1703, %v1706
      %v1708 = vsel %vm1007, %v1698, %v1707
      %v1710 = vsel %vm1160, %v1573, 0
      %v1713 = vsel %vm1160, %v1582, 0
      %v1716 = vsel %vm1160, %v1591, 0
      %v1719 = vsel %vm1160, %v1600, 0
      %v1722 = vsel %vm1160, %v1609, 0
      %v1725 = vsel %vm1160, %v1618, 0
      %v1728 = vsel %vm1160, %v1627, 0
      %v1731 = vsel %vm1160, %v1636, 0
      %v1734 = vsel %vm1160, %v1645, 0
      %v1737 = vsel %vm1160, %v1654, 0
      %v1740 = vsel %vm1160, %v1663, 0
      %v1743 = vsel %vm1160, %v1672, 0
      %v1746 = vsel %vm1160, %v1681, 0
      %v1749 = vsel %vm1160, %v1690, 0
      %v1752 = vsel %vm1160, %v1699, 0
      %v1755 = vsel %vm1160, %v1708, 0
      %v1758 = vsel %vm1209, %v1473, 0
      %1760 = vmatpush.bf16.msra.mxu0 0
      %1761 = vmatpush.bf16.msra.mxu0 0
      %1762 = vmatpush.bf16.msra.mxu0 0
      %1763 = vmatpush.bf16.msra.mxu0 0
      %1764 = vmatpush.bf16.msra.mxu0 0
      %1765 = vmatpush.bf16.msra.mxu0 0
      %1766 = vmatpush.bf16.msra.mxu0 0
      %1767 = vmatpush.bf16.msra.mxu0 %v1758
      %1768 = vmatmul.bf16.gmra.mxu0 %v1710
      %v1769 = vpop.f32.mrf.mxu0
      %v1770 = vadd.f32 0.0, %v1769
      %v1771 = vpop.f32.mrf.mxu0
      %v1772 = vadd.f32 0.0, %v1771
      %1773 = vmatmul.bf16.gmra.mxu0 %v1713
      %v1774 = vpop.f32.mrf.mxu0
      %v1775 = vadd.f32 0.0, %v1774
      %v1776 = vpop.f32.mrf.mxu0
      %v1777 = vadd.f32 0.0, %v1776
      %1778 = vmatmul.bf16.gmra.mxu0 %v1716
      %v1779 = vpop.f32.mrf.mxu0
      %v1780 = vadd.f32 0.0, %v1779
      %v1781 = vpop.f32.mrf.mxu0
      %v1782 = vadd.f32 0.0, %v1781
      %1783 = vmatmul.bf16.gmra.mxu0 %v1719
      %v1784 = vpop.f32.mrf.mxu0
      %v1785 = vadd.f32 0.0, %v1784
      %v1786 = vpop.f32.mrf.mxu0
      %v1787 = vadd.f32 0.0, %v1786
      %1788 = vmatmul.bf16.gmra.mxu0 %v1722
      %v1789 = vpop.f32.mrf.mxu0
      %v1790 = vadd.f32 0.0, %v1789
      %v1791 = vpop.f32.mrf.mxu0
      %v1792 = vadd.f32 0.0, %v1791
      %1793 = vmatmul.bf16.gmra.mxu0 %v1725
      %v1794 = vpop.f32.mrf.mxu0
      %v1795 = vadd.f32 0.0, %v1794
      %v1796 = vpop.f32.mrf.mxu0
      %v1797 = vadd.f32 0.0, %v1796
      %1798 = vmatmul.bf16.gmra.mxu0 %v1728
      %v1799 = vpop.f32.mrf.mxu0
      %v1800 = vadd.f32 0.0, %v1799
      %v1801 = vpop.f32.mrf.mxu0
      %v1802 = vadd.f32 0.0, %v1801
      %1803 = vmatmul.bf16.gmra.mxu0 %v1731
      %v1804 = vpop.f32.mrf.mxu0
      %v1805 = vadd.f32 0.0, %v1804
      %v1806 = vpop.f32.mrf.mxu0
      %v1807 = vadd.f32 0.0, %v1806
      %1808 = vmatmul.bf16.gmra.mxu0 %v1734
      %v1809 = vpop.f32.mrf.mxu0
      %v1810 = vadd.f32 0.0, %v1809
      %v1811 = vpop.f32.mrf.mxu0
      %v1812 = vadd.f32 0.0, %v1811
      %1813 = vmatmul.bf16.gmra.mxu0 %v1737
      %v1814 = vpop.f32.mrf.mxu0
      %v1815 = vadd.f32 0.0, %v1814
      %v1816 = vpop.f32.mrf.mxu0
      %v1817 = vadd.f32 0.0, %v1816
      %1818 = vmatmul.bf16.gmra.mxu0 %v1740
      %v1819 = vpop.f32.mrf.mxu0
      %v1820 = vadd.f32 0.0, %v1819
      %v1821 = vpop.f32.mrf.mxu0
      %v1822 = vadd.f32 0.0, %v1821
      %1823 = vmatmul.bf16.gmra.mxu0 %v1743
      %v1824 = vpop.f32.mrf.mxu0
      %v1825 = vadd.f32 0.0, %v1824
      %v1826 = vpop.f32.mrf.mxu0
      %v1827 = vadd.f32 0.0, %v1826
      %1828 = vmatmul.bf16.gmra.mxu0 %v1746
      %v1829 = vpop.f32.mrf.mxu0
      %v1830 = vadd.f32 0.0, %v1829
      %v1831 = vpop.f32.mrf.mxu0
      %v1832 = vadd.f32 0.0, %v1831
      %1833 = vmatmul.bf16.gmra.mxu0 %v1749
      %v1834 = vpop.f32.mrf.mxu0
      %v1835 = vadd.f32 0.0, %v1834
      %v1836 = vpop.f32.mrf.mxu0
      %v1837 = vadd.f32 0.0, %v1836
      %1838 = vmatmul.bf16.gmra.mxu0 %v1752
      %v1839 = vpop.f32.mrf.mxu0
      %v1840 = vadd.f32 0.0, %v1839
      %v1841 = vpop.f32.mrf.mxu0
      %v1842 = vadd.f32 0.0, %v1841
      %1843 = vmatmul.bf16.gmra.mxu0 %v1755
      %v1844 = vpop.f32.mrf.mxu0
      %v1845 = vadd.f32 0.0, %v1844
      %v1846 = vpop.f32.mrf.mxu0
      %v1847 = vadd.f32 0.0, %v1846
      %1848 = vdwg.mxu0
      %v1849 = vadd.f32 %v1360, %v1770
      %v1850 = vadd.f32 %v1362, %v1772
      %v1851 = vadd.f32 %v1365, %v1775
      %v1852 = vadd.f32 %v1367, %v1777
      %v1853 = vadd.f32 %v1370, %v1780
      %v1854 = vadd.f32 %v1372, %v1782
      %v1855 = vadd.f32 %v1375, %v1785
      %v1856 = vadd.f32 %v1377, %v1787
      %v1857 = vadd.f32 %v1380, %v1790
      %v1858 = vadd.f32 %v1382, %v1792
      %v1859 = vadd.f32 %v1385, %v1795
      %v1860 = vadd.f32 %v1387, %v1797
      %v1861 = vadd.f32 %v1390, %v1800
      %v1862 = vadd.f32 %v1392, %v1802
      %v1863 = vadd.f32 %v1395, %v1805
      %v1864 = vadd.f32 %v1397, %v1807
      %v1865 = vadd.f32 %v1400, %v1810
      %v1866 = vadd.f32 %v1402, %v1812
      %v1867 = vadd.f32 %v1405, %v1815
      %v1868 = vadd.f32 %v1407, %v1817
      %v1869 = vadd.f32 %v1410, %v1820
      %v1870 = vadd.f32 %v1412, %v1822
      %v1871 = vadd.f32 %v1415, %v1825
      %v1872 = vadd.f32 %v1417, %v1827
      %v1873 = vadd.f32 %v1420, %v1830
      %v1874 = vadd.f32 %v1422, %v1832
      %v1875 = vadd.f32 %v1425, %v1835
      %v1876 = vadd.f32 %v1427, %v1837
      %v1877 = vadd.f32 %v1430, %v1840
      %v1878 = vadd.f32 %v1432, %v1842
      %v1879 = vadd.f32 %v1435, %v1845
      %v1880 = vadd.f32 %v1437, %v1847
      %s1881 = scalar_lea.vmem %s1, 2
      %v1882 = vld [vmem:[%s1881] sm:$0x3]
      %s1883 = scalar_lea.vmem %s1, 8
      %v1884 = vld [vmem:[%s1883] sm:$0x3]
      %v1885 = vpack.c.b16 %v959, %v958
      %v1886 = vpack.c.b16 %v961, %v960
      %v1887 = vpack.c.b16 %v963, %v962
      %v1888 = vpack.c.b16 %v965, %v964
      %v1889 = vpack.c.b16 %v967, %v966
      %v1890 = vpack.c.b16 %v969, %v968
      %v1891 = vpack.c.b16 %v971, %v970
      %v1892 = vpack.c.b16 %v973, %v972
      %v1893 = vpack.c.b16 %v975, %v974
      %v1894 = vpack.c.b16 %v977, %v976
      %v1895 = vpack.c.b16 %v979, %v978
      %v1896 = vpack.c.b16 %v981, %v980
      %v1897 = vpack.c.b16 %v983, %v982
      %v1898 = vpack.c.b16 %v985, %v984
      %v1899 = vpack.c.b16 %v987, %v986
      %v1900 = vpack.c.b16 %v989, %v988
      %v1902 = vsel %vm1160, %v1885, 0
      %v1905 = vsel %vm1160, %v1886, 0
      %v1908 = vsel %vm1160, %v1887, 0
      %v1911 = vsel %vm1160, %v1888, 0
      %v1914 = vsel %vm1160, %v1889, 0
      %v1917 = vsel %vm1160, %v1890, 0
      %v1920 = vsel %vm1160, %v1891, 0
      %v1923 = vsel %vm1160, %v1892, 0
      %v1926 = vsel %vm1160, %v1893, 0
      %v1929 = vsel %vm1160, %v1894, 0
      %v1932 = vsel %vm1160, %v1895, 0
      %v1935 = vsel %vm1160, %v1896, 0
      %v1938 = vsel %vm1160, %v1897, 0
      %v1941 = vsel %vm1160, %v1898, 0
      %v1944 = vsel %vm1160, %v1899, 0
      %v1947 = vsel %vm1160, %v1900, 0
      %v1950 = vsel %vm1209, %v1884, 0
      %1952 = vmatpush.bf16.msra.mxu0 0
      %1953 = vmatpush.bf16.msra.mxu0 0
      %1954 = vmatpush.bf16.msra.mxu0 0
      %1955 = vmatpush.bf16.msra.mxu0 0
      %1956 = vmatpush.bf16.msra.mxu0 0
      %1957 = vmatpush.bf16.msra.mxu0 0
      %1958 = vmatpush.bf16.msra.mxu0 0
      %1959 = vmatpush.bf16.msra.mxu0 %v1950
      %1960 = vmatmul.bf16.gmra.mxu0 %v1902
      %v1961 = vpop.f32.mrf.mxu0
      %v1962 = vadd.f32 0.0, %v1961
      %v1963 = vpop.f32.mrf.mxu0
      %v1964 = vadd.f32 0.0, %v1963
      %1965 = vmatmul.bf16.gmra.mxu0 %v1905
      %v1966 = vpop.f32.mrf.mxu0
      %v1967 = vadd.f32 0.0, %v1966
      %v1968 = vpop.f32.mrf.mxu0
      %v1969 = vadd.f32 0.0, %v1968
      %1970 = vmatmul.bf16.gmra.mxu0 %v1908
      %v1971 = vpop.f32.mrf.mxu0
      %v1972 = vadd.f32 0.0, %v1971
      %v1973 = vpop.f32.mrf.mxu0
      %v1974 = vadd.f32 0.0, %v1973
      %1975 = vmatmul.bf16.gmra.mxu0 %v1911
      %v1976 = vpop.f32.mrf.mxu0
      %v1977 = vadd.f32 0.0, %v1976
      %v1978 = vpop.f32.mrf.mxu0
      %v1979 = vadd.f32 0.0, %v1978
      %1980 = vmatmul.bf16.gmra.mxu0 %v1914
      %v1981 = vpop.f32.mrf.mxu0
      %v1982 = vadd.f32 0.0, %v1981
      %v1983 = vpop.f32.mrf.mxu0
      %v1984 = vadd.f32 0.0, %v1983
      %1985 = vmatmul.bf16.gmra.mxu0 %v1917
      %v1986 = vpop.f32.mrf.mxu0
      %v1987 = vadd.f32 0.0, %v1986
      %v1988 = vpop.f32.mrf.mxu0
      %v1989 = vadd.f32 0.0, %v1988
      %1990 = vmatmul.bf16.gmra.mxu0 %v1920
      %v1991 = vpop.f32.mrf.mxu0
      %v1992 = vadd.f32 0.0, %v1991
      %v1993 = vpop.f32.mrf.mxu0
      %v1994 = vadd.f32 0.0, %v1993
      %1995 = vmatmul.bf16.gmra.mxu0 %v1923
      %v1996 = vpop.f32.mrf.mxu0
      %v1997 = vadd.f32 0.0, %v1996
      %v1998 = vpop.f32.mrf.mxu0
      %v1999 = vadd.f32 0.0, %v1998
      %2000 = vmatmul.bf16.gmra.mxu0 %v1926
      %v2001 = vpop.f32.mrf.mxu0
      %v2002 = vadd.f32 0.0, %v2001
      %v2003 = vpop.f32.mrf.mxu0
      %v2004 = vadd.f32 0.0, %v2003
      %2005 = vmatmul.bf16.gmra.mxu0 %v1929
      %v2006 = vpop.f32.mrf.mxu0
      %v2007 = vadd.f32 0.0, %v2006
      %v2008 = vpop.f32.mrf.mxu0
      %v2009 = vadd.f32 0.0, %v2008
      %2010 = vmatmul.bf16.gmra.mxu0 %v1932
      %v2011 = vpop.f32.mrf.mxu0
      %v2012 = vadd.f32 0.0, %v2011
      %v2013 = vpop.f32.mrf.mxu0
      %v2014 = vadd.f32 0.0, %v2013
      %2015 = vmatmul.bf16.gmra.mxu0 %v1935
      %v2016 = vpop.f32.mrf.mxu0
      %v2017 = vadd.f32 0.0, %v2016
      %v2018 = vpop.f32.mrf.mxu0
      %v2019 = vadd.f32 0.0, %v2018
      %2020 = vmatmul.bf16.gmra.mxu0 %v1938
      %v2021 = vpop.f32.mrf.mxu0
      %v2022 = vadd.f32 0.0, %v2021
      %v2023 = vpop.f32.mrf.mxu0
      %v2024 = vadd.f32 0.0, %v2023
      %2025 = vmatmul.bf16.gmra.mxu0 %v1941
      %v2026 = vpop.f32.mrf.mxu0
      %v2027 = vadd.f32 0.0, %v2026
      %v2028 = vpop.f32.mrf.mxu0
      %v2029 = vadd.f32 0.0, %v2028
      %2030 = vmatmul.bf16.gmra.mxu0 %v1944
      %v2031 = vpop.f32.mrf.mxu0
      %v2032 = vadd.f32 0.0, %v2031
      %v2033 = vpop.f32.mrf.mxu0
      %v2034 = vadd.f32 0.0, %v2033
      %2035 = vmatmul.bf16.gmra.mxu0 %v1947
      %v2036 = vpop.f32.mrf.mxu0
      %v2037 = vadd.f32 0.0, %v2036
      %v2038 = vpop.f32.mrf.mxu0
      %v2039 = vadd.f32 0.0, %v2038
      %2040 = vdwg.mxu0
      %v2041 = vpack.c.b16 %v1307, %v1306
      %v2043 = vsel %vm1160, %v2041, 0
      %v2046 = vsel %vm1209, %v1882, 0
      %2048 = vmatpush.bf16.msra.mxu0 0
      %2049 = vmatpush.bf16.msra.mxu0 0
      %2050 = vmatpush.bf16.msra.mxu0 0
      %2051 = vmatpush.bf16.msra.mxu0 0
      %2052 = vmatpush.bf16.msra.mxu0 0
      %2053 = vmatpush.bf16.msra.mxu0 0
      %2054 = vmatpush.bf16.msra.mxu0 0
      %2055 = vmatpush.bf16.msra.mxu0 %v2046
      %2056 = vmatmul.bf16.gmra.mxu0 %v2043
      %v2057 = vpop.f32.mrf.mxu0
      %v2058 = vadd.f32 %v1962, %v2057
      %v2059 = vpop.f32.mrf.mxu0
      %v2060 = vadd.f32 %v1964, %v2059
      %2061 = vmatmul.bf16.gmra.mxu0 %v1902
      %v2062 = vpop.f32.mrf.mxu0
      %v2063 = vadd.f32 %v1967, %v2062
      %v2064 = vpop.f32.mrf.mxu0
      %v2065 = vadd.f32 %v1969, %v2064
      %2066 = vmatmul.bf16.gmra.mxu0 %v1905
      %v2067 = vpop.f32.mrf.mxu0
      %v2068 = vadd.f32 %v1972, %v2067
      %v2069 = vpop.f32.mrf.mxu0
      %v2070 = vadd.f32 %v1974, %v2069
      %2071 = vmatmul.bf16.gmra.mxu0 %v1908
      %v2072 = vpop.f32.mrf.mxu0
      %v2073 = vadd.f32 %v1977, %v2072
      %v2074 = vpop.f32.mrf.mxu0
      %v2075 = vadd.f32 %v1979, %v2074
      %2076 = vmatmul.bf16.gmra.mxu0 %v1911
      %v2077 = vpop.f32.mrf.mxu0
      %v2078 = vadd.f32 %v1982, %v2077
      %v2079 = vpop.f32.mrf.mxu0
      %v2080 = vadd.f32 %v1984, %v2079
      %2081 = vmatmul.bf16.gmra.mxu0 %v1914
      %v2082 = vpop.f32.mrf.mxu0
      %v2083 = vadd.f32 %v1987, %v2082
      %v2084 = vpop.f32.mrf.mxu0
      %v2085 = vadd.f32 %v1989, %v2084
      %2086 = vmatmul.bf16.gmra.mxu0 %v1917
      %v2087 = vpop.f32.mrf.mxu0
      %v2088 = vadd.f32 %v1992, %v2087
      %v2089 = vpop.f32.mrf.mxu0
      %v2090 = vadd.f32 %v1994, %v2089
      %2091 = vmatmul.bf16.gmra.mxu0 %v1920
      %v2092 = vpop.f32.mrf.mxu0
      %v2093 = vadd.f32 %v1997, %v2092
      %v2094 = vpop.f32.mrf.mxu0
      %v2095 = vadd.f32 %v1999, %v2094
      %2096 = vmatmul.bf16.gmra.mxu0 %v1923
      %v2097 = vpop.f32.mrf.mxu0
      %v2098 = vadd.f32 %v2002, %v2097
      %v2099 = vpop.f32.mrf.mxu0
      %v2100 = vadd.f32 %v2004, %v2099
      %2101 = vmatmul.bf16.gmra.mxu0 %v1926
      %v2102 = vpop.f32.mrf.mxu0
      %v2103 = vadd.f32 %v2007, %v2102
      %v2104 = vpop.f32.mrf.mxu0
      %v2105 = vadd.f32 %v2009, %v2104
      %2106 = vmatmul.bf16.gmra.mxu0 %v1929
      %v2107 = vpop.f32.mrf.mxu0
      %v2108 = vadd.f32 %v2012, %v2107
      %v2109 = vpop.f32.mrf.mxu0
      %v2110 = vadd.f32 %v2014, %v2109
      %2111 = vmatmul.bf16.gmra.mxu0 %v1932
      %v2112 = vpop.f32.mrf.mxu0
      %v2113 = vadd.f32 %v2017, %v2112
      %v2114 = vpop.f32.mrf.mxu0
      %v2115 = vadd.f32 %v2019, %v2114
      %2116 = vmatmul.bf16.gmra.mxu0 %v1935
      %v2117 = vpop.f32.mrf.mxu0
      %v2118 = vadd.f32 %v2022, %v2117
      %v2119 = vpop.f32.mrf.mxu0
      %v2120 = vadd.f32 %v2024, %v2119
      %2121 = vmatmul.bf16.gmra.mxu0 %v1938
      %v2122 = vpop.f32.mrf.mxu0
      %v2123 = vadd.f32 %v2027, %v2122
      %v2124 = vpop.f32.mrf.mxu0
      %v2125 = vadd.f32 %v2029, %v2124
      %2126 = vmatmul.bf16.gmra.mxu0 %v1941
      %v2127 = vpop.f32.mrf.mxu0
      %v2128 = vadd.f32 %v2032, %v2127
      %v2129 = vpop.f32.mrf.mxu0
      %v2130 = vadd.f32 %v2034, %v2129
      %2131 = vmatmul.bf16.gmra.mxu0 %v1944
      %v2132 = vpop.f32.mrf.mxu0
      %v2133 = vadd.f32 %v2037, %v2132
      %v2134 = vpop.f32.mrf.mxu0
      %v2135 = vadd.f32 %v2039, %v2134
      %2136 = vdwg.mxu0
      %s2137 = scalar_lea.vmem %s1, 14
      %v2138 = vld [vmem:[%s2137] sm:$0x3]
      %v2139 = vpack.c.b16 %v1509, %v1508
      %v2140 = vpack.c.b16 %v1511, %v1510
      %v2141 = vpack.c.b16 %v1513, %v1512
      %v2142 = vpack.c.b16 %v1515, %v1514
      %v2143 = vpack.c.b16 %v1517, %v1516
      %v2144 = vpack.c.b16 %v1519, %v1518
      %v2145 = vpack.c.b16 %v1521, %v1520
      %v2146 = vpack.c.b16 %v1523, %v1522
      %v2147 = vpack.c.b16 %v1525, %v1524
      %v2148 = vpack.c.b16 %v1527, %v1526
      %v2149 = vpack.c.b16 %v1529, %v1528
      %v2150 = vpack.c.b16 %v1531, %v1530
      %v2151 = vpack.c.b16 %v1533, %v1532
      %v2152 = vpack.c.b16 %v1535, %v1534
      %v2153 = vpack.c.b16 %v1537, %v1536
      %v2154 = vpack.c.b16 %v1539, %v1538
      %v2156 = vsel %vm1160, %v2139, 0
      %v2159 = vsel %vm1160, %v2140, 0
      %v2162 = vsel %vm1160, %v2141, 0
      %v2165 = vsel %vm1160, %v2142, 0
      %v2168 = vsel %vm1160, %v2143, 0
      %v2171 = vsel %vm1160, %v2144, 0
      %v2174 = vsel %vm1160, %v2145, 0
      %v2177 = vsel %vm1160, %v2146, 0
      %v2180 = vsel %vm1160, %v2147, 0
      %v2183 = vsel %vm1160, %v2148, 0
      %v2186 = vsel %vm1160, %v2149, 0
      %v2189 = vsel %vm1160, %v2150, 0
      %v2192 = vsel %vm1160, %v2151, 0
      %v2195 = vsel %vm1160, %v2152, 0
      %v2198 = vsel %vm1160, %v2153, 0
      %v2201 = vsel %vm1160, %v2154, 0
      %v2204 = vsel %vm1209, %v2138, 0
      %2206 = vmatpush.bf16.msra.mxu0 0
      %2207 = vmatpush.bf16.msra.mxu0 0
      %2208 = vmatpush.bf16.msra.mxu0 0
      %2209 = vmatpush.bf16.msra.mxu0 0
      %2210 = vmatpush.bf16.msra.mxu0 0
      %2211 = vmatpush.bf16.msra.mxu0 0
      %2212 = vmatpush.bf16.msra.mxu0 0
      %2213 = vmatpush.bf16.msra.mxu0 %v2204
      %2214 = vmatmul.bf16.gmra.mxu0 %v2156
      %v2215 = vpop.f32.mrf.mxu0
      %v2216 = vadd.f32 0.0, %v2215
      %v2217 = vpop.f32.mrf.mxu0
      %v2218 = vadd.f32 0.0, %v2217
      %2219 = vmatmul.bf16.gmra.mxu0 %v2159
      %v2220 = vpop.f32.mrf.mxu0
      %v2221 = vadd.f32 0.0, %v2220
      %v2222 = vpop.f32.mrf.mxu0
      %v2223 = vadd.f32 0.0, %v2222
      %2224 = vmatmul.bf16.gmra.mxu0 %v2162
      %v2225 = vpop.f32.mrf.mxu0
      %v2226 = vadd.f32 0.0, %v2225
      %v2227 = vpop.f32.mrf.mxu0
      %v2228 = vadd.f32 0.0, %v2227
      %2229 = vmatmul.bf16.gmra.mxu0 %v2165
      %v2230 = vpop.f32.mrf.mxu0
      %v2231 = vadd.f32 0.0, %v2230
      %v2232 = vpop.f32.mrf.mxu0
      %v2233 = vadd.f32 0.0, %v2232
      %2234 = vmatmul.bf16.gmra.mxu0 %v2168
      %v2235 = vpop.f32.mrf.mxu0
      %v2236 = vadd.f32 0.0, %v2235
      %v2237 = vpop.f32.mrf.mxu0
      %v2238 = vadd.f32 0.0, %v2237
      %2239 = vmatmul.bf16.gmra.mxu0 %v2171
      %v2240 = vpop.f32.mrf.mxu0
      %v2241 = vadd.f32 0.0, %v2240
      %v2242 = vpop.f32.mrf.mxu0
      %v2243 = vadd.f32 0.0, %v2242
      %2244 = vmatmul.bf16.gmra.mxu0 %v2174
      %v2245 = vpop.f32.mrf.mxu0
      %v2246 = vadd.f32 0.0, %v2245
      %v2247 = vpop.f32.mrf.mxu0
      %v2248 = vadd.f32 0.0, %v2247
      %2249 = vmatmul.bf16.gmra.mxu0 %v2177
      %v2250 = vpop.f32.mrf.mxu0
      %v2251 = vadd.f32 0.0, %v2250
      %v2252 = vpop.f32.mrf.mxu0
      %v2253 = vadd.f32 0.0, %v2252
      %2254 = vmatmul.bf16.gmra.mxu0 %v2180
      %v2255 = vpop.f32.mrf.mxu0
      %v2256 = vadd.f32 0.0, %v2255
      %v2257 = vpop.f32.mrf.mxu0
      %v2258 = vadd.f32 0.0, %v2257
      %2259 = vmatmul.bf16.gmra.mxu0 %v2183
      %v2260 = vpop.f32.mrf.mxu0
      %v2261 = vadd.f32 0.0, %v2260
      %v2262 = vpop.f32.mrf.mxu0
      %v2263 = vadd.f32 0.0, %v2262
      %2264 = vmatmul.bf16.gmra.mxu0 %v2186
      %v2265 = vpop.f32.mrf.mxu0
      %v2266 = vadd.f32 0.0, %v2265
      %v2267 = vpop.f32.mrf.mxu0
      %v2268 = vadd.f32 0.0, %v2267
      %2269 = vmatmul.bf16.gmra.mxu0 %v2189
      %v2270 = vpop.f32.mrf.mxu0
      %v2271 = vadd.f32 0.0, %v2270
      %v2272 = vpop.f32.mrf.mxu0
      %v2273 = vadd.f32 0.0, %v2272
      %2274 = vmatmul.bf16.gmra.mxu0 %v2192
      %v2275 = vpop.f32.mrf.mxu0
      %v2276 = vadd.f32 0.0, %v2275
      %v2277 = vpop.f32.mrf.mxu0
      %v2278 = vadd.f32 0.0, %v2277
      %2279 = vmatmul.bf16.gmra.mxu0 %v2195
      %v2280 = vpop.f32.mrf.mxu0
      %v2281 = vadd.f32 0.0, %v2280
      %v2282 = vpop.f32.mrf.mxu0
      %v2283 = vadd.f32 0.0, %v2282
      %2284 = vmatmul.bf16.gmra.mxu0 %v2198
      %v2285 = vpop.f32.mrf.mxu0
      %v2286 = vadd.f32 0.0, %v2285
      %v2287 = vpop.f32.mrf.mxu0
      %v2288 = vadd.f32 0.0, %v2287
      %2289 = vmatmul.bf16.gmra.mxu0 %v2201
      %v2290 = vpop.f32.mrf.mxu0
      %v2291 = vadd.f32 0.0, %v2290
      %v2292 = vpop.f32.mrf.mxu0
      %v2293 = vadd.f32 0.0, %v2292
      %2294 = vdwg.mxu0
      %v2295 = vadd.f32 %v2058, %v2216
      %v2296 = vadd.f32 %v2060, %v2218
      %v2297 = vadd.f32 %v2063, %v2221
      %v2298 = vadd.f32 %v2065, %v2223
      %v2299 = vadd.f32 %v2068, %v2226
      %v2300 = vadd.f32 %v2070, %v2228
      %v2301 = vadd.f32 %v2073, %v2231
      %v2302 = vadd.f32 %v2075, %v2233
      %v2303 = vadd.f32 %v2078, %v2236
      %v2304 = vadd.f32 %v2080, %v2238
      %v2305 = vadd.f32 %v2083, %v2241
      %v2306 = vadd.f32 %v2085, %v2243
      %v2307 = vadd.f32 %v2088, %v2246
      %v2308 = vadd.f32 %v2090, %v2248
      %v2309 = vadd.f32 %v2093, %v2251
      %v2310 = vadd.f32 %v2095, %v2253
      %v2311 = vadd.f32 %v2098, %v2256
      %v2312 = vadd.f32 %v2100, %v2258
      %v2313 = vadd.f32 %v2103, %v2261
      %v2314 = vadd.f32 %v2105, %v2263
      %v2315 = vadd.f32 %v2108, %v2266
      %v2316 = vadd.f32 %v2110, %v2268
      %v2317 = vadd.f32 %v2113, %v2271
      %v2318 = vadd.f32 %v2115, %v2273
      %v2319 = vadd.f32 %v2118, %v2276
      %v2320 = vadd.f32 %v2120, %v2278
      %v2321 = vadd.f32 %v2123, %v2281
      %v2322 = vadd.f32 %v2125, %v2283
      %v2323 = vadd.f32 %v2128, %v2286
      %v2324 = vadd.f32 %v2130, %v2288
      %v2325 = vadd.f32 %v2133, %v2291
      %v2326 = vadd.f32 %v2135, %v2293
      %v2327 = vld [vmem:[#allocation2 + $0x8] sm:$0xf]
      %v2328 = vld [vmem:[#allocation2 + $0xc] sm:$0xf]
      %v2329 = vld [vmem:[#allocation2 + $0x10] sm:$0xf]
      %v2330 = vld [vmem:[#allocation2 + $0x14] sm:$0xf]
      %v2331 = vld [vmem:[#allocation2 + $0x18] sm:$0xf]
      %v2332 = vld [vmem:[#allocation2 + $0x1c] sm:$0xf]
      %v2333 = vld [vmem:[#allocation2 + $0x20] sm:$0xf]
      %v2334 = vld [vmem:[#allocation2 + $0x24] sm:$0xf]
      %v2335 = vld [vmem:[#allocation2 + $0x28] sm:$0xf]
      %v2336 = vld [vmem:[#allocation2 + $0x2c] sm:$0xf]
      %v2337 = vld [vmem:[#allocation2 + $0x30] sm:$0xf]
      %v2338 = vld [vmem:[#allocation2 + $0x34] sm:$0xf]
      %v2339 = vld [vmem:[#allocation2 + $0x38] sm:$0xf]
      %v2340 = vld [vmem:[#allocation2 + $0x3c] sm:$0xf]
      %v2341 = vld [vmem:[#allocation2 + $0x40] sm:$0xf]
      %v2342 = vld [vmem:[#allocation2 + $0x44] sm:$0xf]
      %v2343 = vld [vmem:[#allocation2 + $0x48] sm:$0xf]
      %v2344 = vld [vmem:[#allocation2 + $0x4c] sm:$0xf]
      %v2345 = vld [vmem:[#allocation2 + $0x50] sm:$0xf]
      %v2346 = vld [vmem:[#allocation2 + $0x54] sm:$0xf]
      %v2347 = vld [vmem:[#allocation2 + $0x58] sm:$0xf]
      %v2348 = vld [vmem:[#allocation2 + $0x5c] sm:$0xf]
      %v2349 = vld [vmem:[#allocation2 + $0x60] sm:$0xf]
      %v2350 = vld [vmem:[#allocation2 + $0x64] sm:$0xf]
      %v2351 = vld [vmem:[#allocation2 + $0x68] sm:$0xf]
      %v2352 = vld [vmem:[#allocation2 + $0x6c] sm:$0xf]
      %v2353 = vld [vmem:[#allocation2 + $0x70] sm:$0xf]
      %v2354 = vld [vmem:[#allocation2 + $0x74] sm:$0xf]
      %v2355 = vld [vmem:[#allocation2 + $0x78] sm:$0xf]
      %v2356 = vld [vmem:[#allocation2 + $0x7c] sm:$0xf]
      %v2357 = vld [vmem:[#allocation2 + $0x80] sm:$0xf]
      %v2358 = vld [vmem:[#allocation2 + $0x84] sm:$0xf]
      %v2359 = vld [vmem:[#allocation2 + $0x88] sm:$0x1]
      %s2360 = scalar_lea.vmem %s1, 4
      %v2361 = vld [vmem:[%s2360] sm:$0x3]
      %v2362 = vld [vmem:[#allocation2 + $0x88] sm:$0xf]
      %v2363 = vld [vmem:[#allocation2 + $0x8c] sm:$0xf]
      %v2364 = vld [vmem:[#allocation2 + $0x90] sm:$0x1]
      %s2365 = scalar_lea.vmem %s1, 10
      %v2366 = vld [vmem:[%s2365] sm:$0x3]
      %v2400 = vunpack.c.l.b16 %v2329
      %v2401 = vunpack.c.l.b16 %v2330
      %v2402 = vunpack.c.l.b16 %v2331
      %v2403 = vunpack.c.l.b16 %v2332
      %v2404 = vunpack.c.l.b16 %v2333
      %v2405 = vunpack.c.l.b16 %v2334
      %v2406 = vunpack.c.l.b16 %v2335
      %v2407 = vunpack.c.l.b16 %v2336
      %v2408 = vunpack.c.l.b16 %v2337
      %v2409 = vunpack.c.l.b16 %v2338
      %v2410 = vunpack.c.l.b16 %v2339
      %v2411 = vunpack.c.l.b16 %v2340
      %v2412 = vunpack.c.l.b16 %v2341
      %v2413 = vunpack.c.l.b16 %v2342
      %v2414 = vunpack.c.l.b16 %v2343
      %v2415 = vunpack.c.l.b16 %v2344
      %v2416 = vunpack.c.l.b16 %v2345
      %v2417 = vunpack.c.l.b16 %v2346
      %v2418 = vunpack.c.l.b16 %v2347
      %v2419 = vunpack.c.l.b16 %v2348
      %v2420 = vunpack.c.l.b16 %v2349
      %v2421 = vunpack.c.l.b16 %v2350
      %v2422 = vunpack.c.l.b16 %v2351
      %v2423 = vunpack.c.l.b16 %v2352
      %v2424 = vunpack.c.l.b16 %v2353
      %v2425 = vunpack.c.l.b16 %v2354
      %v2426 = vunpack.c.l.b16 %v2355
      %v2427 = vunpack.c.l.b16 %v2356
      %v2428 = vunpack.c.l.b16 %v2357
      %v2429 = vunpack.c.l.b16 %v2358
      %v2430 = vunpack.c.l.b16 %v2362
      %v2431 = vunpack.c.l.b16 %v2363
      %v2432 = vunpack.c.l.b16 %v2364
      %v2433 = vpack.c.b16 %v2401, %v2400
      %v2434 = vpack.c.b16 %v2403, %v2402
      %v2435 = vpack.c.b16 %v2405, %v2404
      %v2436 = vpack.c.b16 %v2407, %v2406
      %v2437 = vpack.c.b16 %v2409, %v2408
      %v2438 = vpack.c.b16 %v2411, %v2410
      %v2439 = vpack.c.b16 %v2413, %v2412
      %v2440 = vpack.c.b16 %v2415, %v2414
      %v2441 = vpack.c.b16 %v2417, %v2416
      %v2442 = vpack.c.b16 %v2419, %v2418
      %v2443 = vpack.c.b16 %v2421, %v2420
      %v2444 = vpack.c.b16 %v2423, %v2422
      %v2445 = vpack.c.b16 %v2425, %v2424
      %v2446 = vpack.c.b16 %v2427, %v2426
      %v2447 = vpack.c.b16 %v2429, %v2428
      %v2448 = vpack.c.b16 %v2431, %v2430
      %v2449 = vpack.c.b16 %v2432, %v2432
      %vm2450 = vsmask.f32 7424
      %v2452 = vshrl.u32 %v2433, 16
      %v2454 = vshll.u32 %v2433, 16
      %v2456 = vrot.slane %v2454, 1
      %v2457 = vor.u32 %v2452, %v2456
      %v2459 = vshll.u32 %v2434, 16
      %v2461 = vrot.slane %v2459, 1
      %v2462 = vsel %vm2450, %v2457, %v2461
      %v2463 = vshrl.u32 %v2434, 16
      %v2465 = vor.u32 %v2463, %v2461
      %v2467 = vshll.u32 %v2435, 16
      %v2469 = vrot.slane %v2467, 1
      %v2470 = vsel %vm2450, %v2465, %v2469
      %v2471 = vshrl.u32 %v2435, 16
      %v2473 = vor.u32 %v2471, %v2469
      %v2475 = vshll.u32 %v2436, 16
      %v2477 = vrot.slane %v2475, 1
      %v2478 = vsel %vm2450, %v2473, %v2477
      %v2479 = vshrl.u32 %v2436, 16
      %v2481 = vor.u32 %v2479, %v2477
      %v2483 = vshll.u32 %v2437, 16
      %v2485 = vrot.slane %v2483, 1
      %v2486 = vsel %vm2450, %v2481, %v2485
      %v2487 = vshrl.u32 %v2437, 16
      %v2489 = vor.u32 %v2487, %v2485
      %v2491 = vshll.u32 %v2438, 16
      %v2493 = vrot.slane %v2491, 1
      %v2494 = vsel %vm2450, %v2489, %v2493
      %v2495 = vshrl.u32 %v2438, 16
      %v2497 = vor.u32 %v2495, %v2493
      %v2499 = vshll.u32 %v2439, 16
      %v2501 = vrot.slane %v2499, 1
      %v2502 = vsel %vm2450, %v2497, %v2501
      %v2503 = vshrl.u32 %v2439, 16
      %v2505 = vor.u32 %v2503, %v2501
      %v2507 = vshll.u32 %v2440, 16
      %v2509 = vrot.slane %v2507, 1
      %v2510 = vsel %vm2450, %v2505, %v2509
      %v2511 = vshrl.u32 %v2440, 16
      %v2513 = vor.u32 %v2511, %v2509
      %v2515 = vshll.u32 %v2441, 16
      %v2517 = vrot.slane %v2515, 1
      %v2518 = vsel %vm2450, %v2513, %v2517
      %v2519 = vshrl.u32 %v2441, 16
      %v2521 = vor.u32 %v2519, %v2517
      %v2523 = vshll.u32 %v2442, 16
      %v2525 = vrot.slane %v2523, 1
      %v2526 = vsel %vm2450, %v2521, %v2525
      %v2527 = vshrl.u32 %v2442, 16
      %v2529 = vor.u32 %v2527, %v2525
      %v2531 = vshll.u32 %v2443, 16
      %v2533 = vrot.slane %v2531, 1
      %v2534 = vsel %vm2450, %v2529, %v2533
      %v2535 = vshrl.u32 %v2443, 16
      %v2537 = vor.u32 %v2535, %v2533
      %v2539 = vshll.u32 %v2444, 16
      %v2541 = vrot.slane %v2539, 1
      %v2542 = vsel %vm2450, %v2537, %v2541
      %v2543 = vshrl.u32 %v2444, 16
      %v2545 = vor.u32 %v2543, %v2541
      %v2547 = vshll.u32 %v2445, 16
      %v2549 = vrot.slane %v2547, 1
      %v2550 = vsel %vm2450, %v2545, %v2549
      %v2551 = vshrl.u32 %v2445, 16
      %v2553 = vor.u32 %v2551, %v2549
      %v2555 = vshll.u32 %v2446, 16
      %v2557 = vrot.slane %v2555, 1
      %v2558 = vsel %vm2450, %v2553, %v2557
      %v2559 = vshrl.u32 %v2446, 16
      %v2561 = vor.u32 %v2559, %v2557
      %v2563 = vshll.u32 %v2447, 16
      %v2565 = vrot.slane %v2563, 1
      %v2566 = vsel %vm2450, %v2561, %v2565
      %v2567 = vshrl.u32 %v2447, 16
      %v2569 = vor.u32 %v2567, %v2565
      %v2571 = vshll.u32 %v2448, 16
      %v2573 = vrot.slane %v2571, 1
      %v2574 = vsel %vm2450, %v2569, %v2573
      %v2575 = vshrl.u32 %v2448, 16
      %v2577 = vor.u32 %v2575, %v2573
      %v2579 = vshll.u32 %v2449, 16
      %v2581 = vrot.slane %v2579, 1
      %v2582 = vsel %vm2450, %v2577, %v2581
      %v2584 = vsel %vm1160, %v2462, 0
      %v2587 = vsel %vm1160, %v2470, 0
      %v2590 = vsel %vm1160, %v2478, 0
      %v2593 = vsel %vm1160, %v2486, 0
      %v2596 = vsel %vm1160, %v2494, 0
      %v2599 = vsel %vm1160, %v2502, 0
      %v2602 = vsel %vm1160, %v2510, 0
      %v2605 = vsel %vm1160, %v2518, 0
      %v2608 = vsel %vm1160, %v2526, 0
      %v2611 = vsel %vm1160, %v2534, 0
      %v2614 = vsel %vm1160, %v2542, 0
      %v2617 = vsel %vm1160, %v2550, 0
      %v2620 = vsel %vm1160, %v2558, 0
      %v2623 = vsel %vm1160, %v2566, 0
      %v2626 = vsel %vm1160, %v2574, 0
      %v2629 = vsel %vm1160, %v2582, 0
      %v2632 = vsel %vm1209, %v2366, 0
      %2634 = vmatpush.bf16.msra.mxu0 0
      %2635 = vmatpush.bf16.msra.mxu0 0
      %2636 = vmatpush.bf16.msra.mxu0 0
      %2637 = vmatpush.bf16.msra.mxu0 0
      %2638 = vmatpush.bf16.msra.mxu0 0
      %2639 = vmatpush.bf16.msra.mxu0 0
      %2640 = vmatpush.bf16.msra.mxu0 0
      %2641 = vmatpush.bf16.msra.mxu0 %v2632
      %2642 = vmatmul.bf16.gmra.mxu0 %v2584
      %v2643 = vpop.f32.mrf.mxu0
      %v2644 = vadd.f32 0.0, %v2643
      %v2645 = vpop.f32.mrf.mxu0
      %v2646 = vadd.f32 0.0, %v2645
      %2647 = vmatmul.bf16.gmra.mxu0 %v2587
      %v2648 = vpop.f32.mrf.mxu0
      %v2649 = vadd.f32 0.0, %v2648
      %v2650 = vpop.f32.mrf.mxu0
      %v2651 = vadd.f32 0.0, %v2650
      %2652 = vmatmul.bf16.gmra.mxu0 %v2590
      %v2653 = vpop.f32.mrf.mxu0
      %v2654 = vadd.f32 0.0, %v2653
      %v2655 = vpop.f32.mrf.mxu0
      %v2656 = vadd.f32 0.0, %v2655
      %2657 = vmatmul.bf16.gmra.mxu0 %v2593
      %v2658 = vpop.f32.mrf.mxu0
      %v2659 = vadd.f32 0.0, %v2658
      %v2660 = vpop.f32.mrf.mxu0
      %v2661 = vadd.f32 0.0, %v2660
      %2662 = vmatmul.bf16.gmra.mxu0 %v2596
      %v2663 = vpop.f32.mrf.mxu0
      %v2664 = vadd.f32 0.0, %v2663
      %v2665 = vpop.f32.mrf.mxu0
      %v2666 = vadd.f32 0.0, %v2665
      %2667 = vmatmul.bf16.gmra.mxu0 %v2599
      %v2668 = vpop.f32.mrf.mxu0
      %v2669 = vadd.f32 0.0, %v2668
      %v2670 = vpop.f32.mrf.mxu0
      %v2671 = vadd.f32 0.0, %v2670
      %2672 = vmatmul.bf16.gmra.mxu0 %v2602
      %v2673 = vpop.f32.mrf.mxu0
      %v2674 = vadd.f32 0.0, %v2673
      %v2675 = vpop.f32.mrf.mxu0
      %v2676 = vadd.f32 0.0, %v2675
      %2677 = vmatmul.bf16.gmra.mxu0 %v2605
      %v2678 = vpop.f32.mrf.mxu0
      %v2679 = vadd.f32 0.0, %v2678
      %v2680 = vpop.f32.mrf.mxu0
      %v2681 = vadd.f32 0.0, %v2680
      %2682 = vmatmul.bf16.gmra.mxu0 %v2608
      %v2683 = vpop.f32.mrf.mxu0
      %v2684 = vadd.f32 0.0, %v2683
      %v2685 = vpop.f32.mrf.mxu0
      %v2686 = vadd.f32 0.0, %v2685
      %2687 = vmatmul.bf16.gmra.mxu0 %v2611
      %v2688 = vpop.f32.mrf.mxu0
      %v2689 = vadd.f32 0.0, %v2688
      %v2690 = vpop.f32.mrf.mxu0
      %v2691 = vadd.f32 0.0, %v2690
      %2692 = vmatmul.bf16.gmra.mxu0 %v2614
      %v2693 = vpop.f32.mrf.mxu0
      %v2694 = vadd.f32 0.0, %v2693
      %v2695 = vpop.f32.mrf.mxu0
      %v2696 = vadd.f32 0.0, %v2695
      %2697 = vmatmul.bf16.gmra.mxu0 %v2617
      %v2698 = vpop.f32.mrf.mxu0
      %v2699 = vadd.f32 0.0, %v2698
      %v2700 = vpop.f32.mrf.mxu0
      %v2701 = vadd.f32 0.0, %v2700
      %2702 = vmatmul.bf16.gmra.mxu0 %v2620
      %v2703 = vpop.f32.mrf.mxu0
      %v2704 = vadd.f32 0.0, %v2703
      %v2705 = vpop.f32.mrf.mxu0
      %v2706 = vadd.f32 0.0, %v2705
      %2707 = vmatmul.bf16.gmra.mxu0 %v2623
      %v2708 = vpop.f32.mrf.mxu0
      %v2709 = vadd.f32 0.0, %v2708
      %v2710 = vpop.f32.mrf.mxu0
      %v2711 = vadd.f32 0.0, %v2710
      %2712 = vmatmul.bf16.gmra.mxu0 %v2626
      %v2713 = vpop.f32.mrf.mxu0
      %v2714 = vadd.f32 0.0, %v2713
      %v2715 = vpop.f32.mrf.mxu0
      %v2716 = vadd.f32 0.0, %v2715
      %2717 = vmatmul.bf16.gmra.mxu0 %v2629
      %v2718 = vpop.f32.mrf.mxu0
      %v2719 = vadd.f32 0.0, %v2718
      %v2720 = vpop.f32.mrf.mxu0
      %v2721 = vadd.f32 0.0, %v2720
      %2722 = vdwg.mxu0
      %v2726 = vunpack.c.l.b16 %v2327
      %v2727 = vunpack.c.l.b16 %v2328
      %v2728 = vunpack.c.l.b16 %v2359
      %v2729 = vpack.c.b16 %v2727, %v2726
      %v2730 = vpack.c.b16 %v2728, %v2728
      %v2732 = vshrl.u32 %v2729, 16
      %v2734 = vshll.u32 %v2729, 16
      %v2736 = vrot.slane %v2734, 1
      %v2737 = vor.u32 %v2732, %v2736
      %v2738 = vsel %vm2450, %v2737, %v2456
      %v2740 = vshll.u32 %v2730, 16
      %v2742 = vrot.slane %v2740, 1
      %v2743 = vsel %vm2450, %v2569, %v2742
      %v2745 = vsel %vm1160, %v2738, 0
      %v2748 = vsel %vm1160, %v2743, 0
      %v2751 = vsel %vm1209, %v2361, 0
      %2753 = vmatpush.bf16.msra.mxu0 0
      %2754 = vmatpush.bf16.msra.mxu0 0
      %2755 = vmatpush.bf16.msra.mxu0 0
      %2756 = vmatpush.bf16.msra.mxu0 0
      %2757 = vmatpush.bf16.msra.mxu0 0
      %2758 = vmatpush.bf16.msra.mxu0 0
      %2759 = vmatpush.bf16.msra.mxu0 0
      %2760 = vmatpush.bf16.msra.mxu0 %v2751
      %2761 = vmatmul.bf16.gmra.mxu0 %v2745
      %v2762 = vpop.f32.mrf.mxu0
      %v2763 = vadd.f32 %v2644, %v2762
      %v2764 = vpop.f32.mrf.mxu0
      %v2765 = vadd.f32 %v2646, %v2764
      %2766 = vmatmul.bf16.gmra.mxu0 %v2584
      %v2767 = vpop.f32.mrf.mxu0
      %v2768 = vadd.f32 %v2649, %v2767
      %v2769 = vpop.f32.mrf.mxu0
      %v2770 = vadd.f32 %v2651, %v2769
      %2771 = vmatmul.bf16.gmra.mxu0 %v2587
      %v2772 = vpop.f32.mrf.mxu0
      %v2773 = vadd.f32 %v2654, %v2772
      %v2774 = vpop.f32.mrf.mxu0
      %v2775 = vadd.f32 %v2656, %v2774
      %2776 = vmatmul.bf16.gmra.mxu0 %v2590
      %v2777 = vpop.f32.mrf.mxu0
      %v2778 = vadd.f32 %v2659, %v2777
      %v2779 = vpop.f32.mrf.mxu0
      %v2780 = vadd.f32 %v2661, %v2779
      %2781 = vmatmul.bf16.gmra.mxu0 %v2593
      %v2782 = vpop.f32.mrf.mxu0
      %v2783 = vadd.f32 %v2664, %v2782
      %v2784 = vpop.f32.mrf.mxu0
      %v2785 = vadd.f32 %v2666, %v2784
      %2786 = vmatmul.bf16.gmra.mxu0 %v2596
      %v2787 = vpop.f32.mrf.mxu0
      %v2788 = vadd.f32 %v2669, %v2787
      %v2789 = vpop.f32.mrf.mxu0
      %v2790 = vadd.f32 %v2671, %v2789
      %2791 = vmatmul.bf16.gmra.mxu0 %v2599
      %v2792 = vpop.f32.mrf.mxu0
      %v2793 = vadd.f32 %v2674, %v2792
      %v2794 = vpop.f32.mrf.mxu0
      %v2795 = vadd.f32 %v2676, %v2794
      %2796 = vmatmul.bf16.gmra.mxu0 %v2602
      %v2797 = vpop.f32.mrf.mxu0
      %v2798 = vadd.f32 %v2679, %v2797
      %v2799 = vpop.f32.mrf.mxu0
      %v2800 = vadd.f32 %v2681, %v2799
      %2801 = vmatmul.bf16.gmra.mxu0 %v2605
      %v2802 = vpop.f32.mrf.mxu0
      %v2803 = vadd.f32 %v2684, %v2802
      %v2804 = vpop.f32.mrf.mxu0
      %v2805 = vadd.f32 %v2686, %v2804
      %2806 = vmatmul.bf16.gmra.mxu0 %v2608
      %v2807 = vpop.f32.mrf.mxu0
      %v2808 = vadd.f32 %v2689, %v2807
      %v2809 = vpop.f32.mrf.mxu0
      %v2810 = vadd.f32 %v2691, %v2809
      %2811 = vmatmul.bf16.gmra.mxu0 %v2611
      %v2812 = vpop.f32.mrf.mxu0
      %v2813 = vadd.f32 %v2694, %v2812
      %v2814 = vpop.f32.mrf.mxu0
      %v2815 = vadd.f32 %v2696, %v2814
      %2816 = vmatmul.bf16.gmra.mxu0 %v2614
      %v2817 = vpop.f32.mrf.mxu0
      %v2818 = vadd.f32 %v2699, %v2817
      %v2819 = vpop.f32.mrf.mxu0
      %v2820 = vadd.f32 %v2701, %v2819
      %2821 = vmatmul.bf16.gmra.mxu0 %v2617
      %v2822 = vpop.f32.mrf.mxu0
      %v2823 = vadd.f32 %v2704, %v2822
      %v2824 = vpop.f32.mrf.mxu0
      %v2825 = vadd.f32 %v2706, %v2824
      %2826 = vmatmul.bf16.gmra.mxu0 %v2620
      %v2827 = vpop.f32.mrf.mxu0
      %v2828 = vadd.f32 %v2709, %v2827
      %v2829 = vpop.f32.mrf.mxu0
      %v2830 = vadd.f32 %v2711, %v2829
      %2831 = vmatmul.bf16.gmra.mxu0 %v2623
      %v2832 = vpop.f32.mrf.mxu0
      %v2833 = vadd.f32 %v2714, %v2832
      %v2834 = vpop.f32.mrf.mxu0
      %v2835 = vadd.f32 %v2716, %v2834
      %2836 = vmatmul.bf16.gmra.mxu0 %v2748
      %v2837 = vpop.f32.mrf.mxu0
      %v2838 = vadd.f32 %v2719, %v2837
      %v2839 = vpop.f32.mrf.mxu0
      %v2840 = vadd.f32 %v2721, %v2839
      %2841 = vdwg.mxu0
      %v2842 = vld [vmem:[#allocation2 + $0x18] sm:$0xf]
      %v2843 = vld [vmem:[#allocation2 + $0x1c] sm:$0xf]
      %v2844 = vld [vmem:[#allocation2 + $0x20] sm:$0xf]
      %v2845 = vld [vmem:[#allocation2 + $0x24] sm:$0xf]
      %v2846 = vld [vmem:[#allocation2 + $0x28] sm:$0xf]
      %v2847 = vld [vmem:[#allocation2 + $0x2c] sm:$0xf]
      %v2848 = vld [vmem:[#allocation2 + $0x30] sm:$0xf]
      %v2849 = vld [vmem:[#allocation2 + $0x34] sm:$0xf]
      %v2850 = vld [vmem:[#allocation2 + $0x38] sm:$0xf]
      %v2851 = vld [vmem:[#allocation2 + $0x3c] sm:$0xf]
      %v2852 = vld [vmem:[#allocation2 + $0x40] sm:$0xf]
      %v2853 = vld [vmem:[#allocation2 + $0x44] sm:$0xf]
      %v2854 = vld [vmem:[#allocation2 + $0x48] sm:$0xf]
      %v2855 = vld [vmem:[#allocation2 + $0x4c] sm:$0xf]
      %v2856 = vld [vmem:[#allocation2 + $0x50] sm:$0xf]
      %v2857 = vld [vmem:[#allocation2 + $0x54] sm:$0xf]
      %v2858 = vld [vmem:[#allocation2 + $0x58] sm:$0xf]
      %v2859 = vld [vmem:[#allocation2 + $0x5c] sm:$0xf]
      %v2860 = vld [vmem:[#allocation2 + $0x60] sm:$0xf]
      %v2861 = vld [vmem:[#allocation2 + $0x64] sm:$0xf]
      %v2862 = vld [vmem:[#allocation2 + $0x68] sm:$0xf]
      %v2863 = vld [vmem:[#allocation2 + $0x6c] sm:$0xf]
      %v2864 = vld [vmem:[#allocation2 + $0x70] sm:$0xf]
      %v2865 = vld [vmem:[#allocation2 + $0x74] sm:$0xf]
      %v2866 = vld [vmem:[#allocation2 + $0x78] sm:$0xf]
      %v2867 = vld [vmem:[#allocation2 + $0x7c] sm:$0xf]
      %v2868 = vld [vmem:[#allocation2 + $0x80] sm:$0xf]
      %v2869 = vld [vmem:[#allocation2 + $0x84] sm:$0xf]
      %v2870 = vld [vmem:[#allocation2 + $0x88] sm:$0xf]
      %v2871 = vld [vmem:[#allocation2 + $0x8c] sm:$0xf]
      %v2872 = vld [vmem:[#allocation2 + $0x90] sm:$0xf]
      %v2873 = vld [vmem:[#allocation2 + $0x94] sm:$0xf]
      %v2874 = vld [vmem:[#allocation2 + $0x98] sm:$0x1]
      %s2875 = scalar_lea.vmem %s1, 16
      %v2876 = vld [vmem:[%s2875] sm:$0x3]
      %v2910 = vunpack.c.l.b16 %v2842
      %v2911 = vunpack.c.l.b16 %v2843
      %v2912 = vunpack.c.l.b16 %v2844
      %v2913 = vunpack.c.l.b16 %v2845
      %v2914 = vunpack.c.l.b16 %v2846
      %v2915 = vunpack.c.l.b16 %v2847
      %v2916 = vunpack.c.l.b16 %v2848
      %v2917 = vunpack.c.l.b16 %v2849
      %v2918 = vunpack.c.l.b16 %v2850
      %v2919 = vunpack.c.l.b16 %v2851
      %v2920 = vunpack.c.l.b16 %v2852
      %v2921 = vunpack.c.l.b16 %v2853
      %v2922 = vunpack.c.l.b16 %v2854
      %v2923 = vunpack.c.l.b16 %v2855
      %v2924 = vunpack.c.l.b16 %v2856
      %v2925 = vunpack.c.l.b16 %v2857
      %v2926 = vunpack.c.l.b16 %v2858
      %v2927 = vunpack.c.l.b16 %v2859
      %v2928 = vunpack.c.l.b16 %v2860
      %v2929 = vunpack.c.l.b16 %v2861
      %v2930 = vunpack.c.l.b16 %v2862
      %v2931 = vunpack.c.l.b16 %v2863
      %v2932 = vunpack.c.l.b16 %v2864
      %v2933 = vunpack.c.l.b16 %v2865
      %v2934 = vunpack.c.l.b16 %v2866
      %v2935 = vunpack.c.l.b16 %v2867
      %v2936 = vunpack.c.l.b16 %v2868
      %v2937 = vunpack.c.l.b16 %v2869
      %v2938 = vunpack.c.l.b16 %v2870
      %v2939 = vunpack.c.l.b16 %v2871
      %v2940 = vunpack.c.l.b16 %v2872
      %v2941 = vunpack.c.l.b16 %v2873
      %v2942 = vunpack.c.l.b16 %v2874
      %v2943 = vpack.c.b16 %v2911, %v2910
      %v2944 = vpack.c.b16 %v2913, %v2912
      %v2945 = vpack.c.b16 %v2915, %v2914
      %v2946 = vpack.c.b16 %v2917, %v2916
      %v2947 = vpack.c.b16 %v2919, %v2918
      %v2948 = vpack.c.b16 %v2921, %v2920
      %v2949 = vpack.c.b16 %v2923, %v2922
      %v2950 = vpack.c.b16 %v2925, %v2924
      %v2951 = vpack.c.b16 %v2927, %v2926
      %v2952 = vpack.c.b16 %v2929, %v2928
      %v2953 = vpack.c.b16 %v2931, %v2930
      %v2954 = vpack.c.b16 %v2933, %v2932
      %v2955 = vpack.c.b16 %v2935, %v2934
      %v2956 = vpack.c.b16 %v2937, %v2936
      %v2957 = vpack.c.b16 %v2939, %v2938
      %v2958 = vpack.c.b16 %v2941, %v2940
      %v2959 = vpack.c.b16 %v2942, %v2942
      %v2961 = vshrl.u32 %v2943, 16
      %v2963 = vshll.u32 %v2943, 16
      %v2965 = vrot.slane %v2963, 1
      %v2966 = vor.u32 %v2961, %v2965
      %v2968 = vshll.u32 %v2944, 16
      %v2970 = vrot.slane %v2968, 1
      %v2971 = vsel %vm2450, %v2966, %v2970
      %v2972 = vshrl.u32 %v2944, 16
      %v2974 = vor.u32 %v2972, %v2970
      %v2976 = vshll.u32 %v2945, 16
      %v2978 = vrot.slane %v2976, 1
      %v2979 = vsel %vm2450, %v2974, %v2978
      %v2980 = vshrl.u32 %v2945, 16
      %v2982 = vor.u32 %v2980, %v2978
      %v2984 = vshll.u32 %v2946, 16
      %v2986 = vrot.slane %v2984, 1
      %v2987 = vsel %vm2450, %v2982, %v2986
      %v2988 = vshrl.u32 %v2946, 16
      %v2990 = vor.u32 %v2988, %v2986
      %v2992 = vshll.u32 %v2947, 16
      %v2994 = vrot.slane %v2992, 1
      %v2995 = vsel %vm2450, %v2990, %v2994
      %v2996 = vshrl.u32 %v2947, 16
      %v2998 = vor.u32 %v2996, %v2994
      %v3000 = vshll.u32 %v2948, 16
      %v3002 = vrot.slane %v3000, 1
      %v3003 = vsel %vm2450, %v2998, %v3002
      %v3004 = vshrl.u32 %v2948, 16
      %v3006 = vor.u32 %v3004, %v3002
      %v3008 = vshll.u32 %v2949, 16
      %v3010 = vrot.slane %v3008, 1
      %v3011 = vsel %vm2450, %v3006, %v3010
      %v3012 = vshrl.u32 %v2949, 16
      %v3014 = vor.u32 %v3012, %v3010
      %v3016 = vshll.u32 %v2950, 16
      %v3018 = vrot.slane %v3016, 1
      %v3019 = vsel %vm2450, %v3014, %v3018
      %v3020 = vshrl.u32 %v2950, 16
      %v3022 = vor.u32 %v3020, %v3018
      %v3024 = vshll.u32 %v2951, 16
      %v3026 = vrot.slane %v3024, 1
      %v3027 = vsel %vm2450, %v3022, %v3026
      %v3028 = vshrl.u32 %v2951, 16
      %v3030 = vor.u32 %v3028, %v3026
      %v3032 = vshll.u32 %v2952, 16
      %v3034 = vrot.slane %v3032, 1
      %v3035 = vsel %vm2450, %v3030, %v3034
      %v3036 = vshrl.u32 %v2952, 16
      %v3038 = vor.u32 %v3036, %v3034
      %v3040 = vshll.u32 %v2953, 16
      %v3042 = vrot.slane %v3040, 1
      %v3043 = vsel %vm2450, %v3038, %v3042
      %v3044 = vshrl.u32 %v2953, 16
      %v3046 = vor.u32 %v3044, %v3042
      %v3048 = vshll.u32 %v2954, 16
      %v3050 = vrot.slane %v3048, 1
      %v3051 = vsel %vm2450, %v3046, %v3050
      %v3052 = vshrl.u32 %v2954, 16
      %v3054 = vor.u32 %v3052, %v3050
      %v3056 = vshll.u32 %v2955, 16
      %v3058 = vrot.slane %v3056, 1
      %v3059 = vsel %vm2450, %v3054, %v3058
      %v3060 = vshrl.u32 %v2955, 16
      %v3062 = vor.u32 %v3060, %v3058
      %v3064 = vshll.u32 %v2956, 16
      %v3066 = vrot.slane %v3064, 1
      %v3067 = vsel %vm2450, %v3062, %v3066
      %v3068 = vshrl.u32 %v2956, 16
      %v3070 = vor.u32 %v3068, %v3066
      %v3072 = vshll.u32 %v2957, 16
      %v3074 = vrot.slane %v3072, 1
      %v3075 = vsel %vm2450, %v3070, %v3074
      %v3076 = vshrl.u32 %v2957, 16
      %v3078 = vor.u32 %v3076, %v3074
      %v3080 = vshll.u32 %v2958, 16
      %v3082 = vrot.slane %v3080, 1
      %v3083 = vsel %vm2450, %v3078, %v3082
      %v3084 = vshrl.u32 %v2958, 16
      %v3086 = vor.u32 %v3084, %v3082
      %v3088 = vshll.u32 %v2959, 16
      %v3090 = vrot.slane %v3088, 1
      %v3091 = vsel %vm2450, %v3086, %v3090
      %v3093 = vsel %vm1160, %v2971, 0
      %v3096 = vsel %vm1160, %v2979, 0
      %v3099 = vsel %vm1160, %v2987, 0
      %v3102 = vsel %vm1160, %v2995, 0
      %v3105 = vsel %vm1160, %v3003, 0
      %v3108 = vsel %vm1160, %v3011, 0
      %v3111 = vsel %vm1160, %v3019, 0
      %v3114 = vsel %vm1160, %v3027, 0
      %v3117 = vsel %vm1160, %v3035, 0
      %v3120 = vsel %vm1160, %v3043, 0
      %v3123 = vsel %vm1160, %v3051, 0
      %v3126 = vsel %vm1160, %v3059, 0
      %v3129 = vsel %vm1160, %v3067, 0
      %v3132 = vsel %vm1160, %v3075, 0
      %v3135 = vsel %vm1160, %v3083, 0
      %v3138 = vsel %vm1160, %v3091, 0
      %v3141 = vsel %vm1209, %v2876, 0
      %3143 = vmatpush.bf16.msra.mxu0 0
      %3144 = vmatpush.bf16.msra.mxu0 0
      %3145 = vmatpush.bf16.msra.mxu0 0
      %3146 = vmatpush.bf16.msra.mxu0 0
      %3147 = vmatpush.bf16.msra.mxu0 0
      %3148 = vmatpush.bf16.msra.mxu0 0
      %3149 = vmatpush.bf16.msra.mxu0 0
      %3150 = vmatpush.bf16.msra.mxu0 %v3141
      %3151 = vmatmul.bf16.gmra.mxu0 %v3093
      %v3152 = vpop.f32.mrf.mxu0
      %v3153 = vadd.f32 0.0, %v3152
      %v3154 = vpop.f32.mrf.mxu0
      %v3155 = vadd.f32 0.0, %v3154
      %3156 = vmatmul.bf16.gmra.mxu0 %v3096
      %v3157 = vpop.f32.mrf.mxu0
      %v3158 = vadd.f32 0.0, %v3157
      %v3159 = vpop.f32.mrf.mxu0
      %v3160 = vadd.f32 0.0, %v3159
      %3161 = vmatmul.bf16.gmra.mxu0 %v3099
      %v3162 = vpop.f32.mrf.mxu0
      %v3163 = vadd.f32 0.0, %v3162
      %v3164 = vpop.f32.mrf.mxu0
      %v3165 = vadd.f32 0.0, %v3164
      %3166 = vmatmul.bf16.gmra.mxu0 %v3102
      %v3167 = vpop.f32.mrf.mxu0
      %v3168 = vadd.f32 0.0, %v3167
      %v3169 = vpop.f32.mrf.mxu0
      %v3170 = vadd.f32 0.0, %v3169
      %3171 = vmatmul.bf16.gmra.mxu0 %v3105
      %v3172 = vpop.f32.mrf.mxu0
      %v3173 = vadd.f32 0.0, %v3172
      %v3174 = vpop.f32.mrf.mxu0
      %v3175 = vadd.f32 0.0, %v3174
      %3176 = vmatmul.bf16.gmra.mxu0 %v3108
      %v3177 = vpop.f32.mrf.mxu0
      %v3178 = vadd.f32 0.0, %v3177
      %v3179 = vpop.f32.mrf.mxu0
      %v3180 = vadd.f32 0.0, %v3179
      %3181 = vmatmul.bf16.gmra.mxu0 %v3111
      %v3182 = vpop.f32.mrf.mxu0
      %v3183 = vadd.f32 0.0, %v3182
      %v3184 = vpop.f32.mrf.mxu0
      %v3185 = vadd.f32 0.0, %v3184
      %3186 = vmatmul.bf16.gmra.mxu0 %v3114
      %v3187 = vpop.f32.mrf.mxu0
      %v3188 = vadd.f32 0.0, %v3187
      %v3189 = vpop.f32.mrf.mxu0
      %v3190 = vadd.f32 0.0, %v3189
      %3191 = vmatmul.bf16.gmra.mxu0 %v3117
      %v3192 = vpop.f32.mrf.mxu0
      %v3193 = vadd.f32 0.0, %v3192
      %v3194 = vpop.f32.mrf.mxu0
      %v3195 = vadd.f32 0.0, %v3194
      %3196 = vmatmul.bf16.gmra.mxu0 %v3120
      %v3197 = vpop.f32.mrf.mxu0
      %v3198 = vadd.f32 0.0, %v3197
      %v3199 = vpop.f32.mrf.mxu0
      %v3200 = vadd.f32 0.0, %v3199
      %3201 = vmatmul.bf16.gmra.mxu0 %v3123
      %v3202 = vpop.f32.mrf.mxu0
      %v3203 = vadd.f32 0.0, %v3202
      %v3204 = vpop.f32.mrf.mxu0
      %v3205 = vadd.f32 0.0, %v3204
      %3206 = vmatmul.bf16.gmra.mxu0 %v3126
      %v3207 = vpop.f32.mrf.mxu0
      %v3208 = vadd.f32 0.0, %v3207
      %v3209 = vpop.f32.mrf.mxu0
      %v3210 = vadd.f32 0.0, %v3209
      %3211 = vmatmul.bf16.gmra.mxu0 %v3129
      %v3212 = vpop.f32.mrf.mxu0
      %v3213 = vadd.f32 0.0, %v3212
      %v3214 = vpop.f32.mrf.mxu0
      %v3215 = vadd.f32 0.0, %v3214
      %3216 = vmatmul.bf16.gmra.mxu0 %v3132
      %v3217 = vpop.f32.mrf.mxu0
      %v3218 = vadd.f32 0.0, %v3217
      %v3219 = vpop.f32.mrf.mxu0
      %v3220 = vadd.f32 0.0, %v3219
      %3221 = vmatmul.bf16.gmra.mxu0 %v3135
      %v3222 = vpop.f32.mrf.mxu0
      %v3223 = vadd.f32 0.0, %v3222
      %v3224 = vpop.f32.mrf.mxu0
      %v3225 = vadd.f32 0.0, %v3224
      %3226 = vmatmul.bf16.gmra.mxu0 %v3138
      %v3227 = vpop.f32.mrf.mxu0
      %v3228 = vadd.f32 0.0, %v3227
      %v3229 = vpop.f32.mrf.mxu0
      %v3230 = vadd.f32 0.0, %v3229
      %3231 = vdwg.mxu0
      %v3232 = vadd.f32 %v2763, %v3153
      %v3233 = vadd.f32 %v2765, %v3155
      %v3234 = vadd.f32 %v2768, %v3158
      %v3235 = vadd.f32 %v2770, %v3160
      %v3236 = vadd.f32 %v2773, %v3163
      %v3237 = vadd.f32 %v2775, %v3165
      %v3238 = vadd.f32 %v2778, %v3168
      %v3239 = vadd.f32 %v2780, %v3170
      %v3240 = vadd.f32 %v2783, %v3173
      %v3241 = vadd.f32 %v2785, %v3175
      %v3242 = vadd.f32 %v2788, %v3178
      %v3243 = vadd.f32 %v2790, %v3180
      %v3244 = vadd.f32 %v2793, %v3183
      %v3245 = vadd.f32 %v2795, %v3185
      %v3246 = vadd.f32 %v2798, %v3188
      %v3247 = vadd.f32 %v2800, %v3190
      %v3248 = vadd.f32 %v2803, %v3193
      %v3249 = vadd.f32 %v2805, %v3195
      %v3250 = vadd.f32 %v2808, %v3198
      %v3251 = vadd.f32 %v2810, %v3200
      %v3252 = vadd.f32 %v2813, %v3203
      %v3253 = vadd.f32 %v2815, %v3205
      %v3254 = vadd.f32 %v2818, %v3208
      %v3255 = vadd.f32 %v2820, %v3210
      %v3256 = vadd.f32 %v2823, %v3213
      %v3257 = vadd.f32 %v2825, %v3215
      %v3258 = vadd.f32 %v2828, %v3218
      %v3259 = vadd.f32 %v2830, %v3220
      %v3260 = vadd.f32 %v2833, %v3223
      %v3261 = vadd.f32 %v2835, %v3225
      %v3262 = vadd.f32 %v2838, %v3228
      %v3263 = vadd.f32 %v2840, %v3230
      %v3264 = vmul.f32 %v757, %v1849
      %v3265 = vmul.f32 %v758, %v1850
      %v3266 = vmul.f32 %v759, %v1851
      %v3267 = vmul.f32 %v760, %v1852
      %v3268 = vmul.f32 %v761, %v1853
      %v3269 = vmul.f32 %v762, %v1854
      %v3270 = vmul.f32 %v763, %v1855
      %v3271 = vmul.f32 %v764, %v1856
      %v3272 = vmul.f32 %v765, %v1857
      %v3273 = vmul.f32 %v766, %v1858
      %v3274 = vmul.f32 %v767, %v1859
      %v3275 = vmul.f32 %v768, %v1860
      %v3276 = vmul.f32 %v769, %v1861
      %v3277 = vmul.f32 %v770, %v1862
      %v3278 = vmul.f32 %v771, %v1863
      %v3279 = vmul.f32 %v772, %v1864
      %v3280 = vmul.f32 %v773, %v1865
      %v3281 = vmul.f32 %v774, %v1866
      %v3282 = vmul.f32 %v775, %v1867
      %v3283 = vmul.f32 %v776, %v1868
      %v3284 = vmul.f32 %v777, %v1869
      %v3285 = vmul.f32 %v778, %v1870
      %v3286 = vmul.f32 %v779, %v1871
      %v3287 = vmul.f32 %v780, %v1872
      %v3288 = vmul.f32 %v781, %v1873
      %v3289 = vmul.f32 %v782, %v1874
      %v3290 = vmul.f32 %v783, %v1875
      %v3291 = vmul.f32 %v784, %v1876
      %v3292 = vmul.f32 %v785, %v1877
      %v3293 = vmul.f32 %v786, %v1878
      %v3294 = vmul.f32 %v787, %v1879
      %v3295 = vmul.f32 %v788, %v1880
      %v3296 = vadd.f32 %v3264, %v2295
      %v3297 = vadd.f32 %v3265, %v2296
      %v3298 = vadd.f32 %v3266, %v2297
      %v3299 = vadd.f32 %v3267, %v2298
      %v3300 = vadd.f32 %v3268, %v2299
      %v3301 = vadd.f32 %v3269, %v2300
      %v3302 = vadd.f32 %v3270, %v2301
      %v3303 = vadd.f32 %v3271, %v2302
      %v3304 = vadd.f32 %v3272, %v2303
      %v3305 = vadd.f32 %v3273, %v2304
      %v3306 = vadd.f32 %v3274, %v2305
      %v3307 = vadd.f32 %v3275, %v2306
      %v3308 = vadd.f32 %v3276, %v2307
      %v3309 = vadd.f32 %v3277, %v2308
      %v3310 = vadd.f32 %v3278, %v2309
      %v3311 = vadd.f32 %v3279, %v2310
      %v3312 = vadd.f32 %v3280, %v2311
      %v3313 = vadd.f32 %v3281, %v2312
      %v3314 = vadd.f32 %v3282, %v2313
      %v3315 = vadd.f32 %v3283, %v2314
      %v3316 = vadd.f32 %v3284, %v2315
      %v3317 = vadd.f32 %v3285, %v2316
      %v3318 = vadd.f32 %v3286, %v2317
      %v3319 = vadd.f32 %v3287, %v2318
      %v3320 = vadd.f32 %v3288, %v2319
      %v3321 = vadd.f32 %v3289, %v2320
      %v3322 = vadd.f32 %v3290, %v2321
      %v3323 = vadd.f32 %v3291, %v2322
      %v3324 = vadd.f32 %v3292, %v2323
      %v3325 = vadd.f32 %v3293, %v2324
      %v3326 = vadd.f32 %v3294, %v2325
      %v3327 = vadd.f32 %v3295, %v2326
      %v3328 = vmul.f32 %v853, %v3232
      %v3329 = vmul.f32 %v854, %v3233
      %v3330 = vmul.f32 %v855, %v3234
      %v3331 = vmul.f32 %v856, %v3235
      %v3332 = vmul.f32 %v857, %v3236
      %v3333 = vmul.f32 %v858, %v3237
      %v3334 = vmul.f32 %v859, %v3238
      %v3335 = vmul.f32 %v860, %v3239
      %v3336 = vmul.f32 %v861, %v3240
      %v3337 = vmul.f32 %v862, %v3241
      %v3338 = vmul.f32 %v863, %v3242
      %v3339 = vmul.f32 %v864, %v3243
      %v3340 = vmul.f32 %v865, %v3244
      %v3341 = vmul.f32 %v866, %v3245
      %v3342 = vmul.f32 %v867, %v3246
      %v3343 = vmul.f32 %v868, %v3247
      %v3344 = vmul.f32 %v869, %v3248
      %v3345 = vmul.f32 %v870, %v3249
      %v3346 = vmul.f32 %v871, %v3250
      %v3347 = vmul.f32 %v872, %v3251
      %v3348 = vmul.f32 %v873, %v3252
      %v3349 = vmul.f32 %v874, %v3253
      %v3350 = vmul.f32 %v875, %v3254
      %v3351 = vmul.f32 %v876, %v3255
      %v3352 = vmul.f32 %v877, %v3256
      %v3353 = vmul.f32 %v878, %v3257
      %v3354 = vmul.f32 %v879, %v3258
      %v3355 = vmul.f32 %v880, %v3259
      %v3356 = vmul.f32 %v881, %v3260
      %v3357 = vmul.f32 %v882, %v3261
      %v3358 = vmul.f32 %v883, %v3262
      %v3359 = vmul.f32 %v884, %v3263
      %v3360 = vadd.f32 %v3296, %v3328
      %v3361 = vadd.f32 %v3297, %v3329
      %v3362 = vadd.f32 %v3298, %v3330
      %v3363 = vadd.f32 %v3299, %v3331
      %v3364 = vadd.f32 %v3300, %v3332
      %v3365 = vadd.f32 %v3301, %v3333
      %v3366 = vadd.f32 %v3302, %v3334
      %v3367 = vadd.f32 %v3303, %v3335
      %v3368 = vadd.f32 %v3304, %v3336
      %v3369 = vadd.f32 %v3305, %v3337
      %v3370 = vadd.f32 %v3306, %v3338
      %v3371 = vadd.f32 %v3307, %v3339
      %v3372 = vadd.f32 %v3308, %v3340
      %v3373 = vadd.f32 %v3309, %v3341
      %v3374 = vadd.f32 %v3310, %v3342
      %v3375 = vadd.f32 %v3311, %v3343
      %v3376 = vadd.f32 %v3312, %v3344
      %v3377 = vadd.f32 %v3313, %v3345
      %v3378 = vadd.f32 %v3314, %v3346
      %v3379 = vadd.f32 %v3315, %v3347
      %v3380 = vadd.f32 %v3316, %v3348
      %v3381 = vadd.f32 %v3317, %v3349
      %v3382 = vadd.f32 %v3318, %v3350
      %v3383 = vadd.f32 %v3319, %v3351
      %v3384 = vadd.f32 %v3320, %v3352
      %v3385 = vadd.f32 %v3321, %v3353
      %v3386 = vadd.f32 %v3322, %v3354
      %v3387 = vadd.f32 %v3323, %v3355
      %v3388 = vadd.f32 %v3324, %v3356
      %v3389 = vadd.f32 %v3325, %v3357
      %v3390 = vadd.f32 %v3326, %v3358
      %v3391 = vadd.f32 %v3327, %v3359
      %v3392 = vld [vmem:[%s3] sm:$0x1]
      %v3393 = vperm.slane %v3392, 0
      %v3394 = vadd.f32 %v3360, %v3393
      %v3395 = vadd.f32 %v3361, %v3393
      %v3396 = vadd.f32 %v3362, %v3393
      %v3397 = vadd.f32 %v3363, %v3393
      %v3398 = vadd.f32 %v3364, %v3393
      %v3399 = vadd.f32 %v3365, %v3393
      %v3400 = vadd.f32 %v3366, %v3393
      %v3401 = vadd.f32 %v3367, %v3393
      %v3402 = vadd.f32 %v3368, %v3393
      %v3403 = vadd.f32 %v3369, %v3393
      %v3404 = vadd.f32 %v3370, %v3393
      %v3405 = vadd.f32 %v3371, %v3393
      %v3406 = vadd.f32 %v3372, %v3393
      %v3407 = vadd.f32 %v3373, %v3393
      %v3408 = vadd.f32 %v3374, %v3393
      %v3409 = vadd.f32 %v3375, %v3393
      %v3410 = vadd.f32 %v3376, %v3393
      %v3411 = vadd.f32 %v3377, %v3393
      %v3412 = vadd.f32 %v3378, %v3393
      %v3413 = vadd.f32 %v3379, %v3393
      %v3414 = vadd.f32 %v3380, %v3393
      %v3415 = vadd.f32 %v3381, %v3393
      %v3416 = vadd.f32 %v3382, %v3393
      %v3417 = vadd.f32 %v3383, %v3393
      %v3418 = vadd.f32 %v3384, %v3393
      %v3419 = vadd.f32 %v3385, %v3393
      %v3420 = vadd.f32 %v3386, %v3393
      %v3421 = vadd.f32 %v3387, %v3393
      %v3422 = vadd.f32 %v3388, %v3393
      %v3423 = vadd.f32 %v3389, %v3393
      %v3424 = vadd.f32 %v3390, %v3393
      %v3425 = vadd.f32 %v3391, %v3393
      %v3426 = vmax.f32 %v3394, 0.0
      %v3427 = vmax.f32 %v3395, 0.0
      %v3428 = vmax.f32 %v3396, 0.0
      %v3429 = vmax.f32 %v3397, 0.0
      %v3430 = vmax.f32 %v3398, 0.0
      %v3431 = vmax.f32 %v3399, 0.0
      %v3432 = vmax.f32 %v3400, 0.0
      %v3433 = vmax.f32 %v3401, 0.0
      %v3434 = vmax.f32 %v3402, 0.0
      %v3435 = vmax.f32 %v3403, 0.0
      %v3436 = vmax.f32 %v3404, 0.0
      %v3437 = vmax.f32 %v3405, 0.0
      %v3438 = vmax.f32 %v3406, 0.0
      %v3439 = vmax.f32 %v3407, 0.0
      %v3440 = vmax.f32 %v3408, 0.0
      %v3441 = vmax.f32 %v3409, 0.0
      %v3442 = vmax.f32 %v3410, 0.0
      %v3443 = vmax.f32 %v3411, 0.0
      %v3444 = vmax.f32 %v3412, 0.0
      %v3445 = vmax.f32 %v3413, 0.0
      %v3446 = vmax.f32 %v3414, 0.0
      %v3447 = vmax.f32 %v3415, 0.0
      %v3448 = vmax.f32 %v3416, 0.0
      %v3449 = vmax.f32 %v3417, 0.0
      %v3450 = vmax.f32 %v3418, 0.0
      %v3451 = vmax.f32 %v3419, 0.0
      %v3452 = vmax.f32 %v3420, 0.0
      %v3453 = vmax.f32 %v3421, 0.0
      %v3454 = vmax.f32 %v3422, 0.0
      %v3455 = vmax.f32 %v3423, 0.0
      %v3456 = vmax.f32 %v3424, 0.0
      %v3457 = vmax.f32 %v3425, 0.0
      %v3458 = vpack.c.bf16 %v3426, %v3426
      %v3459 = vpack.c.bf16 %v3427, %v3427
      %v3460 = vpack.c.bf16 %v3428, %v3428
      %v3461 = vpack.c.bf16 %v3429, %v3429
      %v3462 = vpack.c.bf16 %v3430, %v3430
      %v3463 = vpack.c.bf16 %v3431, %v3431
      %v3464 = vpack.c.bf16 %v3432, %v3432
      %v3465 = vpack.c.bf16 %v3433, %v3433
      %v3466 = vpack.c.bf16 %v3434, %v3434
      %v3467 = vpack.c.bf16 %v3435, %v3435
      %v3468 = vpack.c.bf16 %v3436, %v3436
      %v3469 = vpack.c.bf16 %v3437, %v3437
      %v3470 = vpack.c.bf16 %v3438, %v3438
      %v3471 = vpack.c.bf16 %v3439, %v3439
      %v3472 = vpack.c.bf16 %v3440, %v3440
      %v3473 = vpack.c.bf16 %v3441, %v3441
      %v3474 = vpack.c.bf16 %v3442, %v3442
      %v3475 = vpack.c.bf16 %v3443, %v3443
      %v3476 = vpack.c.bf16 %v3444, %v3444
      %v3477 = vpack.c.bf16 %v3445, %v3445
      %v3478 = vpack.c.bf16 %v3446, %v3446
      %v3479 = vpack.c.bf16 %v3447, %v3447
      %v3480 = vpack.c.bf16 %v3448, %v3448
      %v3481 = vpack.c.bf16 %v3449, %v3449
      %v3482 = vpack.c.bf16 %v3450, %v3450
      %v3483 = vpack.c.bf16 %v3451, %v3451
      %v3484 = vpack.c.bf16 %v3452, %v3452
      %v3485 = vpack.c.bf16 %v3453, %v3453
      %v3486 = vpack.c.bf16 %v3454, %v3454
      %v3487 = vpack.c.bf16 %v3455, %v3455
      %v3488 = vpack.c.bf16 %v3456, %v3456
      %v3489 = vpack.c.bf16 %v3457, %v3457
      %3490 = vst.msk [vmem:[#allocation2 + $0x10] sm:$0xf] %vm199, %v3458
      %3491 = vst.msk [vmem:[#allocation2 + $0x14] sm:$0xf] %vm199, %v3459
      %3492 = vst.msk [vmem:[#allocation2 + $0x18] sm:$0xf] %vm199, %v3460
      %3493 = vst.msk [vmem:[#allocation2 + $0x1c] sm:$0xf] %vm199, %v3461
      %3494 = vst.msk [vmem:[#allocation2 + $0x20] sm:$0xf] %vm199, %v3462
      %3495 = vst.msk [vmem:[#allocation2 + $0x24] sm:$0xf] %vm199, %v3463
      %3496 = vst.msk [vmem:[#allocation2 + $0x28] sm:$0xf] %vm199, %v3464
      %3497 = vst.msk [vmem:[#allocation2 + $0x2c] sm:$0xf] %vm199, %v3465
      %3498 = vst.msk [vmem:[#allocation2 + $0x30] sm:$0xf] %vm199, %v3466
      %3499 = vst.msk [vmem:[#allocation2 + $0x34] sm:$0xf] %vm199, %v3467
      %3500 = vst.msk [vmem:[#allocation2 + $0x38] sm:$0xf] %vm199, %v3468
      %3501 = vst.msk [vmem:[#allocation2 + $0x3c] sm:$0xf] %vm199, %v3469
      %3502 = vst.msk [vmem:[#allocation2 + $0x40] sm:$0xf] %vm199, %v3470
      %3503 = vst.msk [vmem:[#allocation2 + $0x44] sm:$0xf] %vm199, %v3471
      %3504 = vst.msk [vmem:[#allocation2 + $0x48] sm:$0xf] %vm199, %v3472
      %3505 = vst.msk [vmem:[#allocation2 + $0x4c] sm:$0xf] %vm199, %v3473
      %3506 = vst.msk [vmem:[#allocation2 + $0x50] sm:$0xf] %vm199, %v3474
      %3507 = vst.msk [vmem:[#allocation2 + $0x54] sm:$0xf] %vm199, %v3475
      %3508 = vst.msk [vmem:[#allocation2 + $0x58] sm:$0xf] %vm199, %v3476
      %3509 = vst.msk [vmem:[#allocation2 + $0x5c] sm:$0xf] %vm199, %v3477
      %3510 = vst.msk [vmem:[#allocation2 + $0x60] sm:$0xf] %vm199, %v3478
      %3511 = vst.msk [vmem:[#allocation2 + $0x64] sm:$0xf] %vm199, %v3479
      %3512 = vst.msk [vmem:[#allocation2 + $0x68] sm:$0xf] %vm199, %v3480
      %3513 = vst.msk [vmem:[#allocation2 + $0x6c] sm:$0xf] %vm199, %v3481
      %3514 = vst.msk [vmem:[#allocation2 + $0x70] sm:$0xf] %vm199, %v3482
      %3515 = vst.msk [vmem:[#allocation2 + $0x74] sm:$0xf] %vm199, %v3483
      %3516 = vst.msk [vmem:[#allocation2 + $0x78] sm:$0xf] %vm199, %v3484
      %3517 = vst.msk [vmem:[#allocation2 + $0x7c] sm:$0xf] %vm199, %v3485
      %3518 = vst.msk [vmem:[#allocation2 + $0x80] sm:$0xf] %vm199, %v3486
      %3519 = vst.msk [vmem:[#allocation2 + $0x84] sm:$0xf] %vm199, %v3487
      %3520 = vst.msk [vmem:[#allocation2 + $0x88] sm:$0xf] %vm199, %v3488
      %3521 = vst.msk [vmem:[#allocation2 + $0x8c] sm:$0xf] %vm199, %v3489
      %v3522 = vld [vmem:[#allocation2 + $0x4] sm:$0x8]
      %v3523 = vld [vmem:[#allocation2 + $0x8] sm:$0xf]
      %v3524 = vld [vmem:[#allocation2 + $0xc] sm:$0xf]
      %v3525 = vld [vmem:[#allocation2 + $0x10] sm:$0xf]
      %v3526 = vld [vmem:[#allocation2 + $0x14] sm:$0xf]
      %v3527 = vld [vmem:[#allocation2 + $0x18] sm:$0xf]
      %v3528 = vld [vmem:[#allocation2 + $0x1c] sm:$0xf]
      %v3529 = vld [vmem:[#allocation2 + $0x20] sm:$0xf]
      %v3530 = vld [vmem:[#allocation2 + $0x24] sm:$0xf]
      %v3531 = vld [vmem:[#allocation2 + $0x28] sm:$0xf]
      %v3532 = vld [vmem:[#allocation2 + $0x2c] sm:$0xf]
      %v3533 = vld [vmem:[#allocation2 + $0x30] sm:$0xf]
      %v3534 = vld [vmem:[#allocation2 + $0x34] sm:$0xf]
      %v3535 = vld [vmem:[#allocation2 + $0x38] sm:$0xf]
      %v3536 = vld [vmem:[#allocation2 + $0x3c] sm:$0xf]
      %v3537 = vld [vmem:[#allocation2 + $0x40] sm:$0xf]
      %v3538 = vld [vmem:[#allocation2 + $0x44] sm:$0xf]
      %v3539 = vld [vmem:[#allocation2 + $0x48] sm:$0xf]
      %v3540 = vld [vmem:[#allocation2 + $0x4c] sm:$0xf]
      %v3541 = vld [vmem:[#allocation2 + $0x50] sm:$0xf]
      %v3542 = vld [vmem:[#allocation2 + $0x54] sm:$0xf]
      %v3543 = vld [vmem:[#allocation2 + $0x58] sm:$0xf]
      %v3544 = vld [vmem:[#allocation2 + $0x5c] sm:$0xf]
      %v3545 = vld [vmem:[#allocation2 + $0x60] sm:$0xf]
      %v3546 = vld [vmem:[#allocation2 + $0x64] sm:$0xf]
      %v3547 = vld [vmem:[#allocation2 + $0x68] sm:$0xf]
      %v3548 = vld [vmem:[#allocation2 + $0x6c] sm:$0xf]
      %v3549 = vld [vmem:[#allocation2 + $0x70] sm:$0xf]
      %v3550 = vld [vmem:[#allocation2 + $0x74] sm:$0xf]
      %v3551 = vld [vmem:[#allocation2 + $0x78] sm:$0xf]
      %v3552 = vld [vmem:[#allocation2 + $0x7c] sm:$0xf]
      %v3553 = vld [vmem:[#allocation2 + $0x80] sm:$0xf]
      %v3554 = vld [vmem:[#allocation2 + $0x84] sm:$0xf]
      %v3555 = vld [vmem:[%s2] sm:$0x3]
      %v3556 = vld [vmem:[#allocation2 + $0xc] sm:$0x8]
      %v3557 = vld [vmem:[#allocation2 + $0x88] sm:$0xf]
      %v3558 = vld [vmem:[#allocation2 + $0x8c] sm:$0xf]
      %s3559 = scalar_lea.vmem %s2, 6
      %v3560 = vld [vmem:[%s3559] sm:$0x3]
      %v3594 = vunpack.c.l.b16 %v3556
      %v3595 = vunpack.c.l.b16 %v3525
      %v3596 = vunpack.c.l.b16 %v3526
      %v3597 = vunpack.c.l.b16 %v3527
      %v3598 = vunpack.c.l.b16 %v3528
      %v3599 = vunpack.c.l.b16 %v3529
      %v3600 = vunpack.c.l.b16 %v3530
      %v3601 = vunpack.c.l.b16 %v3531
      %v3602 = vunpack.c.l.b16 %v3532
      %v3603 = vunpack.c.l.b16 %v3533
      %v3604 = vunpack.c.l.b16 %v3534
      %v3605 = vunpack.c.l.b16 %v3535
      %v3606 = vunpack.c.l.b16 %v3536
      %v3607 = vunpack.c.l.b16 %v3537
      %v3608 = vunpack.c.l.b16 %v3538
      %v3609 = vunpack.c.l.b16 %v3539
      %v3610 = vunpack.c.l.b16 %v3540
      %v3611 = vunpack.c.l.b16 %v3541
      %v3612 = vunpack.c.l.b16 %v3542
      %v3613 = vunpack.c.l.b16 %v3543
      %v3614 = vunpack.c.l.b16 %v3544
      %v3615 = vunpack.c.l.b16 %v3545
      %v3616 = vunpack.c.l.b16 %v3546
      %v3617 = vunpack.c.l.b16 %v3547
      %v3618 = vunpack.c.l.b16 %v3548
      %v3619 = vunpack.c.l.b16 %v3549
      %v3620 = vunpack.c.l.b16 %v3550
      %v3621 = vunpack.c.l.b16 %v3551
      %v3622 = vunpack.c.l.b16 %v3552
      %v3623 = vunpack.c.l.b16 %v3553
      %v3624 = vunpack.c.l.b16 %v3554
      %v3625 = vunpack.c.l.b16 %v3557
      %v3626 = vunpack.c.l.b16 %v3558
      %v3627 = vpack.c.b16 %v3595, %v3594
      %v3628 = vpack.c.b16 %v3597, %v3596
      %v3629 = vpack.c.b16 %v3599, %v3598
      %v3630 = vpack.c.b16 %v3601, %v3600
      %v3631 = vpack.c.b16 %v3603, %v3602
      %v3632 = vpack.c.b16 %v3605, %v3604
      %v3633 = vpack.c.b16 %v3607, %v3606
      %v3634 = vpack.c.b16 %v3609, %v3608
      %v3635 = vpack.c.b16 %v3611, %v3610
      %v3636 = vpack.c.b16 %v3613, %v3612
      %v3637 = vpack.c.b16 %v3615, %v3614
      %v3638 = vpack.c.b16 %v3617, %v3616
      %v3639 = vpack.c.b16 %v3619, %v3618
      %v3640 = vpack.c.b16 %v3621, %v3620
      %v3641 = vpack.c.b16 %v3623, %v3622
      %v3642 = vpack.c.b16 %v3625, %v3624
      %v3643 = vpack.c.b16 %v3626, %v3626
      %v3645 = vshrl.u32 %v3627, 16
      %v3647 = vrot.slane %v3645, 3
      %v3648 = vshll.u32 %v3627, 16
      %v3650 = vrot.slane %v3648, 4
      %v3651 = vor.u32 %v3647, %v3650
      %v3653 = vshrl.u32 %v3628, 16
      %v3655 = vrot.slane %v3653, 3
      %v3656 = vshll.u32 %v3628, 16
      %v3658 = vrot.slane %v3656, 4
      %v3659 = vor.u32 %v3655, %v3658
      %v3660 = vsel %vm1007, %v3651, %v3659
      %v3662 = vshrl.u32 %v3629, 16
      %v3664 = vrot.slane %v3662, 3
      %v3665 = vshll.u32 %v3629, 16
      %v3667 = vrot.slane %v3665, 4
      %v3668 = vor.u32 %v3664, %v3667
      %v3669 = vsel %vm1007, %v3659, %v3668
      %v3671 = vshrl.u32 %v3630, 16
      %v3673 = vrot.slane %v3671, 3
      %v3674 = vshll.u32 %v3630, 16
      %v3676 = vrot.slane %v3674, 4
      %v3677 = vor.u32 %v3673, %v3676
      %v3678 = vsel %vm1007, %v3668, %v3677
      %v3680 = vshrl.u32 %v3631, 16
      %v3682 = vrot.slane %v3680, 3
      %v3683 = vshll.u32 %v3631, 16
      %v3685 = vrot.slane %v3683, 4
      %v3686 = vor.u32 %v3682, %v3685
      %v3687 = vsel %vm1007, %v3677, %v3686
      %v3689 = vshrl.u32 %v3632, 16
      %v3691 = vrot.slane %v3689, 3
      %v3692 = vshll.u32 %v3632, 16
      %v3694 = vrot.slane %v3692, 4
      %v3695 = vor.u32 %v3691, %v3694
      %v3696 = vsel %vm1007, %v3686, %v3695
      %v3698 = vshrl.u32 %v3633, 16
      %v3700 = vrot.slane %v3698, 3
      %v3701 = vshll.u32 %v3633, 16
      %v3703 = vrot.slane %v3701, 4
      %v3704 = vor.u32 %v3700, %v3703
      %v3705 = vsel %vm1007, %v3695, %v3704
      %v3707 = vshrl.u32 %v3634, 16
      %v3709 = vrot.slane %v3707, 3
      %v3710 = vshll.u32 %v3634, 16
      %v3712 = vrot.slane %v3710, 4
      %v3713 = vor.u32 %v3709, %v3712
      %v3714 = vsel %vm1007, %v3704, %v3713
      %v3716 = vshrl.u32 %v3635, 16
      %v3718 = vrot.slane %v3716, 3
      %v3719 = vshll.u32 %v3635, 16
      %v3721 = vrot.slane %v3719, 4
      %v3722 = vor.u32 %v3718, %v3721
      %v3723 = vsel %vm1007, %v3713, %v3722
      %v3725 = vshrl.u32 %v3636, 16
      %v3727 = vrot.slane %v3725, 3
      %v3728 = vshll.u32 %v3636, 16
      %v3730 = vrot.slane %v3728, 4
      %v3731 = vor.u32 %v3727, %v3730
      %v3732 = vsel %vm1007, %v3722, %v3731
      %v3734 = vshrl.u32 %v3637, 16
      %v3736 = vrot.slane %v3734, 3
      %v3737 = vshll.u32 %v3637, 16
      %v3739 = vrot.slane %v3737, 4
      %v3740 = vor.u32 %v3736, %v3739
      %v3741 = vsel %vm1007, %v3731, %v3740
      %v3743 = vshrl.u32 %v3638, 16
      %v3745 = vrot.slane %v3743, 3
      %v3746 = vshll.u32 %v3638, 16
      %v3748 = vrot.slane %v3746, 4
      %v3749 = vor.u32 %v3745, %v3748
      %v3750 = vsel %vm1007, %v3740, %v3749
      %v3752 = vshrl.u32 %v3639, 16
      %v3754 = vrot.slane %v3752, 3
      %v3755 = vshll.u32 %v3639, 16
      %v3757 = vrot.slane %v3755, 4
      %v3758 = vor.u32 %v3754, %v3757
      %v3759 = vsel %vm1007, %v3749, %v3758
      %v3761 = vshrl.u32 %v3640, 16
      %v3763 = vrot.slane %v3761, 3
      %v3764 = vshll.u32 %v3640, 16
      %v3766 = vrot.slane %v3764, 4
      %v3767 = vor.u32 %v3763, %v3766
      %v3768 = vsel %vm1007, %v3758, %v3767
      %v3770 = vshrl.u32 %v3641, 16
      %v3772 = vrot.slane %v3770, 3
      %v3773 = vshll.u32 %v3641, 16
      %v3775 = vrot.slane %v3773, 4
      %v3776 = vor.u32 %v3772, %v3775
      %v3777 = vsel %vm1007, %v3767, %v3776
      %v3779 = vshrl.u32 %v3642, 16
      %v3781 = vrot.slane %v3779, 3
      %v3782 = vshll.u32 %v3642, 16
      %v3784 = vrot.slane %v3782, 4
      %v3785 = vor.u32 %v3781, %v3784
      %v3786 = vsel %vm1007, %v3776, %v3785
      %v3788 = vshrl.u32 %v3643, 16
      %v3790 = vrot.slane %v3788, 3
      %v3791 = vshll.u32 %v3643, 16
      %v3793 = vrot.slane %v3791, 4
      %v3794 = vor.u32 %v3790, %v3793
      %v3795 = vsel %vm1007, %v3785, %v3794
      %v3797 = vsel %vm1160, %v3660, 0
      %v3800 = vsel %vm1160, %v3669, 0
      %v3803 = vsel %vm1160, %v3678, 0
      %v3806 = vsel %vm1160, %v3687, 0
      %v3809 = vsel %vm1160, %v3696, 0
      %v3812 = vsel %vm1160, %v3705, 0
      %v3815 = vsel %vm1160, %v3714, 0
      %v3818 = vsel %vm1160, %v3723, 0
      %v3821 = vsel %vm1160, %v3732, 0
      %v3824 = vsel %vm1160, %v3741, 0
      %v3827 = vsel %vm1160, %v3750, 0
      %v3830 = vsel %vm1160, %v3759, 0
      %v3833 = vsel %vm1160, %v3768, 0
      %v3836 = vsel %vm1160, %v3777, 0
      %v3839 = vsel %vm1160, %v3786, 0
      %v3842 = vsel %vm1160, %v3795, 0
      %v3845 = vsel %vm1209, %v3560, 0
      %3847 = vmatpush.bf16.msra.mxu0 0
      %3848 = vmatpush.bf16.msra.mxu0 0
      %3849 = vmatpush.bf16.msra.mxu0 0
      %3850 = vmatpush.bf16.msra.mxu0 0
      %3851 = vmatpush.bf16.msra.mxu0 0
      %3852 = vmatpush.bf16.msra.mxu0 0
      %3853 = vmatpush.bf16.msra.mxu0 0
      %3854 = vmatpush.bf16.msra.mxu0 %v3845
      %3855 = vmatmul.bf16.gmra.mxu0 %v3797
      %v3856 = vpop.f32.mrf.mxu0
      %v3857 = vadd.f32 0.0, %v3856
      %v3858 = vpop.f32.mrf.mxu0
      %v3859 = vadd.f32 0.0, %v3858
      %3860 = vmatmul.bf16.gmra.mxu0 %v3800
      %v3861 = vpop.f32.mrf.mxu0
      %v3862 = vadd.f32 0.0, %v3861
      %v3863 = vpop.f32.mrf.mxu0
      %v3864 = vadd.f32 0.0, %v3863
      %3865 = vmatmul.bf16.gmra.mxu0 %v3803
      %v3866 = vpop.f32.mrf.mxu0
      %v3867 = vadd.f32 0.0, %v3866
      %v3868 = vpop.f32.mrf.mxu0
      %v3869 = vadd.f32 0.0, %v3868
      %3870 = vmatmul.bf16.gmra.mxu0 %v3806
      %v3871 = vpop.f32.mrf.mxu0
      %v3872 = vadd.f32 0.0, %v3871
      %v3873 = vpop.f32.mrf.mxu0
      %v3874 = vadd.f32 0.0, %v3873
      %3875 = vmatmul.bf16.gmra.mxu0 %v3809
      %v3876 = vpop.f32.mrf.mxu0
      %v3877 = vadd.f32 0.0, %v3876
      %v3878 = vpop.f32.mrf.mxu0
      %v3879 = vadd.f32 0.0, %v3878
      %3880 = vmatmul.bf16.gmra.mxu0 %v3812
      %v3881 = vpop.f32.mrf.mxu0
      %v3882 = vadd.f32 0.0, %v3881
      %v3883 = vpop.f32.mrf.mxu0
      %v3884 = vadd.f32 0.0, %v3883
      %3885 = vmatmul.bf16.gmra.mxu0 %v3815
      %v3886 = vpop.f32.mrf.mxu0
      %v3887 = vadd.f32 0.0, %v3886
      %v3888 = vpop.f32.mrf.mxu0
      %v3889 = vadd.f32 0.0, %v3888
      %3890 = vmatmul.bf16.gmra.mxu0 %v3818
      %v3891 = vpop.f32.mrf.mxu0
      %v3892 = vadd.f32 0.0, %v3891
      %v3893 = vpop.f32.mrf.mxu0
      %v3894 = vadd.f32 0.0, %v3893
      %3895 = vmatmul.bf16.gmra.mxu0 %v3821
      %v3896 = vpop.f32.mrf.mxu0
      %v3897 = vadd.f32 0.0, %v3896
      %v3898 = vpop.f32.mrf.mxu0
      %v3899 = vadd.f32 0.0, %v3898
      %3900 = vmatmul.bf16.gmra.mxu0 %v3824
      %v3901 = vpop.f32.mrf.mxu0
      %v3902 = vadd.f32 0.0, %v3901
      %v3903 = vpop.f32.mrf.mxu0
      %v3904 = vadd.f32 0.0, %v3903
      %3905 = vmatmul.bf16.gmra.mxu0 %v3827
      %v3906 = vpop.f32.mrf.mxu0
      %v3907 = vadd.f32 0.0, %v3906
      %v3908 = vpop.f32.mrf.mxu0
      %v3909 = vadd.f32 0.0, %v3908
      %3910 = vmatmul.bf16.gmra.mxu0 %v3830
      %v3911 = vpop.f32.mrf.mxu0
      %v3912 = vadd.f32 0.0, %v3911
      %v3913 = vpop.f32.mrf.mxu0
      %v3914 = vadd.f32 0.0, %v3913
      %3915 = vmatmul.bf16.gmra.mxu0 %v3833
      %v3916 = vpop.f32.mrf.mxu0
      %v3917 = vadd.f32 0.0, %v3916
      %v3918 = vpop.f32.mrf.mxu0
      %v3919 = vadd.f32 0.0, %v3918
      %3920 = vmatmul.bf16.gmra.mxu0 %v3836
      %v3921 = vpop.f32.mrf.mxu0
      %v3922 = vadd.f32 0.0, %v3921
      %v3923 = vpop.f32.mrf.mxu0
      %v3924 = vadd.f32 0.0, %v3923
      %3925 = vmatmul.bf16.gmra.mxu0 %v3839
      %v3926 = vpop.f32.mrf.mxu0
      %v3927 = vadd.f32 0.0, %v3926
      %v3928 = vpop.f32.mrf.mxu0
      %v3929 = vadd.f32 0.0, %v3928
      %3930 = vmatmul.bf16.gmra.mxu0 %v3842
      %v3931 = vpop.f32.mrf.mxu0
      %v3932 = vadd.f32 0.0, %v3931
      %v3933 = vpop.f32.mrf.mxu0
      %v3934 = vadd.f32 0.0, %v3933
      %3935 = vdwg.mxu0
      %v3939 = vunpack.c.l.b16 %v3522
      %v3940 = vunpack.c.l.b16 %v3523
      %v3941 = vunpack.c.l.b16 %v3524
      %v3942 = vpack.c.b16 %v3940, %v3939
      %v3943 = vpack.c.b16 %v3595, %v3941
      %v3944 = vpack.c.b16 %v3624, %v3624
      %v3946 = vshrl.u32 %v3942, 16
      %v3948 = vrot.slane %v3946, 3
      %v3949 = vshll.u32 %v3942, 16
      %v3951 = vrot.slane %v3949, 4
      %v3952 = vor.u32 %v3948, %v3951
      %v3954 = vshrl.u32 %v3943, 16
      %v3956 = vrot.slane %v3954, 3
      %v3957 = vshll.u32 %v3943, 16
      %v3959 = vrot.slane %v3957, 4
      %v3960 = vor.u32 %v3956, %v3959
      %v3961 = vsel %vm1007, %v3952, %v3960
      %v3962 = vsel %vm1007, %v3960, %v3659
      %v3964 = vshrl.u32 %v3944, 16
      %v3966 = vrot.slane %v3964, 3
      %v3967 = vshll.u32 %v3944, 16
      %v3969 = vrot.slane %v3967, 4
      %v3970 = vor.u32 %v3966, %v3969
      %v3971 = vsel %vm1007, %v3776, %v3970
      %v3973 = vsel %vm1160, %v3961, 0
      %v3976 = vsel %vm1160, %v3962, 0
      %v3979 = vsel %vm1160, %v3971, 0
      %v3982 = vsel %vm1209, %v3555, 0
      %3984 = vmatpush.bf16.msra.mxu0 0
      %3985 = vmatpush.bf16.msra.mxu0 0
      %3986 = vmatpush.bf16.msra.mxu0 0
      %3987 = vmatpush.bf16.msra.mxu0 0
      %3988 = vmatpush.bf16.msra.mxu0 0
      %3989 = vmatpush.bf16.msra.mxu0 0
      %3990 = vmatpush.bf16.msra.mxu0 0
      %3991 = vmatpush.bf16.msra.mxu0 %v3982
      %3992 = vmatmul.bf16.gmra.mxu0 %v3973
      %v3993 = vpop.f32.mrf.mxu0
      %v3994 = vadd.f32 %v3857, %v3993
      %v3995 = vpop.f32.mrf.mxu0
      %v3996 = vadd.f32 %v3859, %v3995
      %3997 = vmatmul.bf16.gmra.mxu0 %v3976
      %v3998 = vpop.f32.mrf.mxu0
      %v3999 = vadd.f32 %v3862, %v3998
      %v4000 = vpop.f32.mrf.mxu0
      %v4001 = vadd.f32 %v3864, %v4000
      %4002 = vmatmul.bf16.gmra.mxu0 %v3800
      %v4003 = vpop.f32.mrf.mxu0
      %v4004 = vadd.f32 %v3867, %v4003
      %v4005 = vpop.f32.mrf.mxu0
      %v4006 = vadd.f32 %v3869, %v4005
      %4007 = vmatmul.bf16.gmra.mxu0 %v3803
      %v4008 = vpop.f32.mrf.mxu0
      %v4009 = vadd.f32 %v3872, %v4008
      %v4010 = vpop.f32.mrf.mxu0
      %v4011 = vadd.f32 %v3874, %v4010
      %4012 = vmatmul.bf16.gmra.mxu0 %v3806
      %v4013 = vpop.f32.mrf.mxu0
      %v4014 = vadd.f32 %v3877, %v4013
      %v4015 = vpop.f32.mrf.mxu0
      %v4016 = vadd.f32 %v3879, %v4015
      %4017 = vmatmul.bf16.gmra.mxu0 %v3809
      %v4018 = vpop.f32.mrf.mxu0
      %v4019 = vadd.f32 %v3882, %v4018
      %v4020 = vpop.f32.mrf.mxu0
      %v4021 = vadd.f32 %v3884, %v4020
      %4022 = vmatmul.bf16.gmra.mxu0 %v3812
      %v4023 = vpop.f32.mrf.mxu0
      %v4024 = vadd.f32 %v3887, %v4023
      %v4025 = vpop.f32.mrf.mxu0
      %v4026 = vadd.f32 %v3889, %v4025
      %4027 = vmatmul.bf16.gmra.mxu0 %v3815
      %v4028 = vpop.f32.mrf.mxu0
      %v4029 = vadd.f32 %v3892, %v4028
      %v4030 = vpop.f32.mrf.mxu0
      %v4031 = vadd.f32 %v3894, %v4030
      %4032 = vmatmul.bf16.gmra.mxu0 %v3818
      %v4033 = vpop.f32.mrf.mxu0
      %v4034 = vadd.f32 %v3897, %v4033
      %v4035 = vpop.f32.mrf.mxu0
      %v4036 = vadd.f32 %v3899, %v4035
      %4037 = vmatmul.bf16.gmra.mxu0 %v3821
      %v4038 = vpop.f32.mrf.mxu0
      %v4039 = vadd.f32 %v3902, %v4038
      %v4040 = vpop.f32.mrf.mxu0
      %v4041 = vadd.f32 %v3904, %v4040
      %4042 = vmatmul.bf16.gmra.mxu0 %v3824
      %v4043 = vpop.f32.mrf.mxu0
      %v4044 = vadd.f32 %v3907, %v4043
      %v4045 = vpop.f32.mrf.mxu0
      %v4046 = vadd.f32 %v3909, %v4045
      %4047 = vmatmul.bf16.gmra.mxu0 %v3827
      %v4048 = vpop.f32.mrf.mxu0
      %v4049 = vadd.f32 %v3912, %v4048
      %v4050 = vpop.f32.mrf.mxu0
      %v4051 = vadd.f32 %v3914, %v4050
      %4052 = vmatmul.bf16.gmra.mxu0 %v3830
      %v4053 = vpop.f32.mrf.mxu0
      %v4054 = vadd.f32 %v3917, %v4053
      %v4055 = vpop.f32.mrf.mxu0
      %v4056 = vadd.f32 %v3919, %v4055
      %4057 = vmatmul.bf16.gmra.mxu0 %v3833
      %v4058 = vpop.f32.mrf.mxu0
      %v4059 = vadd.f32 %v3922, %v4058
      %v4060 = vpop.f32.mrf.mxu0
      %v4061 = vadd.f32 %v3924, %v4060
      %4062 = vmatmul.bf16.gmra.mxu0 %v3836
      %v4063 = vpop.f32.mrf.mxu0
      %v4064 = vadd.f32 %v3927, %v4063
      %v4065 = vpop.f32.mrf.mxu0
      %v4066 = vadd.f32 %v3929, %v4065
      %4067 = vmatmul.bf16.gmra.mxu0 %v3979
      %v4068 = vpop.f32.mrf.mxu0
      %v4069 = vadd.f32 %v3932, %v4068
      %v4070 = vpop.f32.mrf.mxu0
      %v4071 = vadd.f32 %v3934, %v4070
      %4072 = vdwg.mxu0
      %v4073 = vld [vmem:[#allocation2 + $0x14] sm:$0x8]
      %v4074 = vld [vmem:[#allocation2 + $0x18] sm:$0xf]
      %v4075 = vld [vmem:[#allocation2 + $0x1c] sm:$0xf]
      %v4076 = vld [vmem:[#allocation2 + $0x20] sm:$0xf]
      %v4077 = vld [vmem:[#allocation2 + $0x24] sm:$0xf]
      %v4078 = vld [vmem:[#allocation2 + $0x28] sm:$0xf]
      %v4079 = vld [vmem:[#allocation2 + $0x2c] sm:$0xf]
      %v4080 = vld [vmem:[#allocation2 + $0x30] sm:$0xf]
      %v4081 = vld [vmem:[#allocation2 + $0x34] sm:$0xf]
      %v4082 = vld [vmem:[#allocation2 + $0x38] sm:$0xf]
      %v4083 = vld [vmem:[#allocation2 + $0x3c] sm:$0xf]
      %v4084 = vld [vmem:[#allocation2 + $0x40] sm:$0xf]
      %v4085 = vld [vmem:[#allocation2 + $0x44] sm:$0xf]
      %v4086 = vld [vmem:[#allocation2 + $0x48] sm:$0xf]
      %v4087 = vld [vmem:[#allocation2 + $0x4c] sm:$0xf]
      %v4088 = vld [vmem:[#allocation2 + $0x50] sm:$0xf]
      %v4089 = vld [vmem:[#allocation2 + $0x54] sm:$0xf]
      %v4090 = vld [vmem:[#allocation2 + $0x58] sm:$0xf]
      %v4091 = vld [vmem:[#allocation2 + $0x5c] sm:$0xf]
      %v4092 = vld [vmem:[#allocation2 + $0x60] sm:$0xf]
      %v4093 = vld [vmem:[#allocation2 + $0x64] sm:$0xf]
      %v4094 = vld [vmem:[#allocation2 + $0x68] sm:$0xf]
      %v4095 = vld [vmem:[#allocation2 + $0x6c] sm:$0xf]
      %v4096 = vld [vmem:[#allocation2 + $0x70] sm:$0xf]
      %v4097 = vld [vmem:[#allocation2 + $0x74] sm:$0xf]
      %v4098 = vld [vmem:[#allocation2 + $0x78] sm:$0xf]
      %v4099 = vld [vmem:[#allocation2 + $0x7c] sm:$0xf]
      %v4100 = vld [vmem:[#allocation2 + $0x80] sm:$0xf]
      %v4101 = vld [vmem:[#allocation2 + $0x84] sm:$0xf]
      %v4102 = vld [vmem:[#allocation2 + $0x88] sm:$0xf]
      %v4103 = vld [vmem:[#allocation2 + $0x8c] sm:$0xf]
      %v4104 = vld [vmem:[#allocation2 + $0x90] sm:$0xf]
      %v4105 = vld [vmem:[#allocation2 + $0x94] sm:$0xf]
      %s4106 = scalar_lea.vmem %s2, 12
      %v4107 = vld [vmem:[%s4106] sm:$0x3]
      %v4141 = vunpack.c.l.b16 %v4073
      %v4142 = vunpack.c.l.b16 %v4074
      %v4143 = vunpack.c.l.b16 %v4075
      %v4144 = vunpack.c.l.b16 %v4076
      %v4145 = vunpack.c.l.b16 %v4077
      %v4146 = vunpack.c.l.b16 %v4078
      %v4147 = vunpack.c.l.b16 %v4079
      %v4148 = vunpack.c.l.b16 %v4080
      %v4149 = vunpack.c.l.b16 %v4081
      %v4150 = vunpack.c.l.b16 %v4082
      %v4151 = vunpack.c.l.b16 %v4083
      %v4152 = vunpack.c.l.b16 %v4084
      %v4153 = vunpack.c.l.b16 %v4085
      %v4154 = vunpack.c.l.b16 %v4086
      %v4155 = vunpack.c.l.b16 %v4087
      %v4156 = vunpack.c.l.b16 %v4088
      %v4157 = vunpack.c.l.b16 %v4089
      %v4158 = vunpack.c.l.b16 %v4090
      %v4159 = vunpack.c.l.b16 %v4091
      %v4160 = vunpack.c.l.b16 %v4092
      %v4161 = vunpack.c.l.b16 %v4093
      %v4162 = vunpack.c.l.b16 %v4094
      %v4163 = vunpack.c.l.b16 %v4095
      %v4164 = vunpack.c.l.b16 %v4096
      %v4165 = vunpack.c.l.b16 %v4097
      %v4166 = vunpack.c.l.b16 %v4098
      %v4167 = vunpack.c.l.b16 %v4099
      %v4168 = vunpack.c.l.b16 %v4100
      %v4169 = vunpack.c.l.b16 %v4101
      %v4170 = vunpack.c.l.b16 %v4102
      %v4171 = vunpack.c.l.b16 %v4103
      %v4172 = vunpack.c.l.b16 %v4104
      %v4173 = vunpack.c.l.b16 %v4105
      %v4174 = vpack.c.b16 %v4142, %v4141
      %v4175 = vpack.c.b16 %v4144, %v4143
      %v4176 = vpack.c.b16 %v4146, %v4145
      %v4177 = vpack.c.b16 %v4148, %v4147
      %v4178 = vpack.c.b16 %v4150, %v4149
      %v4179 = vpack.c.b16 %v4152, %v4151
      %v4180 = vpack.c.b16 %v4154, %v4153
      %v4181 = vpack.c.b16 %v4156, %v4155
      %v4182 = vpack.c.b16 %v4158, %v4157
      %v4183 = vpack.c.b16 %v4160, %v4159
      %v4184 = vpack.c.b16 %v4162, %v4161
      %v4185 = vpack.c.b16 %v4164, %v4163
      %v4186 = vpack.c.b16 %v4166, %v4165
      %v4187 = vpack.c.b16 %v4168, %v4167
      %v4188 = vpack.c.b16 %v4170, %v4169
      %v4189 = vpack.c.b16 %v4172, %v4171
      %v4190 = vpack.c.b16 %v4173, %v4173
      %v4192 = vshrl.u32 %v4174, 16
      %v4194 = vrot.slane %v4192, 3
      %v4195 = vshll.u32 %v4174, 16
      %v4197 = vrot.slane %v4195, 4
      %v4198 = vor.u32 %v4194, %v4197
      %v4200 = vshrl.u32 %v4175, 16
      %v4202 = vrot.slane %v4200, 3
      %v4203 = vshll.u32 %v4175, 16
      %v4205 = vrot.slane %v4203, 4
      %v4206 = vor.u32 %v4202, %v4205
      %v4207 = vsel %vm1007, %v4198, %v4206
      %v4209 = vshrl.u32 %v4176, 16
      %v4211 = vrot.slane %v4209, 3
      %v4212 = vshll.u32 %v4176, 16
      %v4214 = vrot.slane %v4212, 4
      %v4215 = vor.u32 %v4211, %v4214
      %v4216 = vsel %vm1007, %v4206, %v4215
      %v4218 = vshrl.u32 %v4177, 16
      %v4220 = vrot.slane %v4218, 3
      %v4221 = vshll.u32 %v4177, 16
      %v4223 = vrot.slane %v4221, 4
      %v4224 = vor.u32 %v4220, %v4223
      %v4225 = vsel %vm1007, %v4215, %v4224
      %v4227 = vshrl.u32 %v4178, 16
      %v4229 = vrot.slane %v4227, 3
      %v4230 = vshll.u32 %v4178, 16
      %v4232 = vrot.slane %v4230, 4
      %v4233 = vor.u32 %v4229, %v4232
      %v4234 = vsel %vm1007, %v4224, %v4233
      %v4236 = vshrl.u32 %v4179, 16
      %v4238 = vrot.slane %v4236, 3
      %v4239 = vshll.u32 %v4179, 16
      %v4241 = vrot.slane %v4239, 4
      %v4242 = vor.u32 %v4238, %v4241
      %v4243 = vsel %vm1007, %v4233, %v4242
      %v4245 = vshrl.u32 %v4180, 16
      %v4247 = vrot.slane %v4245, 3
      %v4248 = vshll.u32 %v4180, 16
      %v4250 = vrot.slane %v4248, 4
      %v4251 = vor.u32 %v4247, %v4250
      %v4252 = vsel %vm1007, %v4242, %v4251
      %v4254 = vshrl.u32 %v4181, 16
      %v4256 = vrot.slane %v4254, 3
      %v4257 = vshll.u32 %v4181, 16
      %v4259 = vrot.slane %v4257, 4
      %v4260 = vor.u32 %v4256, %v4259
      %v4261 = vsel %vm1007, %v4251, %v4260
      %v4263 = vshrl.u32 %v4182, 16
      %v4265 = vrot.slane %v4263, 3
      %v4266 = vshll.u32 %v4182, 16
      %v4268 = vrot.slane %v4266, 4
      %v4269 = vor.u32 %v4265, %v4268
      %v4270 = vsel %vm1007, %v4260, %v4269
      %v4272 = vshrl.u32 %v4183, 16
      %v4274 = vrot.slane %v4272, 3
      %v4275 = vshll.u32 %v4183, 16
      %v4277 = vrot.slane %v4275, 4
      %v4278 = vor.u32 %v4274, %v4277
      %v4279 = vsel %vm1007, %v4269, %v4278
      %v4281 = vshrl.u32 %v4184, 16
      %v4283 = vrot.slane %v4281, 3
      %v4284 = vshll.u32 %v4184, 16
      %v4286 = vrot.slane %v4284, 4
      %v4287 = vor.u32 %v4283, %v4286
      %v4288 = vsel %vm1007, %v4278, %v4287
      %v4290 = vshrl.u32 %v4185, 16
      %v4292 = vrot.slane %v4290, 3
      %v4293 = vshll.u32 %v4185, 16
      %v4295 = vrot.slane %v4293, 4
      %v4296 = vor.u32 %v4292, %v4295
      %v4297 = vsel %vm1007, %v4287, %v4296
      %v4299 = vshrl.u32 %v4186, 16
      %v4301 = vrot.slane %v4299, 3
      %v4302 = vshll.u32 %v4186, 16
      %v4304 = vrot.slane %v4302, 4
      %v4305 = vor.u32 %v4301, %v4304
      %v4306 = vsel %vm1007, %v4296, %v4305
      %v4308 = vshrl.u32 %v4187, 16
      %v4310 = vrot.slane %v4308, 3
      %v4311 = vshll.u32 %v4187, 16
      %v4313 = vrot.slane %v4311, 4
      %v4314 = vor.u32 %v4310, %v4313
      %v4315 = vsel %vm1007, %v4305, %v4314
      %v4317 = vshrl.u32 %v4188, 16
      %v4319 = vrot.slane %v4317, 3
      %v4320 = vshll.u32 %v4188, 16
      %v4322 = vrot.slane %v4320, 4
      %v4323 = vor.u32 %v4319, %v4322
      %v4324 = vsel %vm1007, %v4314, %v4323
      %v4326 = vshrl.u32 %v4189, 16
      %v4328 = vrot.slane %v4326, 3
      %v4329 = vshll.u32 %v4189, 16
      %v4331 = vrot.slane %v4329, 4
      %v4332 = vor.u32 %v4328, %v4331
      %v4333 = vsel %vm1007, %v4323, %v4332
      %v4335 = vshrl.u32 %v4190, 16
      %v4337 = vrot.slane %v4335, 3
      %v4338 = vshll.u32 %v4190, 16
      %v4340 = vrot.slane %v4338, 4
      %v4341 = vor.u32 %v4337, %v4340
      %v4342 = vsel %vm1007, %v4332, %v4341
      %v4344 = vsel %vm1160, %v4207, 0
      %v4347 = vsel %vm1160, %v4216, 0
      %v4350 = vsel %vm1160, %v4225, 0
      %v4353 = vsel %vm1160, %v4234, 0
      %v4356 = vsel %vm1160, %v4243, 0
      %v4359 = vsel %vm1160, %v4252, 0
      %v4362 = vsel %vm1160, %v4261, 0
      %v4365 = vsel %vm1160, %v4270, 0
      %v4368 = vsel %vm1160, %v4279, 0
      %v4371 = vsel %vm1160, %v4288, 0
      %v4374 = vsel %vm1160, %v4297, 0
      %v4377 = vsel %vm1160, %v4306, 0
      %v4380 = vsel %vm1160, %v4315, 0
      %v4383 = vsel %vm1160, %v4324, 0
      %v4386 = vsel %vm1160, %v4333, 0
      %v4389 = vsel %vm1160, %v4342, 0
      %v4392 = vsel %vm1209, %v4107, 0
      %4394 = vmatpush.bf16.msra.mxu0 0
      %4395 = vmatpush.bf16.msra.mxu0 0
      %4396 = vmatpush.bf16.msra.mxu0 0
      %4397 = vmatpush.bf16.msra.mxu0 0
      %4398 = vmatpush.bf16.msra.mxu0 0
      %4399 = vmatpush.bf16.msra.mxu0 0
      %4400 = vmatpush.bf16.msra.mxu0 0
      %4401 = vmatpush.bf16.msra.mxu0 %v4392
      %4402 = vmatmul.bf16.gmra.mxu0 %v4344
      %v4403 = vpop.f32.mrf.mxu0
      %v4404 = vadd.f32 0.0, %v4403
      %v4405 = vpop.f32.mrf.mxu0
      %v4406 = vadd.f32 0.0, %v4405
      %4407 = vmatmul.bf16.gmra.mxu0 %v4347
      %v4408 = vpop.f32.mrf.mxu0
      %v4409 = vadd.f32 0.0, %v4408
      %v4410 = vpop.f32.mrf.mxu0
      %v4411 = vadd.f32 0.0, %v4410
      %4412 = vmatmul.bf16.gmra.mxu0 %v4350
      %v4413 = vpop.f32.mrf.mxu0
      %v4414 = vadd.f32 0.0, %v4413
      %v4415 = vpop.f32.mrf.mxu0
      %v4416 = vadd.f32 0.0, %v4415
      %4417 = vmatmul.bf16.gmra.mxu0 %v4353
      %v4418 = vpop.f32.mrf.mxu0
      %v4419 = vadd.f32 0.0, %v4418
      %v4420 = vpop.f32.mrf.mxu0
      %v4421 = vadd.f32 0.0, %v4420
      %4422 = vmatmul.bf16.gmra.mxu0 %v4356
      %v4423 = vpop.f32.mrf.mxu0
      %v4424 = vadd.f32 0.0, %v4423
      %v4425 = vpop.f32.mrf.mxu0
      %v4426 = vadd.f32 0.0, %v4425
      %4427 = vmatmul.bf16.gmra.mxu0 %v4359
      %v4428 = vpop.f32.mrf.mxu0
      %v4429 = vadd.f32 0.0, %v4428
      %v4430 = vpop.f32.mrf.mxu0
      %v4431 = vadd.f32 0.0, %v4430
      %4432 = vmatmul.bf16.gmra.mxu0 %v4362
      %v4433 = vpop.f32.mrf.mxu0
      %v4434 = vadd.f32 0.0, %v4433
      %v4435 = vpop.f32.mrf.mxu0
      %v4436 = vadd.f32 0.0, %v4435
      %4437 = vmatmul.bf16.gmra.mxu0 %v4365
      %v4438 = vpop.f32.mrf.mxu0
      %v4439 = vadd.f32 0.0, %v4438
      %v4440 = vpop.f32.mrf.mxu0
      %v4441 = vadd.f32 0.0, %v4440
      %4442 = vmatmul.bf16.gmra.mxu0 %v4368
      %v4443 = vpop.f32.mrf.mxu0
      %v4444 = vadd.f32 0.0, %v4443
      %v4445 = vpop.f32.mrf.mxu0
      %v4446 = vadd.f32 0.0, %v4445
      %4447 = vmatmul.bf16.gmra.mxu0 %v4371
      %v4448 = vpop.f32.mrf.mxu0
      %v4449 = vadd.f32 0.0, %v4448
      %v4450 = vpop.f32.mrf.mxu0
      %v4451 = vadd.f32 0.0, %v4450
      %4452 = vmatmul.bf16.gmra.mxu0 %v4374
      %v4453 = vpop.f32.mrf.mxu0
      %v4454 = vadd.f32 0.0, %v4453
      %v4455 = vpop.f32.mrf.mxu0
      %v4456 = vadd.f32 0.0, %v4455
      %4457 = vmatmul.bf16.gmra.mxu0 %v4377
      %v4458 = vpop.f32.mrf.mxu0
      %v4459 = vadd.f32 0.0, %v4458
      %v4460 = vpop.f32.mrf.mxu0
      %v4461 = vadd.f32 0.0, %v4460
      %4462 = vmatmul.bf16.gmra.mxu0 %v4380
      %v4463 = vpop.f32.mrf.mxu0
      %v4464 = vadd.f32 0.0, %v4463
      %v4465 = vpop.f32.mrf.mxu0
      %v4466 = vadd.f32 0.0, %v4465
      %4467 = vmatmul.bf16.gmra.mxu0 %v4383
      %v4468 = vpop.f32.mrf.mxu0
      %v4469 = vadd.f32 0.0, %v4468
      %v4470 = vpop.f32.mrf.mxu0
      %v4471 = vadd.f32 0.0, %v4470
      %4472 = vmatmul.bf16.gmra.mxu0 %v4386
      %v4473 = vpop.f32.mrf.mxu0
      %v4474 = vadd.f32 0.0, %v4473
      %v4475 = vpop.f32.mrf.mxu0
      %v4476 = vadd.f32 0.0, %v4475
      %4477 = vmatmul.bf16.gmra.mxu0 %v4389
      %v4478 = vpop.f32.mrf.mxu0
      %v4479 = vadd.f32 0.0, %v4478
      %v4480 = vpop.f32.mrf.mxu0
      %v4481 = vadd.f32 0.0, %v4480
      %4482 = vdwg.mxu0
      %v4483 = vadd.f32 %v3994, %v4404
      %v4484 = vadd.f32 %v3996, %v4406
      %v4485 = vadd.f32 %v3999, %v4409
      %v4486 = vadd.f32 %v4001, %v4411
      %v4487 = vadd.f32 %v4004, %v4414
      %v4488 = vadd.f32 %v4006, %v4416
      %v4489 = vadd.f32 %v4009, %v4419
      %v4490 = vadd.f32 %v4011, %v4421
      %v4491 = vadd.f32 %v4014, %v4424
      %v4492 = vadd.f32 %v4016, %v4426
      %v4493 = vadd.f32 %v4019, %v4429
      %v4494 = vadd.f32 %v4021, %v4431
      %v4495 = vadd.f32 %v4024, %v4434
      %v4496 = vadd.f32 %v4026, %v4436
      %v4497 = vadd.f32 %v4029, %v4439
      %v4498 = vadd.f32 %v4031, %v4441
      %v4499 = vadd.f32 %v4034, %v4444
      %v4500 = vadd.f32 %v4036, %v4446
      %v4501 = vadd.f32 %v4039, %v4449
      %v4502 = vadd.f32 %v4041, %v4451
      %v4503 = vadd.f32 %v4044, %v4454
      %v4504 = vadd.f32 %v4046, %v4456
      %v4505 = vadd.f32 %v4049, %v4459
      %v4506 = vadd.f32 %v4051, %v4461
      %v4507 = vadd.f32 %v4054, %v4464
      %v4508 = vadd.f32 %v4056, %v4466
      %v4509 = vadd.f32 %v4059, %v4469
      %v4510 = vadd.f32 %v4061, %v4471
      %v4511 = vadd.f32 %v4064, %v4474
      %v4512 = vadd.f32 %v4066, %v4476
      %v4513 = vadd.f32 %v4069, %v4479
      %v4514 = vadd.f32 %v4071, %v4481
      %s4515 = scalar_lea.vmem %s2, 2
      %v4516 = vld [vmem:[%s4515] sm:$0x3]
      %s4517 = scalar_lea.vmem %s2, 8
      %v4518 = vld [vmem:[%s4517] sm:$0x3]
      %v4519 = vpack.c.b16 %v3596, %v3595
      %v4520 = vpack.c.b16 %v3598, %v3597
      %v4521 = vpack.c.b16 %v3600, %v3599
      %v4522 = vpack.c.b16 %v3602, %v3601
      %v4523 = vpack.c.b16 %v3604, %v3603
      %v4524 = vpack.c.b16 %v3606, %v3605
      %v4525 = vpack.c.b16 %v3608, %v3607
      %v4526 = vpack.c.b16 %v3610, %v3609
      %v4527 = vpack.c.b16 %v3612, %v3611
      %v4528 = vpack.c.b16 %v3614, %v3613
      %v4529 = vpack.c.b16 %v3616, %v3615
      %v4530 = vpack.c.b16 %v3618, %v3617
      %v4531 = vpack.c.b16 %v3620, %v3619
      %v4532 = vpack.c.b16 %v3622, %v3621
      %v4533 = vpack.c.b16 %v3624, %v3623
      %v4534 = vpack.c.b16 %v3626, %v3625
      %v4536 = vsel %vm1160, %v4519, 0
      %v4539 = vsel %vm1160, %v4520, 0
      %v4542 = vsel %vm1160, %v4521, 0
      %v4545 = vsel %vm1160, %v4522, 0
      %v4548 = vsel %vm1160, %v4523, 0
      %v4551 = vsel %vm1160, %v4524, 0
      %v4554 = vsel %vm1160, %v4525, 0
      %v4557 = vsel %vm1160, %v4526, 0
      %v4560 = vsel %vm1160, %v4527, 0
      %v4563 = vsel %vm1160, %v4528, 0
      %v4566 = vsel %vm1160, %v4529, 0
      %v4569 = vsel %vm1160, %v4530, 0
      %v4572 = vsel %vm1160, %v4531, 0
      %v4575 = vsel %vm1160, %v4532, 0
      %v4578 = vsel %vm1160, %v4533, 0
      %v4581 = vsel %vm1160, %v4534, 0
      %v4584 = vsel %vm1209, %v4518, 0
      %4586 = vmatpush.bf16.msra.mxu0 0
      %4587 = vmatpush.bf16.msra.mxu0 0
      %4588 = vmatpush.bf16.msra.mxu0 0
      %4589 = vmatpush.bf16.msra.mxu0 0
      %4590 = vmatpush.bf16.msra.mxu0 0
      %4591 = vmatpush.bf16.msra.mxu0 0
      %4592 = vmatpush.bf16.msra.mxu0 0
      %4593 = vmatpush.bf16.msra.mxu0 %v4584
      %4594 = vmatmul.bf16.gmra.mxu0 %v4536
      %v4595 = vpop.f32.mrf.mxu0
      %v4596 = vadd.f32 0.0, %v4595
      %v4597 = vpop.f32.mrf.mxu0
      %v4598 = vadd.f32 0.0, %v4597
      %4599 = vmatmul.bf16.gmra.mxu0 %v4539
      %v4600 = vpop.f32.mrf.mxu0
      %v4601 = vadd.f32 0.0, %v4600
      %v4602 = vpop.f32.mrf.mxu0
      %v4603 = vadd.f32 0.0, %v4602
      %4604 = vmatmul.bf16.gmra.mxu0 %v4542
      %v4605 = vpop.f32.mrf.mxu0
      %v4606 = vadd.f32 0.0, %v4605
      %v4607 = vpop.f32.mrf.mxu0
      %v4608 = vadd.f32 0.0, %v4607
      %4609 = vmatmul.bf16.gmra.mxu0 %v4545
      %v4610 = vpop.f32.mrf.mxu0
      %v4611 = vadd.f32 0.0, %v4610
      %v4612 = vpop.f32.mrf.mxu0
      %v4613 = vadd.f32 0.0, %v4612
      %4614 = vmatmul.bf16.gmra.mxu0 %v4548
      %v4615 = vpop.f32.mrf.mxu0
      %v4616 = vadd.f32 0.0, %v4615
      %v4617 = vpop.f32.mrf.mxu0
      %v4618 = vadd.f32 0.0, %v4617
      %4619 = vmatmul.bf16.gmra.mxu0 %v4551
      %v4620 = vpop.f32.mrf.mxu0
      %v4621 = vadd.f32 0.0, %v4620
      %v4622 = vpop.f32.mrf.mxu0
      %v4623 = vadd.f32 0.0, %v4622
      %4624 = vmatmul.bf16.gmra.mxu0 %v4554
      %v4625 = vpop.f32.mrf.mxu0
      %v4626 = vadd.f32 0.0, %v4625
      %v4627 = vpop.f32.mrf.mxu0
      %v4628 = vadd.f32 0.0, %v4627
      %4629 = vmatmul.bf16.gmra.mxu0 %v4557
      %v4630 = vpop.f32.mrf.mxu0
      %v4631 = vadd.f32 0.0, %v4630
      %v4632 = vpop.f32.mrf.mxu0
      %v4633 = vadd.f32 0.0, %v4632
      %4634 = vmatmul.bf16.gmra.mxu0 %v4560
      %v4635 = vpop.f32.mrf.mxu0
      %v4636 = vadd.f32 0.0, %v4635
      %v4637 = vpop.f32.mrf.mxu0
      %v4638 = vadd.f32 0.0, %v4637
      %4639 = vmatmul.bf16.gmra.mxu0 %v4563
      %v4640 = vpop.f32.mrf.mxu0
      %v4641 = vadd.f32 0.0, %v4640
      %v4642 = vpop.f32.mrf.mxu0
      %v4643 = vadd.f32 0.0, %v4642
      %4644 = vmatmul.bf16.gmra.mxu0 %v4566
      %v4645 = vpop.f32.mrf.mxu0
      %v4646 = vadd.f32 0.0, %v4645
      %v4647 = vpop.f32.mrf.mxu0
      %v4648 = vadd.f32 0.0, %v4647
      %4649 = vmatmul.bf16.gmra.mxu0 %v4569
      %v4650 = vpop.f32.mrf.mxu0
      %v4651 = vadd.f32 0.0, %v4650
      %v4652 = vpop.f32.mrf.mxu0
      %v4653 = vadd.f32 0.0, %v4652
      %4654 = vmatmul.bf16.gmra.mxu0 %v4572
      %v4655 = vpop.f32.mrf.mxu0
      %v4656 = vadd.f32 0.0, %v4655
      %v4657 = vpop.f32.mrf.mxu0
      %v4658 = vadd.f32 0.0, %v4657
      %4659 = vmatmul.bf16.gmra.mxu0 %v4575
      %v4660 = vpop.f32.mrf.mxu0
      %v4661 = vadd.f32 0.0, %v4660
      %v4662 = vpop.f32.mrf.mxu0
      %v4663 = vadd.f32 0.0, %v4662
      %4664 = vmatmul.bf16.gmra.mxu0 %v4578
      %v4665 = vpop.f32.mrf.mxu0
      %v4666 = vadd.f32 0.0, %v4665
      %v4667 = vpop.f32.mrf.mxu0
      %v4668 = vadd.f32 0.0, %v4667
      %4669 = vmatmul.bf16.gmra.mxu0 %v4581
      %v4670 = vpop.f32.mrf.mxu0
      %v4671 = vadd.f32 0.0, %v4670
      %v4672 = vpop.f32.mrf.mxu0
      %v4673 = vadd.f32 0.0, %v4672
      %4674 = vdwg.mxu0
      %v4675 = vpack.c.b16 %v3941, %v3940
      %v4677 = vsel %vm1160, %v4675, 0
      %v4680 = vsel %vm1209, %v4516, 0
      %4682 = vmatpush.bf16.msra.mxu0 0
      %4683 = vmatpush.bf16.msra.mxu0 0
      %4684 = vmatpush.bf16.msra.mxu0 0
      %4685 = vmatpush.bf16.msra.mxu0 0
      %4686 = vmatpush.bf16.msra.mxu0 0
      %4687 = vmatpush.bf16.msra.mxu0 0
      %4688 = vmatpush.bf16.msra.mxu0 0
      %4689 = vmatpush.bf16.msra.mxu0 %v4680
      %4690 = vmatmul.bf16.gmra.mxu0 %v4677
      %v4691 = vpop.f32.mrf.mxu0
      %v4692 = vadd.f32 %v4596, %v4691
      %v4693 = vpop.f32.mrf.mxu0
      %v4694 = vadd.f32 %v4598, %v4693
      %4695 = vmatmul.bf16.gmra.mxu0 %v4536
      %v4696 = vpop.f32.mrf.mxu0
      %v4697 = vadd.f32 %v4601, %v4696
      %v4698 = vpop.f32.mrf.mxu0
      %v4699 = vadd.f32 %v4603, %v4698
      %4700 = vmatmul.bf16.gmra.mxu0 %v4539
      %v4701 = vpop.f32.mrf.mxu0
      %v4702 = vadd.f32 %v4606, %v4701
      %v4703 = vpop.f32.mrf.mxu0
      %v4704 = vadd.f32 %v4608, %v4703
      %4705 = vmatmul.bf16.gmra.mxu0 %v4542
      %v4706 = vpop.f32.mrf.mxu0
      %v4707 = vadd.f32 %v4611, %v4706
      %v4708 = vpop.f32.mrf.mxu0
      %v4709 = vadd.f32 %v4613, %v4708
      %4710 = vmatmul.bf16.gmra.mxu0 %v4545
      %v4711 = vpop.f32.mrf.mxu0
      %v4712 = vadd.f32 %v4616, %v4711
      %v4713 = vpop.f32.mrf.mxu0
      %v4714 = vadd.f32 %v4618, %v4713
      %4715 = vmatmul.bf16.gmra.mxu0 %v4548
      %v4716 = vpop.f32.mrf.mxu0
      %v4717 = vadd.f32 %v4621, %v4716
      %v4718 = vpop.f32.mrf.mxu0
      %v4719 = vadd.f32 %v4623, %v4718
      %4720 = vmatmul.bf16.gmra.mxu0 %v4551
      %v4721 = vpop.f32.mrf.mxu0
      %v4722 = vadd.f32 %v4626, %v4721
      %v4723 = vpop.f32.mrf.mxu0
      %v4724 = vadd.f32 %v4628, %v4723
      %4725 = vmatmul.bf16.gmra.mxu0 %v4554
      %v4726 = vpop.f32.mrf.mxu0
      %v4727 = vadd.f32 %v4631, %v4726
      %v4728 = vpop.f32.mrf.mxu0
      %v4729 = vadd.f32 %v4633, %v4728
      %4730 = vmatmul.bf16.gmra.mxu0 %v4557
      %v4731 = vpop.f32.mrf.mxu0
      %v4732 = vadd.f32 %v4636, %v4731
      %v4733 = vpop.f32.mrf.mxu0
      %v4734 = vadd.f32 %v4638, %v4733
      %4735 = vmatmul.bf16.gmra.mxu0 %v4560
      %v4736 = vpop.f32.mrf.mxu0
      %v4737 = vadd.f32 %v4641, %v4736
      %v4738 = vpop.f32.mrf.mxu0
      %v4739 = vadd.f32 %v4643, %v4738
      %4740 = vmatmul.bf16.gmra.mxu0 %v4563
      %v4741 = vpop.f32.mrf.mxu0
      %v4742 = vadd.f32 %v4646, %v4741
      %v4743 = vpop.f32.mrf.mxu0
      %v4744 = vadd.f32 %v4648, %v4743
      %4745 = vmatmul.bf16.gmra.mxu0 %v4566
      %v4746 = vpop.f32.mrf.mxu0
      %v4747 = vadd.f32 %v4651, %v4746
      %v4748 = vpop.f32.mrf.mxu0
      %v4749 = vadd.f32 %v4653, %v4748
      %4750 = vmatmul.bf16.gmra.mxu0 %v4569
      %v4751 = vpop.f32.mrf.mxu0
      %v4752 = vadd.f32 %v4656, %v4751
      %v4753 = vpop.f32.mrf.mxu0
      %v4754 = vadd.f32 %v4658, %v4753
      %4755 = vmatmul.bf16.gmra.mxu0 %v4572
      %v4756 = vpop.f32.mrf.mxu0
      %v4757 = vadd.f32 %v4661, %v4756
      %v4758 = vpop.f32.mrf.mxu0
      %v4759 = vadd.f32 %v4663, %v4758
      %4760 = vmatmul.bf16.gmra.mxu0 %v4575
      %v4761 = vpop.f32.mrf.mxu0
      %v4762 = vadd.f32 %v4666, %v4761
      %v4763 = vpop.f32.mrf.mxu0
      %v4764 = vadd.f32 %v4668, %v4763
      %4765 = vmatmul.bf16.gmra.mxu0 %v4578
      %v4766 = vpop.f32.mrf.mxu0
      %v4767 = vadd.f32 %v4671, %v4766
      %v4768 = vpop.f32.mrf.mxu0
      %v4769 = vadd.f32 %v4673, %v4768
      %4770 = vdwg.mxu0
      %s4771 = scalar_lea.vmem %s2, 14
      %v4772 = vld [vmem:[%s4771] sm:$0x3]
      %v4773 = vpack.c.b16 %v4143, %v4142
      %v4774 = vpack.c.b16 %v4145, %v4144
      %v4775 = vpack.c.b16 %v4147, %v4146
      %v4776 = vpack.c.b16 %v4149, %v4148
      %v4777 = vpack.c.b16 %v4151, %v4150
      %v4778 = vpack.c.b16 %v4153, %v4152
      %v4779 = vpack.c.b16 %v4155, %v4154
      %v4780 = vpack.c.b16 %v4157, %v4156
      %v4781 = vpack.c.b16 %v4159, %v4158
      %v4782 = vpack.c.b16 %v4161, %v4160
      %v4783 = vpack.c.b16 %v4163, %v4162
      %v4784 = vpack.c.b16 %v4165, %v4164
      %v4785 = vpack.c.b16 %v4167, %v4166
      %v4786 = vpack.c.b16 %v4169, %v4168
      %v4787 = vpack.c.b16 %v4171, %v4170
      %v4788 = vpack.c.b16 %v4173, %v4172
      %v4790 = vsel %vm1160, %v4773, 0
      %v4793 = vsel %vm1160, %v4774, 0
      %v4796 = vsel %vm1160, %v4775, 0
      %v4799 = vsel %vm1160, %v4776, 0
      %v4802 = vsel %vm1160, %v4777, 0
      %v4805 = vsel %vm1160, %v4778, 0
      %v4808 = vsel %vm1160, %v4779, 0
      %v4811 = vsel %vm1160, %v4780, 0
      %v4814 = vsel %vm1160, %v4781, 0
      %v4817 = vsel %vm1160, %v4782, 0
      %v4820 = vsel %vm1160, %v4783, 0
      %v4823 = vsel %vm1160, %v4784, 0
      %v4826 = vsel %vm1160, %v4785, 0
      %v4829 = vsel %vm1160, %v4786, 0
      %v4832 = vsel %vm1160, %v4787, 0
      %v4835 = vsel %vm1160, %v4788, 0
      %v4838 = vsel %vm1209, %v4772, 0
      %4840 = vmatpush.bf16.msra.mxu0 0
      %4841 = vmatpush.bf16.msra.mxu0 0
      %4842 = vmatpush.bf16.msra.mxu0 0
      %4843 = vmatpush.bf16.msra.mxu0 0
      %4844 = vmatpush.bf16.msra.mxu0 0
      %4845 = vmatpush.bf16.msra.mxu0 0
      %4846 = vmatpush.bf16.msra.mxu0 0
      %4847 = vmatpush.bf16.msra.mxu0 %v4838
      %4848 = vmatmul.bf16.gmra.mxu0 %v4790
      %v4849 = vpop.f32.mrf.mxu0
      %v4850 = vadd.f32 0.0, %v4849
      %v4851 = vpop.f32.mrf.mxu0
      %v4852 = vadd.f32 0.0, %v4851
      %4853 = vmatmul.bf16.gmra.mxu0 %v4793
      %v4854 = vpop.f32.mrf.mxu0
      %v4855 = vadd.f32 0.0, %v4854
      %v4856 = vpop.f32.mrf.mxu0
      %v4857 = vadd.f32 0.0, %v4856
      %4858 = vmatmul.bf16.gmra.mxu0 %v4796
      %v4859 = vpop.f32.mrf.mxu0
      %v4860 = vadd.f32 0.0, %v4859
      %v4861 = vpop.f32.mrf.mxu0
      %v4862 = vadd.f32 0.0, %v4861
      %4863 = vmatmul.bf16.gmra.mxu0 %v4799
      %v4864 = vpop.f32.mrf.mxu0
      %v4865 = vadd.f32 0.0, %v4864
      %v4866 = vpop.f32.mrf.mxu0
      %v4867 = vadd.f32 0.0, %v4866
      %4868 = vmatmul.bf16.gmra.mxu0 %v4802
      %v4869 = vpop.f32.mrf.mxu0
      %v4870 = vadd.f32 0.0, %v4869
      %v4871 = vpop.f32.mrf.mxu0
      %v4872 = vadd.f32 0.0, %v4871
      %4873 = vmatmul.bf16.gmra.mxu0 %v4805
      %v4874 = vpop.f32.mrf.mxu0
      %v4875 = vadd.f32 0.0, %v4874
      %v4876 = vpop.f32.mrf.mxu0
      %v4877 = vadd.f32 0.0, %v4876
      %4878 = vmatmul.bf16.gmra.mxu0 %v4808
      %v4879 = vpop.f32.mrf.mxu0
      %v4880 = vadd.f32 0.0, %v4879
      %v4881 = vpop.f32.mrf.mxu0
      %v4882 = vadd.f32 0.0, %v4881
      %4883 = vmatmul.bf16.gmra.mxu0 %v4811
      %v4884 = vpop.f32.mrf.mxu0
      %v4885 = vadd.f32 0.0, %v4884
      %v4886 = vpop.f32.mrf.mxu0
      %v4887 = vadd.f32 0.0, %v4886
      %4888 = vmatmul.bf16.gmra.mxu0 %v4814
      %v4889 = vpop.f32.mrf.mxu0
      %v4890 = vadd.f32 0.0, %v4889
      %v4891 = vpop.f32.mrf.mxu0
      %v4892 = vadd.f32 0.0, %v4891
      %4893 = vmatmul.bf16.gmra.mxu0 %v4817
      %v4894 = vpop.f32.mrf.mxu0
      %v4895 = vadd.f32 0.0, %v4894
      %v4896 = vpop.f32.mrf.mxu0
      %v4897 = vadd.f32 0.0, %v4896
      %4898 = vmatmul.bf16.gmra.mxu0 %v4820
      %v4899 = vpop.f32.mrf.mxu0
      %v4900 = vadd.f32 0.0, %v4899
      %v4901 = vpop.f32.mrf.mxu0
      %v4902 = vadd.f32 0.0, %v4901
      %4903 = vmatmul.bf16.gmra.mxu0 %v4823
      %v4904 = vpop.f32.mrf.mxu0
      %v4905 = vadd.f32 0.0, %v4904
      %v4906 = vpop.f32.mrf.mxu0
      %v4907 = vadd.f32 0.0, %v4906
      %4908 = vmatmul.bf16.gmra.mxu0 %v4826
      %v4909 = vpop.f32.mrf.mxu0
      %v4910 = vadd.f32 0.0, %v4909
      %v4911 = vpop.f32.mrf.mxu0
      %v4912 = vadd.f32 0.0, %v4911
      %4913 = vmatmul.bf16.gmra.mxu0 %v4829
      %v4914 = vpop.f32.mrf.mxu0
      %v4915 = vadd.f32 0.0, %v4914
      %v4916 = vpop.f32.mrf.mxu0
      %v4917 = vadd.f32 0.0, %v4916
      %4918 = vmatmul.bf16.gmra.mxu0 %v4832
      %v4919 = vpop.f32.mrf.mxu0
      %v4920 = vadd.f32 0.0, %v4919
      %v4921 = vpop.f32.mrf.mxu0
      %v4922 = vadd.f32 0.0, %v4921
      %4923 = vmatmul.bf16.gmra.mxu0 %v4835
      %v4924 = vpop.f32.mrf.mxu0
      %v4925 = vadd.f32 0.0, %v4924
      %v4926 = vpop.f32.mrf.mxu0
      %v4927 = vadd.f32 0.0, %v4926
      %4928 = vdwg.mxu0
      %v4929 = vadd.f32 %v4692, %v4850
      %v4930 = vadd.f32 %v4694, %v4852
      %v4931 = vadd.f32 %v4697, %v4855
      %v4932 = vadd.f32 %v4699, %v4857
      %v4933 = vadd.f32 %v4702, %v4860
      %v4934 = vadd.f32 %v4704, %v4862
      %v4935 = vadd.f32 %v4707, %v4865
      %v4936 = vadd.f32 %v4709, %v4867
      %v4937 = vadd.f32 %v4712, %v4870
      %v4938 = vadd.f32 %v4714, %v4872
      %v4939 = vadd.f32 %v4717, %v4875
      %v4940 = vadd.f32 %v4719, %v4877
      %v4941 = vadd.f32 %v4722, %v4880
      %v4942 = vadd.f32 %v4724, %v4882
      %v4943 = vadd.f32 %v4727, %v4885
      %v4944 = vadd.f32 %v4729, %v4887
      %v4945 = vadd.f32 %v4732, %v4890
      %v4946 = vadd.f32 %v4734, %v4892
      %v4947 = vadd.f32 %v4737, %v4895
      %v4948 = vadd.f32 %v4739, %v4897
      %v4949 = vadd.f32 %v4742, %v4900
      %v4950 = vadd.f32 %v4744, %v4902
      %v4951 = vadd.f32 %v4747, %v4905
      %v4952 = vadd.f32 %v4749, %v4907
      %v4953 = vadd.f32 %v4752, %v4910
      %v4954 = vadd.f32 %v4754, %v4912
      %v4955 = vadd.f32 %v4757, %v4915
      %v4956 = vadd.f32 %v4759, %v4917
      %v4957 = vadd.f32 %v4762, %v4920
      %v4958 = vadd.f32 %v4764, %v4922
      %v4959 = vadd.f32 %v4767, %v4925
      %v4960 = vadd.f32 %v4769, %v4927
      %v4961 = vld [vmem:[#allocation2 + $0x8] sm:$0xf]
      %v4962 = vld [vmem:[#allocation2 + $0xc] sm:$0xf]
      %v4963 = vld [vmem:[#allocation2 + $0x10] sm:$0xf]
      %v4964 = vld [vmem:[#allocation2 + $0x14] sm:$0xf]
      %v4965 = vld [vmem:[#allocation2 + $0x18] sm:$0xf]
      %v4966 = vld [vmem:[#allocation2 + $0x1c] sm:$0xf]
      %v4967 = vld [vmem:[#allocation2 + $0x20] sm:$0xf]
      %v4968 = vld [vmem:[#allocation2 + $0x24] sm:$0xf]
      %v4969 = vld [vmem:[#allocation2 + $0x28] sm:$0xf]
      %v4970 = vld [vmem:[#allocation2 + $0x2c] sm:$0xf]
      %v4971 = vld [vmem:[#allocation2 + $0x30] sm:$0xf]
      %v4972 = vld [vmem:[#allocation2 + $0x34] sm:$0xf]
      %v4973 = vld [vmem:[#allocation2 + $0x38] sm:$0xf]
      %v4974 = vld [vmem:[#allocation2 + $0x3c] sm:$0xf]
      %v4975 = vld [vmem:[#allocation2 + $0x40] sm:$0xf]
      %v4976 = vld [vmem:[#allocation2 + $0x44] sm:$0xf]
      %v4977 = vld [vmem:[#allocation2 + $0x48] sm:$0xf]
      %v4978 = vld [vmem:[#allocation2 + $0x4c] sm:$0xf]
      %v4979 = vld [vmem:[#allocation2 + $0x50] sm:$0xf]
      %v4980 = vld [vmem:[#allocation2 + $0x54] sm:$0xf]
      %v4981 = vld [vmem:[#allocation2 + $0x58] sm:$0xf]
      %v4982 = vld [vmem:[#allocation2 + $0x5c] sm:$0xf]
      %v4983 = vld [vmem:[#allocation2 + $0x60] sm:$0xf]
      %v4984 = vld [vmem:[#allocation2 + $0x64] sm:$0xf]
      %v4985 = vld [vmem:[#allocation2 + $0x68] sm:$0xf]
      %v4986 = vld [vmem:[#allocation2 + $0x6c] sm:$0xf]
      %v4987 = vld [vmem:[#allocation2 + $0x70] sm:$0xf]
      %v4988 = vld [vmem:[#allocation2 + $0x74] sm:$0xf]
      %v4989 = vld [vmem:[#allocation2 + $0x78] sm:$0xf]
      %v4990 = vld [vmem:[#allocation2 + $0x7c] sm:$0xf]
      %v4991 = vld [vmem:[#allocation2 + $0x80] sm:$0xf]
      %v4992 = vld [vmem:[#allocation2 + $0x84] sm:$0xf]
      %v4993 = vld [vmem:[#allocation2 + $0x88] sm:$0x1]
      %s4994 = scalar_lea.vmem %s2, 4
      %v4995 = vld [vmem:[%s4994] sm:$0x3]
      %v4996 = vld [vmem:[#allocation2 + $0x88] sm:$0xf]
      %v4997 = vld [vmem:[#allocation2 + $0x8c] sm:$0xf]
      %v4998 = vld [vmem:[#allocation2 + $0x90] sm:$0x1]
      %s4999 = scalar_lea.vmem %s2, 10
      %v5000 = vld [vmem:[%s4999] sm:$0x3]
      %v5034 = vunpack.c.l.b16 %v4963
      %v5035 = vunpack.c.l.b16 %v4964
      %v5036 = vunpack.c.l.b16 %v4965
      %v5037 = vunpack.c.l.b16 %v4966
      %v5038 = vunpack.c.l.b16 %v4967
      %v5039 = vunpack.c.l.b16 %v4968
      %v5040 = vunpack.c.l.b16 %v4969
      %v5041 = vunpack.c.l.b16 %v4970
      %v5042 = vunpack.c.l.b16 %v4971
      %v5043 = vunpack.c.l.b16 %v4972
      %v5044 = vunpack.c.l.b16 %v4973
      %v5045 = vunpack.c.l.b16 %v4974
      %v5046 = vunpack.c.l.b16 %v4975
      %v5047 = vunpack.c.l.b16 %v4976
      %v5048 = vunpack.c.l.b16 %v4977
      %v5049 = vunpack.c.l.b16 %v4978
      %v5050 = vunpack.c.l.b16 %v4979
      %v5051 = vunpack.c.l.b16 %v4980
      %v5052 = vunpack.c.l.b16 %v4981
      %v5053 = vunpack.c.l.b16 %v4982
      %v5054 = vunpack.c.l.b16 %v4983
      %v5055 = vunpack.c.l.b16 %v4984
      %v5056 = vunpack.c.l.b16 %v4985
      %v5057 = vunpack.c.l.b16 %v4986
      %v5058 = vunpack.c.l.b16 %v4987
      %v5059 = vunpack.c.l.b16 %v4988
      %v5060 = vunpack.c.l.b16 %v4989
      %v5061 = vunpack.c.l.b16 %v4990
      %v5062 = vunpack.c.l.b16 %v4991
      %v5063 = vunpack.c.l.b16 %v4992
      %v5064 = vunpack.c.l.b16 %v4996
      %v5065 = vunpack.c.l.b16 %v4997
      %v5066 = vunpack.c.l.b16 %v4998
      %v5067 = vpack.c.b16 %v5035, %v5034
      %v5068 = vpack.c.b16 %v5037, %v5036
      %v5069 = vpack.c.b16 %v5039, %v5038
      %v5070 = vpack.c.b16 %v5041, %v5040
      %v5071 = vpack.c.b16 %v5043, %v5042
      %v5072 = vpack.c.b16 %v5045, %v5044
      %v5073 = vpack.c.b16 %v5047, %v5046
      %v5074 = vpack.c.b16 %v5049, %v5048
      %v5075 = vpack.c.b16 %v5051, %v5050
      %v5076 = vpack.c.b16 %v5053, %v5052
      %v5077 = vpack.c.b16 %v5055, %v5054
      %v5078 = vpack.c.b16 %v5057, %v5056
      %v5079 = vpack.c.b16 %v5059, %v5058
      %v5080 = vpack.c.b16 %v5061, %v5060
      %v5081 = vpack.c.b16 %v5063, %v5062
      %v5082 = vpack.c.b16 %v5065, %v5064
      %v5083 = vpack.c.b16 %v5066, %v5066
      %v5085 = vshrl.u32 %v5067, 16
      %v5087 = vshll.u32 %v5067, 16
      %v5089 = vrot.slane %v5087, 1
      %v5090 = vor.u32 %v5085, %v5089
      %v5092 = vshll.u32 %v5068, 16
      %v5094 = vrot.slane %v5092, 1
      %v5095 = vsel %vm2450, %v5090, %v5094
      %v5096 = vshrl.u32 %v5068, 16
      %v5098 = vor.u32 %v5096, %v5094
      %v5100 = vshll.u32 %v5069, 16
      %v5102 = vrot.slane %v5100, 1
      %v5103 = vsel %vm2450, %v5098, %v5102
      %v5104 = vshrl.u32 %v5069, 16
      %v5106 = vor.u32 %v5104, %v5102
      %v5108 = vshll.u32 %v5070, 16
      %v5110 = vrot.slane %v5108, 1
      %v5111 = vsel %vm2450, %v5106, %v5110
      %v5112 = vshrl.u32 %v5070, 16
      %v5114 = vor.u32 %v5112, %v5110
      %v5116 = vshll.u32 %v5071, 16
      %v5118 = vrot.slane %v5116, 1
      %v5119 = vsel %vm2450, %v5114, %v5118
      %v5120 = vshrl.u32 %v5071, 16
      %v5122 = vor.u32 %v5120, %v5118
      %v5124 = vshll.u32 %v5072, 16
      %v5126 = vrot.slane %v5124, 1
      %v5127 = vsel %vm2450, %v5122, %v5126
      %v5128 = vshrl.u32 %v5072, 16
      %v5130 = vor.u32 %v5128, %v5126
      %v5132 = vshll.u32 %v5073, 16
      %v5134 = vrot.slane %v5132, 1
      %v5135 = vsel %vm2450, %v5130, %v5134
      %v5136 = vshrl.u32 %v5073, 16
      %v5138 = vor.u32 %v5136, %v5134
      %v5140 = vshll.u32 %v5074, 16
      %v5142 = vrot.slane %v5140, 1
      %v5143 = vsel %vm2450, %v5138, %v5142
      %v5144 = vshrl.u32 %v5074, 16
      %v5146 = vor.u32 %v5144, %v5142
      %v5148 = vshll.u32 %v5075, 16
      %v5150 = vrot.slane %v5148, 1
      %v5151 = vsel %vm2450, %v5146, %v5150
      %v5152 = vshrl.u32 %v5075, 16
      %v5154 = vor.u32 %v5152, %v5150
      %v5156 = vshll.u32 %v5076, 16
      %v5158 = vrot.slane %v5156, 1
      %v5159 = vsel %vm2450, %v5154, %v5158
      %v5160 = vshrl.u32 %v5076, 16
      %v5162 = vor.u32 %v5160, %v5158
      %v5164 = vshll.u32 %v5077, 16
      %v5166 = vrot.slane %v5164, 1
      %v5167 = vsel %vm2450, %v5162, %v5166
      %v5168 = vshrl.u32 %v5077, 16
      %v5170 = vor.u32 %v5168, %v5166
      %v5172 = vshll.u32 %v5078, 16
      %v5174 = vrot.slane %v5172, 1
      %v5175 = vsel %vm2450, %v5170, %v5174
      %v5176 = vshrl.u32 %v5078, 16
      %v5178 = vor.u32 %v5176, %v5174
      %v5180 = vshll.u32 %v5079, 16
      %v5182 = vrot.slane %v5180, 1
      %v5183 = vsel %vm2450, %v5178, %v5182
      %v5184 = vshrl.u32 %v5079, 16
      %v5186 = vor.u32 %v5184, %v5182
      %v5188 = vshll.u32 %v5080, 16
      %v5190 = vrot.slane %v5188, 1
      %v5191 = vsel %vm2450, %v5186, %v5190
      %v5192 = vshrl.u32 %v5080, 16
      %v5194 = vor.u32 %v5192, %v5190
      %v5196 = vshll.u32 %v5081, 16
      %v5198 = vrot.slane %v5196, 1
      %v5199 = vsel %vm2450, %v5194, %v5198
      %v5200 = vshrl.u32 %v5081, 16
      %v5202 = vor.u32 %v5200, %v5198
      %v5204 = vshll.u32 %v5082, 16
      %v5206 = vrot.slane %v5204, 1
      %v5207 = vsel %vm2450, %v5202, %v5206
      %v5208 = vshrl.u32 %v5082, 16
      %v5210 = vor.u32 %v5208, %v5206
      %v5212 = vshll.u32 %v5083, 16
      %v5214 = vrot.slane %v5212, 1
      %v5215 = vsel %vm2450, %v5210, %v5214
      %v5217 = vsel %vm1160, %v5095, 0
      %v5220 = vsel %vm1160, %v5103, 0
      %v5223 = vsel %vm1160, %v5111, 0
      %v5226 = vsel %vm1160, %v5119, 0
      %v5229 = vsel %vm1160, %v5127, 0
      %v5232 = vsel %vm1160, %v5135, 0
      %v5235 = vsel %vm1160, %v5143, 0
      %v5238 = vsel %vm1160, %v5151, 0
      %v5241 = vsel %vm1160, %v5159, 0
      %v5244 = vsel %vm1160, %v5167, 0
      %v5247 = vsel %vm1160, %v5175, 0
      %v5250 = vsel %vm1160, %v5183, 0
      %v5253 = vsel %vm1160, %v5191, 0
      %v5256 = vsel %vm1160, %v5199, 0
      %v5259 = vsel %vm1160, %v5207, 0
      %v5262 = vsel %vm1160, %v5215, 0
      %v5265 = vsel %vm1209, %v5000, 0
      %5267 = vmatpush.bf16.msra.mxu0 0
      %5268 = vmatpush.bf16.msra.mxu0 0
      %5269 = vmatpush.bf16.msra.mxu0 0
      %5270 = vmatpush.bf16.msra.mxu0 0
      %5271 = vmatpush.bf16.msra.mxu0 0
      %5272 = vmatpush.bf16.msra.mxu0 0
      %5273 = vmatpush.bf16.msra.mxu0 0
      %5274 = vmatpush.bf16.msra.mxu0 %v5265
      %5275 = vmatmul.bf16.gmra.mxu0 %v5217
      %v5276 = vpop.f32.mrf.mxu0
      %v5277 = vadd.f32 0.0, %v5276
      %v5278 = vpop.f32.mrf.mxu0
      %v5279 = vadd.f32 0.0, %v5278
      %5280 = vmatmul.bf16.gmra.mxu0 %v5220
      %v5281 = vpop.f32.mrf.mxu0
      %v5282 = vadd.f32 0.0, %v5281
      %v5283 = vpop.f32.mrf.mxu0
      %v5284 = vadd.f32 0.0, %v5283
      %5285 = vmatmul.bf16.gmra.mxu0 %v5223
      %v5286 = vpop.f32.mrf.mxu0
      %v5287 = vadd.f32 0.0, %v5286
      %v5288 = vpop.f32.mrf.mxu0
      %v5289 = vadd.f32 0.0, %v5288
      %5290 = vmatmul.bf16.gmra.mxu0 %v5226
      %v5291 = vpop.f32.mrf.mxu0
      %v5292 = vadd.f32 0.0, %v5291
      %v5293 = vpop.f32.mrf.mxu0
      %v5294 = vadd.f32 0.0, %v5293
      %5295 = vmatmul.bf16.gmra.mxu0 %v5229
      %v5296 = vpop.f32.mrf.mxu0
      %v5297 = vadd.f32 0.0, %v5296
      %v5298 = vpop.f32.mrf.mxu0
      %v5299 = vadd.f32 0.0, %v5298
      %5300 = vmatmul.bf16.gmra.mxu0 %v5232
      %v5301 = vpop.f32.mrf.mxu0
      %v5302 = vadd.f32 0.0, %v5301
      %v5303 = vpop.f32.mrf.mxu0
      %v5304 = vadd.f32 0.0, %v5303
      %5305 = vmatmul.bf16.gmra.mxu0 %v5235
      %v5306 = vpop.f32.mrf.mxu0
      %v5307 = vadd.f32 0.0, %v5306
      %v5308 = vpop.f32.mrf.mxu0
      %v5309 = vadd.f32 0.0, %v5308
      %5310 = vmatmul.bf16.gmra.mxu0 %v5238
      %v5311 = vpop.f32.mrf.mxu0
      %v5312 = vadd.f32 0.0, %v5311
      %v5313 = vpop.f32.mrf.mxu0
      %v5314 = vadd.f32 0.0, %v5313
      %5315 = vmatmul.bf16.gmra.mxu0 %v5241
      %v5316 = vpop.f32.mrf.mxu0
      %v5317 = vadd.f32 0.0, %v5316
      %v5318 = vpop.f32.mrf.mxu0
      %v5319 = vadd.f32 0.0, %v5318
      %5320 = vmatmul.bf16.gmra.mxu0 %v5244
      %v5321 = vpop.f32.mrf.mxu0
      %v5322 = vadd.f32 0.0, %v5321
      %v5323 = vpop.f32.mrf.mxu0
      %v5324 = vadd.f32 0.0, %v5323
      %5325 = vmatmul.bf16.gmra.mxu0 %v5247
      %v5326 = vpop.f32.mrf.mxu0
      %v5327 = vadd.f32 0.0, %v5326
      %v5328 = vpop.f32.mrf.mxu0
      %v5329 = vadd.f32 0.0, %v5328
      %5330 = vmatmul.bf16.gmra.mxu0 %v5250
      %v5331 = vpop.f32.mrf.mxu0
      %v5332 = vadd.f32 0.0, %v5331
      %v5333 = vpop.f32.mrf.mxu0
      %v5334 = vadd.f32 0.0, %v5333
      %5335 = vmatmul.bf16.gmra.mxu0 %v5253
      %v5336 = vpop.f32.mrf.mxu0
      %v5337 = vadd.f32 0.0, %v5336
      %v5338 = vpop.f32.mrf.mxu0
      %v5339 = vadd.f32 0.0, %v5338
      %5340 = vmatmul.bf16.gmra.mxu0 %v5256
      %v5341 = vpop.f32.mrf.mxu0
      %v5342 = vadd.f32 0.0, %v5341
      %v5343 = vpop.f32.mrf.mxu0
      %v5344 = vadd.f32 0.0, %v5343
      %5345 = vmatmul.bf16.gmra.mxu0 %v5259
      %v5346 = vpop.f32.mrf.mxu0
      %v5347 = vadd.f32 0.0, %v5346
      %v5348 = vpop.f32.mrf.mxu0
      %v5349 = vadd.f32 0.0, %v5348
      %5350 = vmatmul.bf16.gmra.mxu0 %v5262
      %v5351 = vpop.f32.mrf.mxu0
      %v5352 = vadd.f32 0.0, %v5351
      %v5353 = vpop.f32.mrf.mxu0
      %v5354 = vadd.f32 0.0, %v5353
      %5355 = vdwg.mxu0
      %v5359 = vunpack.c.l.b16 %v4961
      %v5360 = vunpack.c.l.b16 %v4962
      %v5361 = vunpack.c.l.b16 %v4993
      %v5362 = vpack.c.b16 %v5360, %v5359
      %v5363 = vpack.c.b16 %v5361, %v5361
      %v5365 = vshrl.u32 %v5362, 16
      %v5367 = vshll.u32 %v5362, 16
      %v5369 = vrot.slane %v5367, 1
      %v5370 = vor.u32 %v5365, %v5369
      %v5371 = vsel %vm2450, %v5370, %v5089
      %v5373 = vshll.u32 %v5363, 16
      %v5375 = vrot.slane %v5373, 1
      %v5376 = vsel %vm2450, %v5202, %v5375
      %v5378 = vsel %vm1160, %v5371, 0
      %v5381 = vsel %vm1160, %v5376, 0
      %v5384 = vsel %vm1209, %v4995, 0
      %5386 = vmatpush.bf16.msra.mxu0 0
      %5387 = vmatpush.bf16.msra.mxu0 0
      %5388 = vmatpush.bf16.msra.mxu0 0
      %5389 = vmatpush.bf16.msra.mxu0 0
      %5390 = vmatpush.bf16.msra.mxu0 0
      %5391 = vmatpush.bf16.msra.mxu0 0
      %5392 = vmatpush.bf16.msra.mxu0 0
      %5393 = vmatpush.bf16.msra.mxu0 %v5384
      %5394 = vmatmul.bf16.gmra.mxu0 %v5378
      %v5395 = vpop.f32.mrf.mxu0
      %v5396 = vadd.f32 %v5277, %v5395
      %v5397 = vpop.f32.mrf.mxu0
      %v5398 = vadd.f32 %v5279, %v5397
      %5399 = vmatmul.bf16.gmra.mxu0 %v5217
      %v5400 = vpop.f32.mrf.mxu0
      %v5401 = vadd.f32 %v5282, %v5400
      %v5402 = vpop.f32.mrf.mxu0
      %v5403 = vadd.f32 %v5284, %v5402
      %5404 = vmatmul.bf16.gmra.mxu0 %v5220
      %v5405 = vpop.f32.mrf.mxu0
      %v5406 = vadd.f32 %v5287, %v5405
      %v5407 = vpop.f32.mrf.mxu0
      %v5408 = vadd.f32 %v5289, %v5407
      %5409 = vmatmul.bf16.gmra.mxu0 %v5223
      %v5410 = vpop.f32.mrf.mxu0
      %v5411 = vadd.f32 %v5292, %v5410
      %v5412 = vpop.f32.mrf.mxu0
      %v5413 = vadd.f32 %v5294, %v5412
      %5414 = vmatmul.bf16.gmra.mxu0 %v5226
      %v5415 = vpop.f32.mrf.mxu0
      %v5416 = vadd.f32 %v5297, %v5415
      %v5417 = vpop.f32.mrf.mxu0
      %v5418 = vadd.f32 %v5299, %v5417
      %5419 = vmatmul.bf16.gmra.mxu0 %v5229
      %v5420 = vpop.f32.mrf.mxu0
      %v5421 = vadd.f32 %v5302, %v5420
      %v5422 = vpop.f32.mrf.mxu0
      %v5423 = vadd.f32 %v5304, %v5422
      %5424 = vmatmul.bf16.gmra.mxu0 %v5232
      %v5425 = vpop.f32.mrf.mxu0
      %v5426 = vadd.f32 %v5307, %v5425
      %v5427 = vpop.f32.mrf.mxu0
      %v5428 = vadd.f32 %v5309, %v5427
      %5429 = vmatmul.bf16.gmra.mxu0 %v5235
      %v5430 = vpop.f32.mrf.mxu0
      %v5431 = vadd.f32 %v5312, %v5430
      %v5432 = vpop.f32.mrf.mxu0
      %v5433 = vadd.f32 %v5314, %v5432
      %5434 = vmatmul.bf16.gmra.mxu0 %v5238
      %v5435 = vpop.f32.mrf.mxu0
      %v5436 = vadd.f32 %v5317, %v5435
      %v5437 = vpop.f32.mrf.mxu0
      %v5438 = vadd.f32 %v5319, %v5437
      %5439 = vmatmul.bf16.gmra.mxu0 %v5241
      %v5440 = vpop.f32.mrf.mxu0
      %v5441 = vadd.f32 %v5322, %v5440
      %v5442 = vpop.f32.mrf.mxu0
      %v5443 = vadd.f32 %v5324, %v5442
      %5444 = vmatmul.bf16.gmra.mxu0 %v5244
      %v5445 = vpop.f32.mrf.mxu0
      %v5446 = vadd.f32 %v5327, %v5445
      %v5447 = vpop.f32.mrf.mxu0
      %v5448 = vadd.f32 %v5329, %v5447
      %5449 = vmatmul.bf16.gmra.mxu0 %v5247
      %v5450 = vpop.f32.mrf.mxu0
      %v5451 = vadd.f32 %v5332, %v5450
      %v5452 = vpop.f32.mrf.mxu0
      %v5453 = vadd.f32 %v5334, %v5452
      %5454 = vmatmul.bf16.gmra.mxu0 %v5250
      %v5455 = vpop.f32.mrf.mxu0
      %v5456 = vadd.f32 %v5337, %v5455
      %v5457 = vpop.f32.mrf.mxu0
      %v5458 = vadd.f32 %v5339, %v5457
      %5459 = vmatmul.bf16.gmra.mxu0 %v5253
      %v5460 = vpop.f32.mrf.mxu0
      %v5461 = vadd.f32 %v5342, %v5460
      %v5462 = vpop.f32.mrf.mxu0
      %v5463 = vadd.f32 %v5344, %v5462
      %5464 = vmatmul.bf16.gmra.mxu0 %v5256
      %v5465 = vpop.f32.mrf.mxu0
      %v5466 = vadd.f32 %v5347, %v5465
      %v5467 = vpop.f32.mrf.mxu0
      %v5468 = vadd.f32 %v5349, %v5467
      %5469 = vmatmul.bf16.gmra.mxu0 %v5381
      %v5470 = vpop.f32.mrf.mxu0
      %v5471 = vadd.f32 %v5352, %v5470
      %v5472 = vpop.f32.mrf.mxu0
      %v5473 = vadd.f32 %v5354, %v5472
      %5474 = vdwg.mxu0
      %v5475 = vld [vmem:[#allocation2 + $0x18] sm:$0xf]
      %v5476 = vld [vmem:[#allocation2 + $0x1c] sm:$0xf]
      %v5477 = vld [vmem:[#allocation2 + $0x20] sm:$0xf]
      %v5478 = vld [vmem:[#allocation2 + $0x24] sm:$0xf]
      %v5479 = vld [vmem:[#allocation2 + $0x28] sm:$0xf]
      %v5480 = vld [vmem:[#allocation2 + $0x2c] sm:$0xf]
      %v5481 = vld [vmem:[#allocation2 + $0x30] sm:$0xf]
      %v5482 = vld [vmem:[#allocation2 + $0x34] sm:$0xf]
      %v5483 = vld [vmem:[#allocation2 + $0x38] sm:$0xf]
      %v5484 = vld [vmem:[#allocation2 + $0x3c] sm:$0xf]
      %v5485 = vld [vmem:[#allocation2 + $0x40] sm:$0xf]
      %v5486 = vld [vmem:[#allocation2 + $0x44] sm:$0xf]
      %v5487 = vld [vmem:[#allocation2 + $0x48] sm:$0xf]
      %v5488 = vld [vmem:[#allocation2 + $0x4c] sm:$0xf]
      %v5489 = vld [vmem:[#allocation2 + $0x50] sm:$0xf]
      %v5490 = vld [vmem:[#allocation2 + $0x54] sm:$0xf]
      %v5491 = vld [vmem:[#allocation2 + $0x58] sm:$0xf]
      %v5492 = vld [vmem:[#allocation2 + $0x5c] sm:$0xf]
      %v5493 = vld [vmem:[#allocation2 + $0x60] sm:$0xf]
      %v5494 = vld [vmem:[#allocation2 + $0x64] sm:$0xf]
      %v5495 = vld [vmem:[#allocation2 + $0x68] sm:$0xf]
      %v5496 = vld [vmem:[#allocation2 + $0x6c] sm:$0xf]
      %v5497 = vld [vmem:[#allocation2 + $0x70] sm:$0xf]
      %v5498 = vld [vmem:[#allocation2 + $0x74] sm:$0xf]
      %v5499 = vld [vmem:[#allocation2 + $0x78] sm:$0xf]
      %v5500 = vld [vmem:[#allocation2 + $0x7c] sm:$0xf]
      %v5501 = vld [vmem:[#allocation2 + $0x80] sm:$0xf]
      %v5502 = vld [vmem:[#allocation2 + $0x84] sm:$0xf]
      %v5503 = vld [vmem:[#allocation2 + $0x88] sm:$0xf]
      %v5504 = vld [vmem:[#allocation2 + $0x8c] sm:$0xf]
      %v5505 = vld [vmem:[#allocation2 + $0x90] sm:$0xf]
      %v5506 = vld [vmem:[#allocation2 + $0x94] sm:$0xf]
      %v5507 = vld [vmem:[#allocation2 + $0x98] sm:$0x1]
      %s5508 = scalar_lea.vmem %s2, 16
      %v5509 = vld [vmem:[%s5508] sm:$0x3]
      %v5543 = vunpack.c.l.b16 %v5475
      %v5544 = vunpack.c.l.b16 %v5476
      %v5545 = vunpack.c.l.b16 %v5477
      %v5546 = vunpack.c.l.b16 %v5478
      %v5547 = vunpack.c.l.b16 %v5479
      %v5548 = vunpack.c.l.b16 %v5480
      %v5549 = vunpack.c.l.b16 %v5481
      %v5550 = vunpack.c.l.b16 %v5482
      %v5551 = vunpack.c.l.b16 %v5483
      %v5552 = vunpack.c.l.b16 %v5484
      %v5553 = vunpack.c.l.b16 %v5485
      %v5554 = vunpack.c.l.b16 %v5486
      %v5555 = vunpack.c.l.b16 %v5487
      %v5556 = vunpack.c.l.b16 %v5488
      %v5557 = vunpack.c.l.b16 %v5489
      %v5558 = vunpack.c.l.b16 %v5490
      %v5559 = vunpack.c.l.b16 %v5491
      %v5560 = vunpack.c.l.b16 %v5492
      %v5561 = vunpack.c.l.b16 %v5493
      %v5562 = vunpack.c.l.b16 %v5494
      %v5563 = vunpack.c.l.b16 %v5495
      %v5564 = vunpack.c.l.b16 %v5496
      %v5565 = vunpack.c.l.b16 %v5497
      %v5566 = vunpack.c.l.b16 %v5498
      %v5567 = vunpack.c.l.b16 %v5499
      %v5568 = vunpack.c.l.b16 %v5500
      %v5569 = vunpack.c.l.b16 %v5501
      %v5570 = vunpack.c.l.b16 %v5502
      %v5571 = vunpack.c.l.b16 %v5503
      %v5572 = vunpack.c.l.b16 %v5504
      %v5573 = vunpack.c.l.b16 %v5505
      %v5574 = vunpack.c.l.b16 %v5506
      %v5575 = vunpack.c.l.b16 %v5507
      %v5576 = vpack.c.b16 %v5544, %v5543
      %v5577 = vpack.c.b16 %v5546, %v5545
      %v5578 = vpack.c.b16 %v5548, %v5547
      %v5579 = vpack.c.b16 %v5550, %v5549
      %v5580 = vpack.c.b16 %v5552, %v5551
      %v5581 = vpack.c.b16 %v5554, %v5553
      %v5582 = vpack.c.b16 %v5556, %v5555
      %v5583 = vpack.c.b16 %v5558, %v5557
      %v5584 = vpack.c.b16 %v5560, %v5559
      %v5585 = vpack.c.b16 %v5562, %v5561
      %v5586 = vpack.c.b16 %v5564, %v5563
      %v5587 = vpack.c.b16 %v5566, %v5565
      %v5588 = vpack.c.b16 %v5568, %v5567
      %v5589 = vpack.c.b16 %v5570, %v5569
      %v5590 = vpack.c.b16 %v5572, %v5571
      %v5591 = vpack.c.b16 %v5574, %v5573
      %v5592 = vpack.c.b16 %v5575, %v5575
      %v5594 = vshrl.u32 %v5576, 16
      %v5596 = vshll.u32 %v5576, 16
      %v5598 = vrot.slane %v5596, 1
      %v5599 = vor.u32 %v5594, %v5598
      %v5601 = vshll.u32 %v5577, 16
      %v5603 = vrot.slane %v5601, 1
      %v5604 = vsel %vm2450, %v5599, %v5603
      %v5605 = vshrl.u32 %v5577, 16
      %v5607 = vor.u32 %v5605, %v5603
      %v5609 = vshll.u32 %v5578, 16
      %v5611 = vrot.slane %v5609, 1
      %v5612 = vsel %vm2450, %v5607, %v5611
      %v5613 = vshrl.u32 %v5578, 16
      %v5615 = vor.u32 %v5613, %v5611
      %v5617 = vshll.u32 %v5579, 16
      %v5619 = vrot.slane %v5617, 1
      %v5620 = vsel %vm2450, %v5615, %v5619
      %v5621 = vshrl.u32 %v5579, 16
      %v5623 = vor.u32 %v5621, %v5619
      %v5625 = vshll.u32 %v5580, 16
      %v5627 = vrot.slane %v5625, 1
      %v5628 = vsel %vm2450, %v5623, %v5627
      %v5629 = vshrl.u32 %v5580, 16
      %v5631 = vor.u32 %v5629, %v5627
      %v5633 = vshll.u32 %v5581, 16
      %v5635 = vrot.slane %v5633, 1
      %v5636 = vsel %vm2450, %v5631, %v5635
      %v5637 = vshrl.u32 %v5581, 16
      %v5639 = vor.u32 %v5637, %v5635
      %v5641 = vshll.u32 %v5582, 16
      %v5643 = vrot.slane %v5641, 1
      %v5644 = vsel %vm2450, %v5639, %v5643
      %v5645 = vshrl.u32 %v5582, 16
      %v5647 = vor.u32 %v5645, %v5643
      %v5649 = vshll.u32 %v5583, 16
      %v5651 = vrot.slane %v5649, 1
      %v5652 = vsel %vm2450, %v5647, %v5651
      %v5653 = vshrl.u32 %v5583, 16
      %v5655 = vor.u32 %v5653, %v5651
      %v5657 = vshll.u32 %v5584, 16
      %v5659 = vrot.slane %v5657, 1
      %v5660 = vsel %vm2450, %v5655, %v5659
      %v5661 = vshrl.u32 %v5584, 16
      %v5663 = vor.u32 %v5661, %v5659
      %v5665 = vshll.u32 %v5585, 16
      %v5667 = vrot.slane %v5665, 1
      %v5668 = vsel %vm2450, %v5663, %v5667
      %v5669 = vshrl.u32 %v5585, 16
      %v5671 = vor.u32 %v5669, %v5667
      %v5673 = vshll.u32 %v5586, 16
      %v5675 = vrot.slane %v5673, 1
      %v5676 = vsel %vm2450, %v5671, %v5675
      %v5677 = vshrl.u32 %v5586, 16
      %v5679 = vor.u32 %v5677, %v5675
      %v5681 = vshll.u32 %v5587, 16
      %v5683 = vrot.slane %v5681, 1
      %v5684 = vsel %vm2450, %v5679, %v5683
      %v5685 = vshrl.u32 %v5587, 16
      %v5687 = vor.u32 %v5685, %v5683
      %v5689 = vshll.u32 %v5588, 16
      %v5691 = vrot.slane %v5689, 1
      %v5692 = vsel %vm2450, %v5687, %v5691
      %v5693 = vshrl.u32 %v5588, 16
      %v5695 = vor.u32 %v5693, %v5691
      %v5697 = vshll.u32 %v5589, 16
      %v5699 = vrot.slane %v5697, 1
      %v5700 = vsel %vm2450, %v5695, %v5699
      %v5701 = vshrl.u32 %v5589, 16
      %v5703 = vor.u32 %v5701, %v5699
      %v5705 = vshll.u32 %v5590, 16
      %v5707 = vrot.slane %v5705, 1
      %v5708 = vsel %vm2450, %v5703, %v5707
      %v5709 = vshrl.u32 %v5590, 16
      %v5711 = vor.u32 %v5709, %v5707
      %v5713 = vshll.u32 %v5591, 16
      %v5715 = vrot.slane %v5713, 1
      %v5716 = vsel %vm2450, %v5711, %v5715
      %v5717 = vshrl.u32 %v5591, 16
      %v5719 = vor.u32 %v5717, %v5715
      %v5721 = vshll.u32 %v5592, 16
      %v5723 = vrot.slane %v5721, 1
      %v5724 = vsel %vm2450, %v5719, %v5723
      %v5726 = vsel %vm1160, %v5604, 0
      %v5729 = vsel %vm1160, %v5612, 0
      %v5732 = vsel %vm1160, %v5620, 0
      %v5735 = vsel %vm1160, %v5628, 0
      %v5738 = vsel %vm1160, %v5636, 0
      %v5741 = vsel %vm1160, %v5644, 0
      %v5744 = vsel %vm1160, %v5652, 0
      %v5747 = vsel %vm1160, %v5660, 0
      %v5750 = vsel %vm1160, %v5668, 0
      %v5753 = vsel %vm1160, %v5676, 0
      %v5756 = vsel %vm1160, %v5684, 0
      %v5759 = vsel %vm1160, %v5692, 0
      %v5762 = vsel %vm1160, %v5700, 0
      %v5765 = vsel %vm1160, %v5708, 0
      %v5768 = vsel %vm1160, %v5716, 0
      %v5771 = vsel %vm1160, %v5724, 0
      %v5774 = vsel %vm1209, %v5509, 0
      %5776 = vmatpush.bf16.msra.mxu0 0
      %5777 = vmatpush.bf16.msra.mxu0 0
      %5778 = vmatpush.bf16.msra.mxu0 0
      %5779 = vmatpush.bf16.msra.mxu0 0
      %5780 = vmatpush.bf16.msra.mxu0 0
      %5781 = vmatpush.bf16.msra.mxu0 0
      %5782 = vmatpush.bf16.msra.mxu0 0
      %5783 = vmatpush.bf16.msra.mxu0 %v5774
      %5784 = vmatmul.bf16.gmra.mxu0 %v5726
      %v5785 = vpop.f32.mrf.mxu0
      %v5786 = vadd.f32 0.0, %v5785
      %v5787 = vpop.f32.mrf.mxu0
      %v5788 = vadd.f32 0.0, %v5787
      %5789 = vmatmul.bf16.gmra.mxu0 %v5729
      %v5790 = vpop.f32.mrf.mxu0
      %v5791 = vadd.f32 0.0, %v5790
      %v5792 = vpop.f32.mrf.mxu0
      %v5793 = vadd.f32 0.0, %v5792
      %5794 = vmatmul.bf16.gmra.mxu0 %v5732
      %v5795 = vpop.f32.mrf.mxu0
      %v5796 = vadd.f32 0.0, %v5795
      %v5797 = vpop.f32.mrf.mxu0
      %v5798 = vadd.f32 0.0, %v5797
      %5799 = vmatmul.bf16.gmra.mxu0 %v5735
      %v5800 = vpop.f32.mrf.mxu0
      %v5801 = vadd.f32 0.0, %v5800
      %v5802 = vpop.f32.mrf.mxu0
      %v5803 = vadd.f32 0.0, %v5802
      %5804 = vmatmul.bf16.gmra.mxu0 %v5738
      %v5805 = vpop.f32.mrf.mxu0
      %v5806 = vadd.f32 0.0, %v5805
      %v5807 = vpop.f32.mrf.mxu0
      %v5808 = vadd.f32 0.0, %v5807
      %5809 = vmatmul.bf16.gmra.mxu0 %v5741
      %v5810 = vpop.f32.mrf.mxu0
      %v5811 = vadd.f32 0.0, %v5810
      %v5812 = vpop.f32.mrf.mxu0
      %v5813 = vadd.f32 0.0, %v5812
      %5814 = vmatmul.bf16.gmra.mxu0 %v5744
      %v5815 = vpop.f32.mrf.mxu0
      %v5816 = vadd.f32 0.0, %v5815
      %v5817 = vpop.f32.mrf.mxu0
      %v5818 = vadd.f32 0.0, %v5817
      %5819 = vmatmul.bf16.gmra.mxu0 %v5747
      %v5820 = vpop.f32.mrf.mxu0
      %v5821 = vadd.f32 0.0, %v5820
      %v5822 = vpop.f32.mrf.mxu0
      %v5823 = vadd.f32 0.0, %v5822
      %5824 = vmatmul.bf16.gmra.mxu0 %v5750
      %v5825 = vpop.f32.mrf.mxu0
      %v5826 = vadd.f32 0.0, %v5825
      %v5827 = vpop.f32.mrf.mxu0
      %v5828 = vadd.f32 0.0, %v5827
      %5829 = vmatmul.bf16.gmra.mxu0 %v5753
      %v5830 = vpop.f32.mrf.mxu0
      %v5831 = vadd.f32 0.0, %v5830
      %v5832 = vpop.f32.mrf.mxu0
      %v5833 = vadd.f32 0.0, %v5832
      %5834 = vmatmul.bf16.gmra.mxu0 %v5756
      %v5835 = vpop.f32.mrf.mxu0
      %v5836 = vadd.f32 0.0, %v5835
      %v5837 = vpop.f32.mrf.mxu0
      %v5838 = vadd.f32 0.0, %v5837
      %5839 = vmatmul.bf16.gmra.mxu0 %v5759
      %v5840 = vpop.f32.mrf.mxu0
      %v5841 = vadd.f32 0.0, %v5840
      %v5842 = vpop.f32.mrf.mxu0
      %v5843 = vadd.f32 0.0, %v5842
      %5844 = vmatmul.bf16.gmra.mxu0 %v5762
      %v5845 = vpop.f32.mrf.mxu0
      %v5846 = vadd.f32 0.0, %v5845
      %v5847 = vpop.f32.mrf.mxu0
      %v5848 = vadd.f32 0.0, %v5847
      %5849 = vmatmul.bf16.gmra.mxu0 %v5765
      %v5850 = vpop.f32.mrf.mxu0
      %v5851 = vadd.f32 0.0, %v5850
      %v5852 = vpop.f32.mrf.mxu0
      %v5853 = vadd.f32 0.0, %v5852
      %5854 = vmatmul.bf16.gmra.mxu0 %v5768
      %v5855 = vpop.f32.mrf.mxu0
      %v5856 = vadd.f32 0.0, %v5855
      %v5857 = vpop.f32.mrf.mxu0
      %v5858 = vadd.f32 0.0, %v5857
      %5859 = vmatmul.bf16.gmra.mxu0 %v5771
      %v5860 = vpop.f32.mrf.mxu0
      %v5861 = vadd.f32 0.0, %v5860
      %v5862 = vpop.f32.mrf.mxu0
      %v5863 = vadd.f32 0.0, %v5862
      %5864 = vdwg.mxu0
      %v5865 = vadd.f32 %v5396, %v5786
      %v5866 = vadd.f32 %v5398, %v5788
      %v5867 = vadd.f32 %v5401, %v5791
      %v5868 = vadd.f32 %v5403, %v5793
      %v5869 = vadd.f32 %v5406, %v5796
      %v5870 = vadd.f32 %v5408, %v5798
      %v5871 = vadd.f32 %v5411, %v5801
      %v5872 = vadd.f32 %v5413, %v5803
      %v5873 = vadd.f32 %v5416, %v5806
      %v5874 = vadd.f32 %v5418, %v5808
      %v5875 = vadd.f32 %v5421, %v5811
      %v5876 = vadd.f32 %v5423, %v5813
      %v5877 = vadd.f32 %v5426, %v5816
      %v5878 = vadd.f32 %v5428, %v5818
      %v5879 = vadd.f32 %v5431, %v5821
      %v5880 = vadd.f32 %v5433, %v5823
      %v5881 = vadd.f32 %v5436, %v5826
      %v5882 = vadd.f32 %v5438, %v5828
      %v5883 = vadd.f32 %v5441, %v5831
      %v5884 = vadd.f32 %v5443, %v5833
      %v5885 = vadd.f32 %v5446, %v5836
      %v5886 = vadd.f32 %v5448, %v5838
      %v5887 = vadd.f32 %v5451, %v5841
      %v5888 = vadd.f32 %v5453, %v5843
      %v5889 = vadd.f32 %v5456, %v5846
      %v5890 = vadd.f32 %v5458, %v5848
      %v5891 = vadd.f32 %v5461, %v5851
      %v5892 = vadd.f32 %v5463, %v5853
      %v5893 = vadd.f32 %v5466, %v5856
      %v5894 = vadd.f32 %v5468, %v5858
      %v5895 = vadd.f32 %v5471, %v5861
      %v5896 = vadd.f32 %v5473, %v5863
      %v5897 = vmul.f32 %v757, %v4483
      %v5898 = vmul.f32 %v758, %v4484
      %v5899 = vmul.f32 %v759, %v4485
      %v5900 = vmul.f32 %v760, %v4486
      %v5901 = vmul.f32 %v761, %v4487
      %v5902 = vmul.f32 %v762, %v4488
      %v5903 = vmul.f32 %v763, %v4489
      %v5904 = vmul.f32 %v764, %v4490
      %v5905 = vmul.f32 %v765, %v4491
      %v5906 = vmul.f32 %v766, %v4492
      %v5907 = vmul.f32 %v767, %v4493
      %v5908 = vmul.f32 %v768, %v4494
      %v5909 = vmul.f32 %v769, %v4495
      %v5910 = vmul.f32 %v770, %v4496
      %v5911 = vmul.f32 %v771, %v4497
      %v5912 = vmul.f32 %v772, %v4498
      %v5913 = vmul.f32 %v773, %v4499
      %v5914 = vmul.f32 %v774, %v4500
      %v5915 = vmul.f32 %v775, %v4501
      %v5916 = vmul.f32 %v776, %v4502
      %v5917 = vmul.f32 %v777, %v4503
      %v5918 = vmul.f32 %v778, %v4504
      %v5919 = vmul.f32 %v779, %v4505
      %v5920 = vmul.f32 %v780, %v4506
      %v5921 = vmul.f32 %v781, %v4507
      %v5922 = vmul.f32 %v782, %v4508
      %v5923 = vmul.f32 %v783, %v4509
      %v5924 = vmul.f32 %v784, %v4510
      %v5925 = vmul.f32 %v785, %v4511
      %v5926 = vmul.f32 %v786, %v4512
      %v5927 = vmul.f32 %v787, %v4513
      %v5928 = vmul.f32 %v788, %v4514
      %v5929 = vadd.f32 %v5897, %v4929
      %v5930 = vadd.f32 %v5898, %v4930
      %v5931 = vadd.f32 %v5899, %v4931
      %v5932 = vadd.f32 %v5900, %v4932
      %v5933 = vadd.f32 %v5901, %v4933
      %v5934 = vadd.f32 %v5902, %v4934
      %v5935 = vadd.f32 %v5903, %v4935
      %v5936 = vadd.f32 %v5904, %v4936
      %v5937 = vadd.f32 %v5905, %v4937
      %v5938 = vadd.f32 %v5906, %v4938
      %v5939 = vadd.f32 %v5907, %v4939
      %v5940 = vadd.f32 %v5908, %v4940
      %v5941 = vadd.f32 %v5909, %v4941
      %v5942 = vadd.f32 %v5910, %v4942
      %v5943 = vadd.f32 %v5911, %v4943
      %v5944 = vadd.f32 %v5912, %v4944
      %v5945 = vadd.f32 %v5913, %v4945
      %v5946 = vadd.f32 %v5914, %v4946
      %v5947 = vadd.f32 %v5915, %v4947
      %v5948 = vadd.f32 %v5916, %v4948
      %v5949 = vadd.f32 %v5917, %v4949
      %v5950 = vadd.f32 %v5918, %v4950
      %v5951 = vadd.f32 %v5919, %v4951
      %v5952 = vadd.f32 %v5920, %v4952
      %v5953 = vadd.f32 %v5921, %v4953
      %v5954 = vadd.f32 %v5922, %v4954
      %v5955 = vadd.f32 %v5923, %v4955
      %v5956 = vadd.f32 %v5924, %v4956
      %v5957 = vadd.f32 %v5925, %v4957
      %v5958 = vadd.f32 %v5926, %v4958
      %v5959 = vadd.f32 %v5927, %v4959
      %v5960 = vadd.f32 %v5928, %v4960
      %v5961 = vmul.f32 %v853, %v5865
      %v5962 = vmul.f32 %v854, %v5866
      %v5963 = vmul.f32 %v855, %v5867
      %v5964 = vmul.f32 %v856, %v5868
      %v5965 = vmul.f32 %v857, %v5869
      %v5966 = vmul.f32 %v858, %v5870
      %v5967 = vmul.f32 %v859, %v5871
      %v5968 = vmul.f32 %v860, %v5872
      %v5969 = vmul.f32 %v861, %v5873
      %v5970 = vmul.f32 %v862, %v5874
      %v5971 = vmul.f32 %v863, %v5875
      %v5972 = vmul.f32 %v864, %v5876
      %v5973 = vmul.f32 %v865, %v5877
      %v5974 = vmul.f32 %v866, %v5878
      %v5975 = vmul.f32 %v867, %v5879
      %v5976 = vmul.f32 %v868, %v5880
      %v5977 = vmul.f32 %v869, %v5881
      %v5978 = vmul.f32 %v870, %v5882
      %v5979 = vmul.f32 %v871, %v5883
      %v5980 = vmul.f32 %v872, %v5884
      %v5981 = vmul.f32 %v873, %v5885
      %v5982 = vmul.f32 %v874, %v5886
      %v5983 = vmul.f32 %v875, %v5887
      %v5984 = vmul.f32 %v876, %v5888
      %v5985 = vmul.f32 %v877, %v5889
      %v5986 = vmul.f32 %v878, %v5890
      %v5987 = vmul.f32 %v879, %v5891
      %v5988 = vmul.f32 %v880, %v5892
      %v5989 = vmul.f32 %v881, %v5893
      %v5990 = vmul.f32 %v882, %v5894
      %v5991 = vmul.f32 %v883, %v5895
      %v5992 = vmul.f32 %v884, %v5896
      %v5993 = vadd.f32 %v5929, %v5961
      %v5994 = vadd.f32 %v5930, %v5962
      %v5995 = vadd.f32 %v5931, %v5963
      %v5996 = vadd.f32 %v5932, %v5964
      %v5997 = vadd.f32 %v5933, %v5965
      %v5998 = vadd.f32 %v5934, %v5966
      %v5999 = vadd.f32 %v5935, %v5967
      %v6000 = vadd.f32 %v5936, %v5968
      %v6001 = vadd.f32 %v5937, %v5969
      %v6002 = vadd.f32 %v5938, %v5970
      %v6003 = vadd.f32 %v5939, %v5971
      %v6004 = vadd.f32 %v5940, %v5972
      %v6005 = vadd.f32 %v5941, %v5973
      %v6006 = vadd.f32 %v5942, %v5974
      %v6007 = vadd.f32 %v5943, %v5975
      %v6008 = vadd.f32 %v5944, %v5976
      %v6009 = vadd.f32 %v5945, %v5977
      %v6010 = vadd.f32 %v5946, %v5978
      %v6011 = vadd.f32 %v5947, %v5979
      %v6012 = vadd.f32 %v5948, %v5980
      %v6013 = vadd.f32 %v5949, %v5981
      %v6014 = vadd.f32 %v5950, %v5982
      %v6015 = vadd.f32 %v5951, %v5983
      %v6016 = vadd.f32 %v5952, %v5984
      %v6017 = vadd.f32 %v5953, %v5985
      %v6018 = vadd.f32 %v5954, %v5986
      %v6019 = vadd.f32 %v5955, %v5987
      %v6020 = vadd.f32 %v5956, %v5988
      %v6021 = vadd.f32 %v5957, %v5989
      %v6022 = vadd.f32 %v5958, %v5990
      %v6023 = vadd.f32 %v5959, %v5991
      %v6024 = vadd.f32 %v5960, %v5992
      %v6025 = vld [vmem:[%s3 + $0x1] sm:$0x1]
      %v6026 = vperm.slane %v6025, 0
      %v6027 = vadd.f32 %v5993, %v6026
      %v6028 = vadd.f32 %v5994, %v6026
      %v6029 = vadd.f32 %v5995, %v6026
      %v6030 = vadd.f32 %v5996, %v6026
      %v6031 = vadd.f32 %v5997, %v6026
      %v6032 = vadd.f32 %v5998, %v6026
      %v6033 = vadd.f32 %v5999, %v6026
      %v6034 = vadd.f32 %v6000, %v6026
      %v6035 = vadd.f32 %v6001, %v6026
      %v6036 = vadd.f32 %v6002, %v6026
      %v6037 = vadd.f32 %v6003, %v6026
      %v6038 = vadd.f32 %v6004, %v6026
      %v6039 = vadd.f32 %v6005, %v6026
      %v6040 = vadd.f32 %v6006, %v6026
      %v6041 = vadd.f32 %v6007, %v6026
      %v6042 = vadd.f32 %v6008, %v6026
      %v6043 = vadd.f32 %v6009, %v6026
      %v6044 = vadd.f32 %v6010, %v6026
      %v6045 = vadd.f32 %v6011, %v6026
      %v6046 = vadd.f32 %v6012, %v6026
      %v6047 = vadd.f32 %v6013, %v6026
      %v6048 = vadd.f32 %v6014, %v6026
      %v6049 = vadd.f32 %v6015, %v6026
      %v6050 = vadd.f32 %v6016, %v6026
      %v6051 = vadd.f32 %v6017, %v6026
      %v6052 = vadd.f32 %v6018, %v6026
      %v6053 = vadd.f32 %v6019, %v6026
      %v6054 = vadd.f32 %v6020, %v6026
      %v6055 = vadd.f32 %v6021, %v6026
      %v6056 = vadd.f32 %v6022, %v6026
      %v6057 = vadd.f32 %v6023, %v6026
      %v6058 = vadd.f32 %v6024, %v6026
      %v6059 = vld [vmem:[%s192] sm:$0xf]
      %v6060 = vld [vmem:[%s192 + $0x4] sm:$0xf]
      %v6061 = vld [vmem:[%s192 + $0x8] sm:$0xf]
      %v6062 = vld [vmem:[%s192 + $0xc] sm:$0xf]
      %v6063 = vld [vmem:[%s192 + $0x10] sm:$0xf]
      %v6064 = vld [vmem:[%s192 + $0x14] sm:$0xf]
      %v6065 = vld [vmem:[%s192 + $0x18] sm:$0xf]
      %v6066 = vld [vmem:[%s192 + $0x1c] sm:$0xf]
      %v6067 = vld [vmem:[%s192 + $0x20] sm:$0xf]
      %v6068 = vld [vmem:[%s192 + $0x24] sm:$0xf]
      %v6069 = vld [vmem:[%s192 + $0x28] sm:$0xf]
      %v6070 = vld [vmem:[%s192 + $0x2c] sm:$0xf]
      %v6071 = vld [vmem:[%s192 + $0x30] sm:$0xf]
      %v6072 = vld [vmem:[%s192 + $0x34] sm:$0xf]
      %v6073 = vld [vmem:[%s192 + $0x38] sm:$0xf]
      %v6074 = vld [vmem:[%s192 + $0x3c] sm:$0xf]
      %v6075 = vld [vmem:[%s192 + $0x40] sm:$0xf]
      %v6076 = vld [vmem:[%s192 + $0x44] sm:$0xf]
      %v6077 = vld [vmem:[%s192 + $0x48] sm:$0xf]
      %v6078 = vld [vmem:[%s192 + $0x4c] sm:$0xf]
      %v6079 = vld [vmem:[%s192 + $0x50] sm:$0xf]
      %v6080 = vld [vmem:[%s192 + $0x54] sm:$0xf]
      %v6081 = vld [vmem:[%s192 + $0x58] sm:$0xf]
      %v6082 = vld [vmem:[%s192 + $0x5c] sm:$0xf]
      %v6083 = vld [vmem:[%s192 + $0x60] sm:$0xf]
      %v6084 = vld [vmem:[%s192 + $0x64] sm:$0xf]
      %v6085 = vld [vmem:[%s192 + $0x68] sm:$0xf]
      %v6086 = vld [vmem:[%s192 + $0x6c] sm:$0xf]
      %v6087 = vld [vmem:[%s192 + $0x70] sm:$0xf]
      %v6088 = vld [vmem:[%s192 + $0x74] sm:$0xf]
      %v6089 = vld [vmem:[%s192 + $0x78] sm:$0xf]
      %v6090 = vld [vmem:[%s192 + $0x7c] sm:$0xf]
      %v6091 = vunpack.c.l.bf16 %v6059
      %v6092 = vunpack.c.l.bf16 %v6060
      %v6093 = vunpack.c.l.bf16 %v6061
      %v6094 = vunpack.c.l.bf16 %v6062
      %v6095 = vunpack.c.l.bf16 %v6063
      %v6096 = vunpack.c.l.bf16 %v6064
      %v6097 = vunpack.c.l.bf16 %v6065
      %v6098 = vunpack.c.l.bf16 %v6066
      %v6099 = vunpack.c.l.bf16 %v6067
      %v6100 = vunpack.c.l.bf16 %v6068
      %v6101 = vunpack.c.l.bf16 %v6069
      %v6102 = vunpack.c.l.bf16 %v6070
      %v6103 = vunpack.c.l.bf16 %v6071
      %v6104 = vunpack.c.l.bf16 %v6072
      %v6105 = vunpack.c.l.bf16 %v6073
      %v6106 = vunpack.c.l.bf16 %v6074
      %v6107 = vunpack.c.l.bf16 %v6075
      %v6108 = vunpack.c.l.bf16 %v6076
      %v6109 = vunpack.c.l.bf16 %v6077
      %v6110 = vunpack.c.l.bf16 %v6078
      %v6111 = vunpack.c.l.bf16 %v6079
      %v6112 = vunpack.c.l.bf16 %v6080
      %v6113 = vunpack.c.l.bf16 %v6081
      %v6114 = vunpack.c.l.bf16 %v6082
      %v6115 = vunpack.c.l.bf16 %v6083
      %v6116 = vunpack.c.l.bf16 %v6084
      %v6117 = vunpack.c.l.bf16 %v6085
      %v6118 = vunpack.c.l.bf16 %v6086
      %v6119 = vunpack.c.l.bf16 %v6087
      %v6120 = vunpack.c.l.bf16 %v6088
      %v6121 = vunpack.c.l.bf16 %v6089
      %v6122 = vunpack.c.l.bf16 %v6090
      %v6123 = vadd.f32 %v6027, %v6091
      %v6124 = vadd.f32 %v6028, %v6092
      %v6125 = vadd.f32 %v6029, %v6093
      %v6126 = vadd.f32 %v6030, %v6094
      %v6127 = vadd.f32 %v6031, %v6095
      %v6128 = vadd.f32 %v6032, %v6096
      %v6129 = vadd.f32 %v6033, %v6097
      %v6130 = vadd.f32 %v6034, %v6098
      %v6131 = vadd.f32 %v6035, %v6099
      %v6132 = vadd.f32 %v6036, %v6100
      %v6133 = vadd.f32 %v6037, %v6101
      %v6134 = vadd.f32 %v6038, %v6102
      %v6135 = vadd.f32 %v6039, %v6103
      %v6136 = vadd.f32 %v6040, %v6104
      %v6137 = vadd.f32 %v6041, %v6105
      %v6138 = vadd.f32 %v6042, %v6106
      %v6139 = vadd.f32 %v6043, %v6107
      %v6140 = vadd.f32 %v6044, %v6108
      %v6141 = vadd.f32 %v6045, %v6109
      %v6142 = vadd.f32 %v6046, %v6110
      %v6143 = vadd.f32 %v6047, %v6111
      %v6144 = vadd.f32 %v6048, %v6112
      %v6145 = vadd.f32 %v6049, %v6113
      %v6146 = vadd.f32 %v6050, %v6114
      %v6147 = vadd.f32 %v6051, %v6115
      %v6148 = vadd.f32 %v6052, %v6116
      %v6149 = vadd.f32 %v6053, %v6117
      %v6150 = vadd.f32 %v6054, %v6118
      %v6151 = vadd.f32 %v6055, %v6119
      %v6152 = vadd.f32 %v6056, %v6120
      %v6153 = vadd.f32 %v6057, %v6121
      %v6154 = vadd.f32 %v6058, %v6122
      %v6155 = vmax.f32 %v6123, 0.0
      %v6156 = vmax.f32 %v6124, 0.0
      %v6157 = vmax.f32 %v6125, 0.0
      %v6158 = vmax.f32 %v6126, 0.0
      %v6159 = vmax.f32 %v6127, 0.0
      %v6160 = vmax.f32 %v6128, 0.0
      %v6161 = vmax.f32 %v6129, 0.0
      %v6162 = vmax.f32 %v6130, 0.0
      %v6163 = vmax.f32 %v6131, 0.0
      %v6164 = vmax.f32 %v6132, 0.0
      %v6165 = vmax.f32 %v6133, 0.0
      %v6166 = vmax.f32 %v6134, 0.0
      %v6167 = vmax.f32 %v6135, 0.0
      %v6168 = vmax.f32 %v6136, 0.0
      %v6169 = vmax.f32 %v6137, 0.0
      %v6170 = vmax.f32 %v6138, 0.0
      %v6171 = vmax.f32 %v6139, 0.0
      %v6172 = vmax.f32 %v6140, 0.0
      %v6173 = vmax.f32 %v6141, 0.0
      %v6174 = vmax.f32 %v6142, 0.0
      %v6175 = vmax.f32 %v6143, 0.0
      %v6176 = vmax.f32 %v6144, 0.0
      %v6177 = vmax.f32 %v6145, 0.0
      %v6178 = vmax.f32 %v6146, 0.0
      %v6179 = vmax.f32 %v6147, 0.0
      %v6180 = vmax.f32 %v6148, 0.0
      %v6181 = vmax.f32 %v6149, 0.0
      %v6182 = vmax.f32 %v6150, 0.0
      %v6183 = vmax.f32 %v6151, 0.0
      %v6184 = vmax.f32 %v6152, 0.0
      %v6185 = vmax.f32 %v6153, 0.0
      %v6186 = vmax.f32 %v6154, 0.0
      %6187 = vst.msk [vmem:[%s197] sm:$0xff] %vm1160, %v6155
      %6188 = vst.msk [vmem:[%s197 + $0x8] sm:$0xff] %vm1160, %v6156
      %6189 = vst.msk [vmem:[%s197 + $0x10] sm:$0xff] %vm1160, %v6157
      %6190 = vst.msk [vmem:[%s197 + $0x18] sm:$0xff] %vm1160, %v6158
      %6191 = vst.msk [vmem:[%s197 + $0x20] sm:$0xff] %vm1160, %v6159
      %6192 = vst.msk [vmem:[%s197 + $0x28] sm:$0xff] %vm1160, %v6160
      %6193 = vst.msk [vmem:[%s197 + $0x30] sm:$0xff] %vm1160, %v6161
      %6194 = vst.msk [vmem:[%s197 + $0x38] sm:$0xff] %vm1160, %v6162
      %6195 = vst.msk [vmem:[%s197 + $0x40] sm:$0xff] %vm1160, %v6163
      %6196 = vst.msk [vmem:[%s197 + $0x48] sm:$0xff] %vm1160, %v6164
      %6197 = vst.msk [vmem:[%s197 + $0x50] sm:$0xff] %vm1160, %v6165
      %6198 = vst.msk [vmem:[%s197 + $0x58] sm:$0xff] %vm1160, %v6166
      %6199 = vst.msk [vmem:[%s197 + $0x60] sm:$0xff] %vm1160, %v6167
      %6200 = vst.msk [vmem:[%s197 + $0x68] sm:$0xff] %vm1160, %v6168
      %6201 = vst.msk [vmem:[%s197 + $0x70] sm:$0xff] %vm1160, %v6169
      %6202 = vst.msk [vmem:[%s197 + $0x78] sm:$0xff] %vm1160, %v6170
      %6203 = vst.msk [vmem:[%s197 + $0x80] sm:$0xff] %vm1160, %v6171
      %6204 = vst.msk [vmem:[%s197 + $0x88] sm:$0xff] %vm1160, %v6172
      %6205 = vst.msk [vmem:[%s197 + $0x90] sm:$0xff] %vm1160, %v6173
      %6206 = vst.msk [vmem:[%s197 + $0x98] sm:$0xff] %vm1160, %v6174
      %6207 = vst.msk [vmem:[%s197 + $0xa0] sm:$0xff] %vm1160, %v6175
      %6208 = vst.msk [vmem:[%s197 + $0xa8] sm:$0xff] %vm1160, %v6176
      %6209 = vst.msk [vmem:[%s197 + $0xb0] sm:$0xff] %vm1160, %v6177
      %6210 = vst.msk [vmem:[%s197 + $0xb8] sm:$0xff] %vm1160, %v6178
      %6211 = vst.msk [vmem:[%s197 + $0xc0] sm:$0xff] %vm1160, %v6179
      %6212 = vst.msk [vmem:[%s197 + $0xc8] sm:$0xff] %vm1160, %v6180
      %6213 = vst.msk [vmem:[%s197 + $0xd0] sm:$0xff] %vm1160, %v6181
      %6214 = vst.msk [vmem:[%s197 + $0xd8] sm:$0xff] %vm1160, %v6182
      %6215 = vst.msk [vmem:[%s197 + $0xe0] sm:$0xff] %vm1160, %v6183
      %6216 = vst.msk [vmem:[%s197 + $0xe8] sm:$0xff] %vm1160, %v6184
      %6217 = vst.msk [vmem:[%s197 + $0xf0] sm:$0xff] %vm1160, %v6185
      %6218 = vst.msk [vmem:[%s197 + $0xf8] sm:$0xff] %vm1160, %v6186
      %p6219 = scmp.lt.s32.totalorder %s15, 1
      %s6220 = scalar_select %p6219, %s15, 1
      %s6221 = smul.addr %s6220, 32
      %s6222 = smul.addr %s6221, 8
      %s6223 = scalar_lea.vmem %s4, %s6222
      // Predicated region
      $region37: #{basic_block_forward.1} parent=35 // pred_check
        %p6224 = pneg %p122
      $region38: #{basic_block_forward.1} parent=35 // pred_check_branch
        %6226 = sbr.rel (%p6224) target = $region40
      $region39: #{basic_block_forward.1} parent=35 // pred_region
        _
      $region40: #{basic_block_forward.1} parent=35 // pred_fallthru
        _
    $region36: #{basic_block_forward.1} parent=5 // pred_fallthru
      _
    %p6227 = scmp.le.s32.totalorder 2, %s10
    // Predicated region
    $region41: #{basic_block_forward.1} parent=5 // pred_check
      %p6228 = pneg %p6227
    $region42: #{basic_block_forward.1} parent=5 // pred_check_branch
      %6230 = sbr.rel (%p6228) target = $region44
    $region43: #{basic_block_forward.1} parent=5 // pred_region
      %s6231 = ssub.s32 %s10, 2
      // Predicated region
      $region45: #{basic_block_forward.1} parent=43 // pred_check
        %p6232 = pneg %p128
      $region46: #{basic_block_forward.1} parent=43 // pred_check_branch
        %6234 = sbr.rel (%p6232) target = $region48
      $region47: #{basic_block_forward.1} parent=43 // pred_region
        %p6235 = scmp.lt.s32.totalorder %s16, 1
        %s6236 = scalar_select %p6235, %s16, 1
        %s6237 = smul.addr %s6236, 32
        %s6238 = smul.addr %s6237, 8
        %s6239 = scalar_lea.vmem %s4, %s6238
      $region48: #{basic_block_forward.1} parent=43 // pred_fallthru
        _
    $region44: #{basic_block_forward.1} parent=5 // pred_fallthru
      _
  $region6: #{basic_block_forward.1} parent=0 // loop_footer
    %s14 = sadd.s32 1, %s10
  $region7: #{basic_block_forward.1} parent=0 // loop_footer_branch
    %9 = sbr.rel target = $region3
  $region8: #{basic_block_forward.1} parent=0 // loop_exit
    _

</llo_original>
